<compile_context>
chip_gen: v7x
topology: tpu7x:2x2x1
jax: 0.10.0
libtpu: 0.0.40
codegen_flags: <defaults>
</compile_context>

<pallas_src>
import jax
import jax.numpy as jnp
from jax import lax
from jax.experimental import pallas as pl
from jax.experimental.pallas import tpu as pltpu

EPS = 1e-5
_HP = jax.lax.Precision.HIGHEST   # reference only


def _gelu(x):
    # exact GELU (erf form) == torch.nn.GELU(approximate='none')
    return 0.5 * x * (1.0 + lax.erf(x * 0.7071067811865475))


# --------------------------------- fused kernel ---------------------------------
def _make_kernel(N, H, W, C, C4, Cout, k):
    kc = k // 2
    rows = H                                   # sublane axis = h
    inv_n = 1.0 / float(N * H * W)             # BatchNorm count per channel

    def kernel(x_ref, hmask_ref, dwtap_ref, vecL_ref, vecLh_ref, vecLo_ref,
               w1_ref, w2_ref, up_ref, o_ref):
        f32, bf16 = jnp.float32, jnp.bfloat16
        L = x_ref.shape[1]                     # N*W*C
        Lh = w1_ref.shape[1]                   # N*W*4C
        Lo = o_ref.shape[1]                    # N*W*Cout

        # ---- channel<->lane one-hot maps, built ONCE (BN1 / BN3 share oh_c) ----
        def onehot(cc, ll):
            lane = lax.broadcasted_iota(jnp.int32, (cc, ll), 1)
            chan = lax.broadcasted_iota(jnp.int32, (cc, ll), 0)
            return (lane % cc == chan).astype(f32)

        oh_c, oh_h, oh_o = onehot(C, L), onehot(C4, Lh), onehot(Cout, Lo)

        def bn(y, oh, gamma_l, beta_l):
            # nn.BatchNorm2d training mode: batch statistics, biased variance.
            s1 = jnp.sum(y, axis=0, keepdims=True)                    # (1, Ll)
            s2 = jnp.sum(y * y, axis=0, keepdims=True)                # single sweep
            sum_c = jnp.sum(oh * s1, axis=1, keepdims=True)           # (Cc, 1)
            sq_c = jnp.sum(oh * s2, axis=1, keepdims=True)
            mean_l = jnp.sum(oh * sum_c, axis=0, keepdims=True) * inv_n   # (1, Ll)
            ex2_l = jnp.sum(oh * sq_c, axis=0, keepdims=True) * inv_n
            var_l = jnp.maximum(ex2_l - mean_l * mean_l, 0.0)
            scale = gamma_l * lax.rsqrt(var_l + EPS)
            return y * scale + (beta_l - mean_l * scale)

        def hshift(v, d):
            # v[r] <- v[r + d] with zeros outside the image (f32, XLU sublane roll)
            if d == 0:
                return v
            return pltpu.roll(v, (-d) % rows, axis=0) * hmask_ref[kc + d]

        x = x_ref[...]                                                # (H, L) f32
        vl = vecL_ref[...]                                            # (6, L)

        # ---- Residual( depthwise kxk -> GELU -> BN(C) ) --------------------------
        # centre tap (identity) seeds the accumulator together with the bias
        acc = x * dwtap_ref[kc * k + kc] + vl[0:1]
        for dy in range(k):
            xh = hshift(x, dy - kc)
            for dx in range(k):
                if dy == kc and dx == kc:
                    continue
                d = dx - kc
                xs = xh if d == 0 else pltpu.roll(xh, (-d * C) % L, axis=1)
                acc = acc + xs * dwtap_ref[dy * k + dx]               # width zeros folded in tap
        y = bn(_gelu(acc), oh_c, vl[1:2], vl[2:3]) + x                # residual reuses x

        # ---- 1x1 conv C -> 4C (block-diagonal kron matmul), GELU, BN(4C) ---------
        vh = vecLh_ref[...]
        hdn = jnp.dot(y.astype(bf16), w1_ref[...], preferred_element_type=f32) + vh[0:1]
        hdn = bn(_gelu(hdn), oh_h, vh[1:2], vh[2:3])

        # ---- 1x1 conv 4C -> C, GELU, BN(C) ---------------------------------------
        z = jnp.dot(hdn.astype(bf16), w2_ref[...], preferred_element_type=f32) + vl[3:4]
        z = bn(_gelu(z), oh_c, vl[4:5], vl[5:6])

        # ---- up: 3x3 conv C -> Cout, BN(Cout), ReLU  (bias cancels in BN) --------
        z_bf = z.astype(bf16)
        u = jnp.dot(z_bf, up_ref[kc], preferred_element_type=f32)     # centre height tap
        for dy in range(k):
            if dy == kc:
                continue
            zs = hshift(z, dy - kc).astype(bf16)
            u = u + jnp.dot(zs, up_ref[dy], preferred_element_type=f32)
        vo = vecLo_ref[...]
        u = bn(u, oh_o, vo[0:1], vo[1:2])
        o_ref[...] = jnp.maximum(u, 0.0)                              # (H, N*W*Cout) lane-dense

    return kernel


# ----------------------------------- wrapper ------------------------------------
def cmunext_block_forward(x_nchw, p):
    """CMUNeXtBlock(ch_in, ch_out, depth=1, k=3) forward.  x_nchw: (N, C, H, W)."""
    x = jnp.transpose(x_nchw, (0, 2, 3, 1)).astype(jnp.float32)      # NCHW -> NHWC
    N, H, W, C = x.shape
    k = p["dw_w"].shape[0]
    kc = k // 2
    C4 = p["pw1_w"].shape[1]
    Cout = p["up_w"].shape[-1]
    G = N * W                                                        # lane groups (n, w)
    L, Lh, Lo = G * C, G * C4, G * Cout

    # lane-dense slab: rows = h, lanes = n*W*C + w*C + c  (L = 128 at this shape)
    x2 = jnp.transpose(x, (1, 0, 2, 3)).reshape(H, L)

    # height-boundary masks (k, H, 1): zero rows whose source h is outside the image
    h_idx = jnp.arange(H)
    hmask = jnp.stack([((h_idx + dy - kc >= 0) & (h_idx + dy - kc < H)).astype(jnp.float32)
                       for dy in range(k)]).reshape(k, H, 1)

    # depthwise taps: lane-tiled per-channel weights with width-boundary zeros folded in
    w_idx = jnp.arange(W)
    taps = []
    for dy in range(k):
        for dx in range(k):
            vw = ((w_idx + dx - kc >= 0) & (w_idx + dx - kc < W)).astype(jnp.float32)
            vw_l = jnp.tile(jnp.repeat(vw, C), N)                    # (L,) validity per lane
            taps.append(vw_l * jnp.tile(p["dw_w"][dy, dx].astype(jnp.float32), G))
    dwtap = jnp.stack(taps).reshape(k * k, 1, L)

    # 3x3 up-conv: banded width matrices (zeros at borders), block-diagonal over n
    off = w_idx[:, None] - w_idx[None, :]                            # w_in - w_out
    validb = (jnp.abs(off) <= kc).astype(jnp.float32)
    dx_idx = jnp.clip(off + kc, 0, k - 1)
    eye_n = jnp.eye(N, dtype=jnp.float32)
    up_list = []
    for dy in range(k):
        tap_u = p["up_w"][dy][dx_idx] * validb[..., None, None]      # (Win, Wout, C, Cout)
        m = jnp.transpose(tap_u, (0, 2, 1, 3)).reshape(W * C, W * Cout)
        up_list.append(jnp.kron(eye_n, m))                           # (L, Lo)
    up_mats = jnp.stack(up_list).astype(jnp.bfloat16)                # (k, L, Lo)

    # 1x1 convs become block-diagonal matmuls on the lane-dense slab
    eye_g = jnp.eye(G, dtype=jnp.float32)
    w1_big = jnp.kron(eye_g, p["pw1_w"].astype(jnp.float32)).astype(jnp.bfloat16)   # (L, Lh)
    w2_big = jnp.kron(eye_g, p["pw2_w"].astype(jnp.float32)).astype(jnp.bfloat16)   # (Lh, L)

    # packed per-channel vectors (lane-tiled), one operand per lane width
    def lt(v):
        return jnp.tile(v.astype(jnp.float32), G)

    vecL = jnp.stack([lt(p["dw_b"]), lt(p["bn1_g"]), lt(p["bn1_b"]),
                      lt(p["pw2_b"]), lt(p["bn3_g"]), lt(p["bn3_b"])])   # (6, L)
    vecLh = jnp.stack([lt(p["pw1_b"]), lt(p["bn2_g"]), lt(p["bn2_b"])])  # (3, Lh)
    vecLo = jnp.stack([lt(p["bn4_g"]), lt(p["bn4_b"])])                  # (2, Lo)  up bias dropped

    vmem = pl.BlockSpec(memory_space=pltpu.MemorySpace.VMEM)
    flops = 2 * H * (k * k * L + 2 * L * Lh + k * L * Lo)
    cost = pl.CostEstimate(
        flops=int(flops),
        transcendentals=int(H * (2 * L + Lh)),
        bytes_accessed=int(4 * (H * L + H * Lo + k * k * L + k * H + 6 * L + 3 * Lh + 2 * Lo)
                           + 2 * (2 * L * Lh + k * L * Lo)))

    kernel = _make_kernel(N, H, W, C, C4, Cout, k)
    out2 = pl.pallas_call(
        kernel,
        out_shape=jax.ShapeDtypeStruct((H, Lo), jnp.float32),
        in_specs=[vmem] * 9,
        out_specs=vmem,
        cost_estimate=cost,
    )(x2, hmask, dwtap, vecL, vecLh, vecLo, w1_big, w2_big, up_mats)

    out = out2.reshape(H, N, W, Cout)
    return jnp.transpose(out, (1, 3, 0, 2))                          # -> NCHW


# ----------------------------- pure-JAX reference --------------------------------
def _bn_train_ref(x, gamma, beta):
    axes = tuple(range(x.ndim - 1))
    mean = jnp.mean(x, axis=axes, keepdims=True)
    var = jnp.mean((x - mean) ** 2, axis=axes, keepdims=True)
    return (x - mean) * lax.rsqrt(var + EPS) * gamma + beta


def reference_forward(x_nchw, p):
    x = jnp.transpose(x_nchw, (0, 2, 3, 1)).astype(jnp.float32)
    N, H, W, C = x.shape
    k = p["dw_w"].shape[0]
    dw = lax.conv_general_dilated(
        x, p["dw_w"].reshape(k, k, 1, C), (1, 1), "SAME",
        dimension_numbers=("NHWC", "HWIO", "NHWC"),
        feature_group_count=C, precision=_HP) + p["dw_b"]
    y = _bn_train_ref(_gelu(dw), p["bn1_g"], p["bn1_b"]) + x
    h = jnp.einsum("nhwc,cd->nhwd", y, p["pw1_w"], precision=_HP) + p["pw1_b"]
    h = _bn_train_ref(_gelu(h), p["bn2_g"], p["bn2_b"])
    z = jnp.einsum("nhwc,cd->nhwd", h, p["pw2_w"], precision=_HP) + p["pw2_b"]
    z = _bn_train_ref(_gelu(z), p["bn3_g"], p["bn3_b"])
    u = lax.conv_general_dilated(
        z, p["up_w"], (1, 1), "SAME",
        dimension_numbers=("NHWC", "HWIO", "NHWC"), precision=_HP) + p["up_b"]
    u = jnp.maximum(_bn_train_ref(u, p["bn4_g"], p["bn4_b"]), 0.0)
    return jnp.transpose(u, (0, 3, 1, 2))


# ------------------------------------ main ----------------------------------------
if __name__ == "__main__":
    N, C, H, W = 2, 4, 16, 16          # ch_in = 4
    Cout, k = 8, 3                     # ch_out = 8, kernel size 3
    Ch = 4 * C
    f32 = jnp.float32

    key = jax.random.PRNGKey(0)
    ks = jax.random.split(key, 20)

    def rn(i, shape, scale=0.2):
        return scale * jax.random.normal(ks[i], shape, dtype=f32)

    params = {
        "dw_w": rn(0, (k, k, C)),        "dw_b": rn(1, (C,)),
        "bn1_g": 1.0 + rn(2, (C,)),      "bn1_b": rn(3, (C,)),
        "pw1_w": rn(4, (C, Ch)),         "pw1_b": rn(5, (Ch,)),
        "bn2_g": 1.0 + rn(6, (Ch,)),     "bn2_b": rn(7, (Ch,)),
        "pw2_w": rn(8, (Ch, C)),         "pw2_b": rn(9, (C,)),
        "bn3_g": 1.0 + rn(10, (C,)),     "bn3_b": rn(11, (C,)),
        "up_w": rn(12, (3, 3, C, Cout)), "up_b": rn(13, (Cout,)),
        "bn4_g": 1.0 + rn(14, (Cout,)),  "bn4_b": rn(15, (Cout,)),
    }
    x = jax.random.normal(ks[16], (N, C, H, W), dtype=f32)

    fwd = jax.jit(cmunext_block_forward)
    out = jax.block_until_ready(fwd(x, params))
    assert out.shape == (N, Cout, H, W), out.shape

    ref = reference_forward(x, params)
    max_err = float(jnp.max(jnp.abs(out - ref)))
    # bf16 MXU operands (f32 accumulate) vs an f32-HIGHEST reference.
    if not bool(jnp.allclose(out, ref, atol=5e-2, rtol=5e-2)):
        raise AssertionError(f"Pallas output mismatch vs reference, max abs err={max_err}")

    print("KERNEL_OK")
</pallas_src>

<mosaic_0001>
module attributes {stable_mosaic.version = 11 : i64} {
  func.func @kernel(%arg0: memref<16x128xf32, #tpu.memory_space<vmem>>, %arg1: memref<3x16x1xf32, #tpu.memory_space<vmem>>, %arg2: memref<9x1x128xf32, #tpu.memory_space<vmem>>, %arg3: memref<6x128xf32, #tpu.memory_space<vmem>>, %arg4: memref<3x512xf32, #tpu.memory_space<vmem>>, %arg5: memref<2x256xf32, #tpu.memory_space<vmem>>, %arg6: memref<128x512xbf16, #tpu.memory_space<vmem>>, %arg7: memref<512x128xbf16, #tpu.memory_space<vmem>>, %arg8: memref<3x128x256xbf16, #tpu.memory_space<vmem>>, %arg9: memref<16x256xf32, #tpu.memory_space<vmem>>) attributes {dimension_semantics = [], scalar_prefetch = 0 : i64, scratch_operands = 0 : i64, tpu.core_type = #tpu.core_type<tc>} {
    %0 = tpu.iota {dimensions = array<i32: 1>} : vector<4x128xi32>
    %1 = tpu.iota {dimensions = array<i32: 0>} : vector<4x128xi32>
    %c4_i32 = arith.constant 4 : i32
    %c0_i32 = arith.constant 0 : i32
    %2 = arith.cmpi eq, %c4_i32, %c0_i32 : i32
    %c1_i32 = arith.constant 1 : i32
    %3 = arith.select %2, %c1_i32, %c4_i32 : i32
    %4 = vector.broadcast %3 : i32 to vector<4x128xi32>
    %5 = arith.remsi %0, %4 : vector<4x128xi32>
    %c0_i32_0 = arith.constant 0 : i32
    %6 = vector.broadcast %c0_i32_0 : i32 to vector<4x128xi32>
    %7 = arith.cmpi ne, %5, %6 : vector<4x128xi32>
    %c0_i32_1 = arith.constant 0 : i32
    %8 = vector.broadcast %c0_i32_1 : i32 to vector<4x128xi32>
    %9 = arith.cmpi slt, %5, %8 : vector<4x128xi32>
    %c0_i32_2 = arith.constant 0 : i32
    %10 = arith.cmpi slt, %3, %c0_i32_2 : i32
    %11 = vector.broadcast %10 : i1 to vector<4x128xi1>
    %12 = vector.broadcast %11 : vector<4x128xi1> to vector<4x128xi1>
    %13 = arith.xori %9, %12 : vector<4x128xi1>
    %14 = arith.andi %13, %7 : vector<4x128xi1>
    %15 = vector.broadcast %3 : i32 to vector<4x128xi32>
    %16 = arith.addi %5, %15 : vector<4x128xi32>
    %17 = arith.select %14, %16, %5 : vector<4x128xi1>, vector<4x128xi32>
    %18 = arith.cmpi eq, %17, %1 : vector<4x128xi32>
    %19 = arith.extui %18 : vector<4x128xi1> to vector<4x128xi32>
    %20 = arith.sitofp %19 : vector<4x128xi32> to vector<4x128xf32>
    %21 = tpu.iota {dimensions = array<i32: 1>} : vector<16x512xi32>
    %22 = tpu.iota {dimensions = array<i32: 0>} : vector<16x512xi32>
    %c16_i32 = arith.constant 16 : i32
    %c0_i32_3 = arith.constant 0 : i32
    %23 = arith.cmpi eq, %c16_i32, %c0_i32_3 : i32
    %c1_i32_4 = arith.constant 1 : i32
    %24 = arith.select %23, %c1_i32_4, %c16_i32 : i32
    %25 = vector.broadcast %24 : i32 to vector<16x512xi32>
    %26 = arith.remsi %21, %25 : vector<16x512xi32>
    %c0_i32_5 = arith.constant 0 : i32
    %27 = vector.broadcast %c0_i32_5 : i32 to vector<16x512xi32>
    %28 = arith.cmpi ne, %26, %27 : vector<16x512xi32>
    %c0_i32_6 = arith.constant 0 : i32
    %29 = vector.broadcast %c0_i32_6 : i32 to vector<16x512xi32>
    %30 = arith.cmpi slt, %26, %29 : vector<16x512xi32>
    %c0_i32_7 = arith.constant 0 : i32
    %31 = arith.cmpi slt, %24, %c0_i32_7 : i32
    %32 = vector.broadcast %31 : i1 to vector<16x512xi1>
    %33 = vector.broadcast %32 : vector<16x512xi1> to vector<16x512xi1>
    %34 = arith.xori %30, %33 : vector<16x512xi1>
    %35 = arith.andi %34, %28 : vector<16x512xi1>
    %36 = vector.broadcast %24 : i32 to vector<16x512xi32>
    %37 = arith.addi %26, %36 : vector<16x512xi32>
    %38 = arith.select %35, %37, %26 : vector<16x512xi1>, vector<16x512xi32>
    %39 = arith.cmpi eq, %38, %22 : vector<16x512xi32>
    %40 = arith.extui %39 : vector<16x512xi1> to vector<16x512xi32>
    %41 = arith.sitofp %40 : vector<16x512xi32> to vector<16x512xf32>
    %42 = tpu.iota {dimensions = array<i32: 1>} : vector<8x256xi32>
    %43 = tpu.iota {dimensions = array<i32: 0>} : vector<8x256xi32>
    %c8_i32 = arith.constant 8 : i32
    %c0_i32_8 = arith.constant 0 : i32
    %44 = arith.cmpi eq, %c8_i32, %c0_i32_8 : i32
    %c1_i32_9 = arith.constant 1 : i32
    %45 = arith.select %44, %c1_i32_9, %c8_i32 : i32
    %46 = vector.broadcast %45 : i32 to vector<8x256xi32>
    %47 = arith.remsi %42, %46 : vector<8x256xi32>
    %c0_i32_10 = arith.constant 0 : i32
    %48 = vector.broadcast %c0_i32_10 : i32 to vector<8x256xi32>
    %49 = arith.cmpi ne, %47, %48 : vector<8x256xi32>
    %c0_i32_11 = arith.constant 0 : i32
    %50 = vector.broadcast %c0_i32_11 : i32 to vector<8x256xi32>
    %51 = arith.cmpi slt, %47, %50 : vector<8x256xi32>
    %c0_i32_12 = arith.constant 0 : i32
    %52 = arith.cmpi slt, %45, %c0_i32_12 : i32
    %53 = vector.broadcast %52 : i1 to vector<8x256xi1>
    %54 = vector.broadcast %53 : vector<8x256xi1> to vector<8x256xi1>
    %55 = arith.xori %51, %54 : vector<8x256xi1>
    %56 = arith.andi %55, %49 : vector<8x256xi1>
    %57 = vector.broadcast %45 : i32 to vector<8x256xi32>
    %58 = arith.addi %47, %57 : vector<8x256xi32>
    %59 = arith.select %56, %58, %47 : vector<8x256xi1>, vector<8x256xi32>
    %60 = arith.cmpi eq, %59, %43 : vector<8x256xi32>
    %61 = arith.extui %60 : vector<8x256xi1> to vector<8x256xi32>
    %62 = arith.sitofp %61 : vector<8x256xi32> to vector<8x256xf32>
    %c0 = arith.constant 0 : index
    %c0_13 = arith.constant 0 : index
    %63 = vector.load %arg0[%c0, %c0_13] : memref<16x128xf32, #tpu.memory_space<vmem>>, vector<16x128xf32>
    %c0_14 = arith.constant 0 : index
    %c0_15 = arith.constant 0 : index
    %64 = vector.load %arg3[%c0_14, %c0_15] : memref<6x128xf32, #tpu.memory_space<vmem>>, vector<6x128xf32>
    %c4 = arith.constant 4 : index
    %c0_16 = arith.constant 0 : index
    %c0_17 = arith.constant 0 : index
    %65 = vector.load %arg2[%c4, %c0_16, %c0_17] : memref<9x1x128xf32, #tpu.memory_space<vmem>>, vector<1x1x128xf32>
    %66 = vector.shape_cast %65 : vector<1x1x128xf32> to vector<1x128xf32>
    %67 = vector.broadcast %66 : vector<1x128xf32> to vector<16x128xf32>
    %68 = arith.mulf %63, %67 : vector<16x128xf32>
    %69 = vector.extract_strided_slice %64 {offsets = [0, 0], sizes = [1, 128], strides = [1, 1]} : vector<6x128xf32> to vector<1x128xf32>
    %70 = vector.broadcast %69 : vector<1x128xf32> to vector<16x128xf32>
    %71 = arith.addf %68, %70 : vector<16x128xf32>
    %c1_i32_18 = arith.constant 1 : i32
    %72 = tpu.dynamic_rotate %63 by %c1_i32_18 dim 0 : vector<16x128xf32>, i32 -> vector<16x128xf32>
    %c0_19 = arith.constant 0 : index
    %c0_20 = arith.constant 0 : index
    %c0_21 = arith.constant 0 : index
    %73 = vector.load %arg1[%c0_19, %c0_20, %c0_21] : memref<3x16x1xf32, #tpu.memory_space<vmem>>, vector<1x16x1xf32>
    %74 = vector.shape_cast %73 : vector<1x16x1xf32> to vector<16x1xf32>
    %75 = vector.broadcast %74 : vector<16x1xf32> to vector<16x128xf32>
    %76 = arith.mulf %72, %75 : vector<16x128xf32>
    %c4_i32_22 = arith.constant 4 : i32
    %77 = tpu.dynamic_rotate %76 by %c4_i32_22 dim 1 : vector<16x128xf32>, i32 -> vector<16x128xf32>
    %c0_23 = arith.constant 0 : index
    %c0_24 = arith.constant 0 : index
    %c0_25 = arith.constant 0 : index
    %78 = vector.load %arg2[%c0_23, %c0_24, %c0_25] : memref<9x1x128xf32, #tpu.memory_space<vmem>>, vector<1x1x128xf32>
    %79 = vector.shape_cast %78 : vector<1x1x128xf32> to vector<1x128xf32>
    %80 = vector.broadcast %79 : vector<1x128xf32> to vector<16x128xf32>
    %81 = arith.mulf %77, %80 : vector<16x128xf32>
    %82 = arith.addf %71, %81 : vector<16x128xf32>
    %c1 = arith.constant 1 : index
    %c0_26 = arith.constant 0 : index
    %c0_27 = arith.constant 0 : index
    %83 = vector.load %arg2[%c1, %c0_26, %c0_27] : memref<9x1x128xf32, #tpu.memory_space<vmem>>, vector<1x1x128xf32>
    %84 = vector.shape_cast %83 : vector<1x1x128xf32> to vector<1x128xf32>
    %85 = vector.broadcast %84 : vector<1x128xf32> to vector<16x128xf32>
    %86 = arith.mulf %76, %85 : vector<16x128xf32>
    %87 = arith.addf %82, %86 : vector<16x128xf32>
    %c124_i32 = arith.constant 124 : i32
    %88 = tpu.dynamic_rotate %76 by %c124_i32 dim 1 : vector<16x128xf32>, i32 -> vector<16x128xf32>
    %c2 = arith.constant 2 : index
    %c0_28 = arith.constant 0 : index
    %c0_29 = arith.constant 0 : index
    %89 = vector.load %arg2[%c2, %c0_28, %c0_29] : memref<9x1x128xf32, #tpu.memory_space<vmem>>, vector<1x1x128xf32>
    %90 = vector.shape_cast %89 : vector<1x1x128xf32> to vector<1x128xf32>
    %91 = vector.broadcast %90 : vector<1x128xf32> to vector<16x128xf32>
    %92 = arith.mulf %88, %91 : vector<16x128xf32>
    %93 = arith.addf %87, %92 : vector<16x128xf32>
    %c4_i32_30 = arith.constant 4 : i32
    %94 = tpu.dynamic_rotate %63 by %c4_i32_30 dim 1 : vector<16x128xf32>, i32 -> vector<16x128xf32>
    %c3 = arith.constant 3 : index
    %c0_31 = arith.constant 0 : index
    %c0_32 = arith.constant 0 : index
    %95 = vector.load %arg2[%c3, %c0_31, %c0_32] : memref<9x1x128xf32, #tpu.memory_space<vmem>>, vector<1x1x128xf32>
    %96 = vector.shape_cast %95 : vector<1x1x128xf32> to vector<1x128xf32>
    %97 = vector.broadcast %96 : vector<1x128xf32> to vector<16x128xf32>
    %98 = arith.mulf %94, %97 : vector<16x128xf32>
    %99 = arith.addf %93, %98 : vector<16x128xf32>
    %c124_i32_33 = arith.constant 124 : i32
    %100 = tpu.dynamic_rotate %63 by %c124_i32_33 dim 1 : vector<16x128xf32>, i32 -> vector<16x128xf32>
    %c5 = arith.constant 5 : index
    %c0_34 = arith.constant 0 : index
    %c0_35 = arith.constant 0 : index
    %101 = vector.load %arg2[%c5, %c0_34, %c0_35] : memref<9x1x128xf32, #tpu.memory_space<vmem>>, vector<1x1x128xf32>
    %102 = vector.shape_cast %101 : vector<1x1x128xf32> to vector<1x128xf32>
    %103 = vector.broadcast %102 : vector<1x128xf32> to vector<16x128xf32>
    %104 = arith.mulf %100, %103 : vector<16x128xf32>
    %105 = arith.addf %99, %104 : vector<16x128xf32>
    %c15_i32 = arith.constant 15 : i32
    %106 = tpu.dynamic_rotate %63 by %c15_i32 dim 0 : vector<16x128xf32>, i32 -> vector<16x128xf32>
    %c2_36 = arith.constant 2 : index
    %c0_37 = arith.constant 0 : index
    %c0_38 = arith.constant 0 : index
    %107 = vector.load %arg1[%c2_36, %c0_37, %c0_38] : memref<3x16x1xf32, #tpu.memory_space<vmem>>, vector<1x16x1xf32>
    %108 = vector.shape_cast %107 : vector<1x16x1xf32> to vector<16x1xf32>
    %109 = vector.broadcast %108 : vector<16x1xf32> to vector<16x128xf32>
    %110 = arith.mulf %106, %109 : vector<16x128xf32>
    %c4_i32_39 = arith.constant 4 : i32
    %111 = tpu.dynamic_rotate %110 by %c4_i32_39 dim 1 : vector<16x128xf32>, i32 -> vector<16x128xf32>
    %c6 = arith.constant 6 : index
    %c0_40 = arith.constant 0 : index
    %c0_41 = arith.constant 0 : index
    %112 = vector.load %arg2[%c6, %c0_40, %c0_41] : memref<9x1x128xf32, #tpu.memory_space<vmem>>, vector<1x1x128xf32>
    %113 = vector.shape_cast %112 : vector<1x1x128xf32> to vector<1x128xf32>
    %114 = vector.broadcast %113 : vector<1x128xf32> to vector<16x128xf32>
    %115 = arith.mulf %111, %114 : vector<16x128xf32>
    %116 = arith.addf %105, %115 : vector<16x128xf32>
    %c7 = arith.constant 7 : index
    %c0_42 = arith.constant 0 : index
    %c0_43 = arith.constant 0 : index
    %117 = vector.load %arg2[%c7, %c0_42, %c0_43] : memref<9x1x128xf32, #tpu.memory_space<vmem>>, vector<1x1x128xf32>
    %118 = vector.shape_cast %117 : vector<1x1x128xf32> to vector<1x128xf32>
    %119 = vector.broadcast %118 : vector<1x128xf32> to vector<16x128xf32>
    %120 = arith.mulf %110, %119 : vector<16x128xf32>
    %121 = arith.addf %116, %120 : vector<16x128xf32>
    %c124_i32_44 = arith.constant 124 : i32
    %122 = tpu.dynamic_rotate %110 by %c124_i32_44 dim 1 : vector<16x128xf32>, i32 -> vector<16x128xf32>
    %c8 = arith.constant 8 : index
    %c0_45 = arith.constant 0 : index
    %c0_46 = arith.constant 0 : index
    %123 = vector.load %arg2[%c8, %c0_45, %c0_46] : memref<9x1x128xf32, #tpu.memory_space<vmem>>, vector<1x1x128xf32>
    %124 = vector.shape_cast %123 : vector<1x1x128xf32> to vector<1x128xf32>
    %125 = vector.broadcast %124 : vector<1x128xf32> to vector<16x128xf32>
    %126 = arith.mulf %122, %125 : vector<16x128xf32>
    %127 = arith.addf %121, %126 : vector<16x128xf32>
    %cst = arith.constant 5.000000e-01 : f32
    %128 = vector.broadcast %cst : f32 to vector<16x128xf32>
    %129 = arith.mulf %128, %127 : vector<16x128xf32>
    %cst_47 = arith.constant 0.707106769 : f32
    %130 = vector.broadcast %cst_47 : f32 to vector<16x128xf32>
    %131 = arith.mulf %127, %130 : vector<16x128xf32>
    %132 = math.erf %131 : vector<16x128xf32>
    %cst_48 = arith.constant 1.000000e+00 : f32
    %133 = vector.broadcast %cst_48 : f32 to vector<16x128xf32>
    %134 = arith.addf %133, %132 : vector<16x128xf32>
    %135 = arith.mulf %129, %134 : vector<16x128xf32>
    %136 = vector.extract_strided_slice %64 {offsets = [1, 0], sizes = [1, 128], strides = [1, 1]} : vector<6x128xf32> to vector<1x128xf32>
    %137 = vector.extract_strided_slice %64 {offsets = [2, 0], sizes = [1, 128], strides = [1, 1]} : vector<6x128xf32> to vector<1x128xf32>
    %cst_49 = arith.constant dense<0.000000e+00> : vector<128xf32>
    %138 = vector.multi_reduction <add>, %135, %cst_49 [0] : vector<16x128xf32> to vector<128xf32>
    %139 = vector.shape_cast %138 : vector<128xf32> to vector<1x128xf32>
    %140 = arith.mulf %135, %135 : vector<16x128xf32>
    %cst_50 = arith.constant dense<0.000000e+00> : vector<128xf32>
    %141 = vector.multi_reduction <add>, %140, %cst_50 [0] : vector<16x128xf32> to vector<128xf32>
    %142 = vector.shape_cast %141 : vector<128xf32> to vector<1x128xf32>
    %143 = vector.broadcast %139 : vector<1x128xf32> to vector<4x128xf32>
    %144 = arith.mulf %20, %143 : vector<4x128xf32>
    %cst_51 = arith.constant dense<0.000000e+00> : vector<4xf32>
    %145 = vector.multi_reduction <add>, %144, %cst_51 [1] : vector<4x128xf32> to vector<4xf32>
    %146 = vector.shape_cast %145 : vector<4xf32> to vector<4x1xf32>
    %147 = vector.broadcast %142 : vector<1x128xf32> to vector<4x128xf32>
    %148 = arith.mulf %20, %147 : vector<4x128xf32>
    %cst_52 = arith.constant dense<0.000000e+00> : vector<4xf32>
    %149 = vector.multi_reduction <add>, %148, %cst_52 [1] : vector<4x128xf32> to vector<4xf32>
    %150 = vector.shape_cast %149 : vector<4xf32> to vector<4x1xf32>
    %151 = vector.broadcast %146 : vector<4x1xf32> to vector<4x128xf32>
    %152 = arith.mulf %20, %151 : vector<4x128xf32>
    %cst_53 = arith.constant dense<0.000000e+00> : vector<128xf32>
    %153 = vector.multi_reduction <add>, %152, %cst_53 [0] : vector<4x128xf32> to vector<128xf32>
    %154 = vector.shape_cast %153 : vector<128xf32> to vector<1x128xf32>
    %cst_54 = arith.constant 0.001953125 : f32
    %155 = vector.broadcast %cst_54 : f32 to vector<1x128xf32>
    %156 = arith.mulf %154, %155 : vector<1x128xf32>
    %157 = vector.broadcast %150 : vector<4x1xf32> to vector<4x128xf32>
    %158 = arith.mulf %20, %157 : vector<4x128xf32>
    %cst_55 = arith.constant dense<0.000000e+00> : vector<128xf32>
    %159 = vector.multi_reduction <add>, %158, %cst_55 [0] : vector<4x128xf32> to vector<128xf32>
    %160 = vector.shape_cast %159 : vector<128xf32> to vector<1x128xf32>
    %cst_56 = arith.constant 0.001953125 : f32
    %161 = vector.broadcast %cst_56 : f32 to vector<1x128xf32>
    %162 = arith.mulf %160, %161 : vector<1x128xf32>
    %163 = arith.mulf %156, %156 : vector<1x128xf32>
    %164 = arith.subf %162, %163 : vector<1x128xf32>
    %cst_57 = arith.constant 0.000000e+00 : f32
    %165 = vector.broadcast %cst_57 : f32 to vector<1x128xf32>
    %166 = arith.maximumf %164, %165 : vector<1x128xf32>
    %cst_58 = arith.constant 9.99999974E-6 : f32
    %167 = vector.broadcast %cst_58 : f32 to vector<1x128xf32>
    %168 = arith.addf %166, %167 : vector<1x128xf32>
    %169 = math.rsqrt %168 : vector<1x128xf32>
    %170 = arith.mulf %136, %169 : vector<1x128xf32>
    %171 = vector.broadcast %170 : vector<1x128xf32> to vector<16x128xf32>
    %172 = arith.mulf %135, %171 : vector<16x128xf32>
    %173 = arith.mulf %156, %170 : vector<1x128xf32>
    %174 = arith.subf %137, %173 : vector<1x128xf32>
    %175 = vector.broadcast %174 : vector<1x128xf32> to vector<16x128xf32>
    %176 = arith.addf %172, %175 : vector<16x128xf32>
    %177 = arith.addf %176, %63 : vector<16x128xf32>
    %c0_59 = arith.constant 0 : index
    %c0_60 = arith.constant 0 : index
    %178 = vector.load %arg4[%c0_59, %c0_60] : memref<3x512xf32, #tpu.memory_space<vmem>>, vector<3x512xf32>
    %179 = arith.truncf %177 : vector<16x128xf32> to vector<16x128xbf16>
    %c0_61 = arith.constant 0 : index
    %c0_62 = arith.constant 0 : index
    %180 = vector.load %arg6[%c0_61, %c0_62] : memref<128x512xbf16, #tpu.memory_space<vmem>>, vector<128x512xbf16>
    %cst_63 = arith.constant dense<0.000000e+00> : vector<16x512xf32>
    %181 = tpu.matmul %179, %180, %cst_63 {dimension_numbers = #tpu.dot_dimension_numbers<[1], [0], [0], [1], [0, 0, 1, 1], [], []>} : vector<16x128xbf16>, vector<128x512xbf16>, vector<16x512xf32> -> vector<16x512xf32>
    %182 = vector.extract_strided_slice %178 {offsets = [0, 0], sizes = [1, 512], strides = [1, 1]} : vector<3x512xf32> to vector<1x512xf32>
    %183 = vector.broadcast %182 : vector<1x512xf32> to vector<16x512xf32>
    %184 = arith.addf %181, %183 : vector<16x512xf32>
    %cst_64 = arith.constant 5.000000e-01 : f32
    %185 = vector.broadcast %cst_64 : f32 to vector<16x512xf32>
    %186 = arith.mulf %185, %184 : vector<16x512xf32>
    %cst_65 = arith.constant 0.707106769 : f32
    %187 = vector.broadcast %cst_65 : f32 to vector<16x512xf32>
    %188 = arith.mulf %184, %187 : vector<16x512xf32>
    %189 = math.erf %188 : vector<16x512xf32>
    %cst_66 = arith.constant 1.000000e+00 : f32
    %190 = vector.broadcast %cst_66 : f32 to vector<16x512xf32>
    %191 = arith.addf %190, %189 : vector<16x512xf32>
    %192 = arith.mulf %186, %191 : vector<16x512xf32>
    %193 = vector.extract_strided_slice %178 {offsets = [1, 0], sizes = [1, 512], strides = [1, 1]} : vector<3x512xf32> to vector<1x512xf32>
    %194 = vector.extract_strided_slice %178 {offsets = [2, 0], sizes = [1, 512], strides = [1, 1]} : vector<3x512xf32> to vector<1x512xf32>
    %cst_67 = arith.constant dense<0.000000e+00> : vector<512xf32>
    %195 = vector.multi_reduction <add>, %192, %cst_67 [0] : vector<16x512xf32> to vector<512xf32>
    %196 = vector.shape_cast %195 : vector<512xf32> to vector<1x512xf32>
    %197 = arith.mulf %192, %192 : vector<16x512xf32>
    %cst_68 = arith.constant dense<0.000000e+00> : vector<512xf32>
    %198 = vector.multi_reduction <add>, %197, %cst_68 [0] : vector<16x512xf32> to vector<512xf32>
    %199 = vector.shape_cast %198 : vector<512xf32> to vector<1x512xf32>
    %200 = vector.broadcast %196 : vector<1x512xf32> to vector<16x512xf32>
    %201 = arith.mulf %41, %200 : vector<16x512xf32>
    %cst_69 = arith.constant dense<0.000000e+00> : vector<16xf32>
    %202 = vector.multi_reduction <add>, %201, %cst_69 [1] : vector<16x512xf32> to vector<16xf32>
    %203 = vector.shape_cast %202 : vector<16xf32> to vector<16x1xf32>
    %204 = vector.broadcast %199 : vector<1x512xf32> to vector<16x512xf32>
    %205 = arith.mulf %41, %204 : vector<16x512xf32>
    %cst_70 = arith.constant dense<0.000000e+00> : vector<16xf32>
    %206 = vector.multi_reduction <add>, %205, %cst_70 [1] : vector<16x512xf32> to vector<16xf32>
    %207 = vector.shape_cast %206 : vector<16xf32> to vector<16x1xf32>
    %208 = vector.broadcast %203 : vector<16x1xf32> to vector<16x512xf32>
    %209 = arith.mulf %41, %208 : vector<16x512xf32>
    %cst_71 = arith.constant dense<0.000000e+00> : vector<512xf32>
    %210 = vector.multi_reduction <add>, %209, %cst_71 [0] : vector<16x512xf32> to vector<512xf32>
    %211 = vector.shape_cast %210 : vector<512xf32> to vector<1x512xf32>
    %cst_72 = arith.constant 0.001953125 : f32
    %212 = vector.broadcast %cst_72 : f32 to vector<1x512xf32>
    %213 = arith.mulf %211, %212 : vector<1x512xf32>
    %214 = vector.broadcast %207 : vector<16x1xf32> to vector<16x512xf32>
    %215 = arith.mulf %41, %214 : vector<16x512xf32>
    %cst_73 = arith.constant dense<0.000000e+00> : vector<512xf32>
    %216 = vector.multi_reduction <add>, %215, %cst_73 [0] : vector<16x512xf32> to vector<512xf32>
    %217 = vector.shape_cast %216 : vector<512xf32> to vector<1x512xf32>
    %cst_74 = arith.constant 0.001953125 : f32
    %218 = vector.broadcast %cst_74 : f32 to vector<1x512xf32>
    %219 = arith.mulf %217, %218 : vector<1x512xf32>
    %220 = arith.mulf %213, %213 : vector<1x512xf32>
    %221 = arith.subf %219, %220 : vector<1x512xf32>
    %cst_75 = arith.constant 0.000000e+00 : f32
    %222 = vector.broadcast %cst_75 : f32 to vector<1x512xf32>
    %223 = arith.maximumf %221, %222 : vector<1x512xf32>
    %cst_76 = arith.constant 9.99999974E-6 : f32
    %224 = vector.broadcast %cst_76 : f32 to vector<1x512xf32>
    %225 = arith.addf %223, %224 : vector<1x512xf32>
    %226 = math.rsqrt %225 : vector<1x512xf32>
    %227 = arith.mulf %193, %226 : vector<1x512xf32>
    %228 = vector.broadcast %227 : vector<1x512xf32> to vector<16x512xf32>
    %229 = arith.mulf %192, %228 : vector<16x512xf32>
    %230 = arith.mulf %213, %227 : vector<1x512xf32>
    %231 = arith.subf %194, %230 : vector<1x512xf32>
    %232 = vector.broadcast %231 : vector<1x512xf32> to vector<16x512xf32>
    %233 = arith.addf %229, %232 : vector<16x512xf32>
    %234 = arith.truncf %233 : vector<16x512xf32> to vector<16x512xbf16>
    %c0_77 = arith.constant 0 : index
    %c0_78 = arith.constant 0 : index
    %235 = vector.load %arg7[%c0_77, %c0_78] : memref<512x128xbf16, #tpu.memory_space<vmem>>, vector<512x128xbf16>
    %cst_79 = arith.constant dense<0.000000e+00> : vector<16x128xf32>
    %236 = tpu.matmul %234, %235, %cst_79 {dimension_numbers = #tpu.dot_dimension_numbers<[1], [0], [0], [1], [0, 0, 1, 1], [], []>} : vector<16x512xbf16>, vector<512x128xbf16>, vector<16x128xf32> -> vector<16x128xf32>
    %237 = vector.extract_strided_slice %64 {offsets = [3, 0], sizes = [1, 128], strides = [1, 1]} : vector<6x128xf32> to vector<1x128xf32>
    %238 = vector.broadcast %237 : vector<1x128xf32> to vector<16x128xf32>
    %239 = arith.addf %236, %238 : vector<16x128xf32>
    %cst_80 = arith.constant 5.000000e-01 : f32
    %240 = vector.broadcast %cst_80 : f32 to vector<16x128xf32>
    %241 = arith.mulf %240, %239 : vector<16x128xf32>
    %cst_81 = arith.constant 0.707106769 : f32
    %242 = vector.broadcast %cst_81 : f32 to vector<16x128xf32>
    %243 = arith.mulf %239, %242 : vector<16x128xf32>
    %244 = math.erf %243 : vector<16x128xf32>
    %cst_82 = arith.constant 1.000000e+00 : f32
    %245 = vector.broadcast %cst_82 : f32 to vector<16x128xf32>
    %246 = arith.addf %245, %244 : vector<16x128xf32>
    %247 = arith.mulf %241, %246 : vector<16x128xf32>
    %248 = vector.extract_strided_slice %64 {offsets = [4, 0], sizes = [1, 128], strides = [1, 1]} : vector<6x128xf32> to vector<1x128xf32>
    %249 = vector.extract_strided_slice %64 {offsets = [5, 0], sizes = [1, 128], strides = [1, 1]} : vector<6x128xf32> to vector<1x128xf32>
    %cst_83 = arith.constant dense<0.000000e+00> : vector<128xf32>
    %250 = vector.multi_reduction <add>, %247, %cst_83 [0] : vector<16x128xf32> to vector<128xf32>
    %251 = vector.shape_cast %250 : vector<128xf32> to vector<1x128xf32>
    %252 = arith.mulf %247, %247 : vector<16x128xf32>
    %cst_84 = arith.constant dense<0.000000e+00> : vector<128xf32>
    %253 = vector.multi_reduction <add>, %252, %cst_84 [0] : vector<16x128xf32> to vector<128xf32>
    %254 = vector.shape_cast %253 : vector<128xf32> to vector<1x128xf32>
    %255 = vector.broadcast %251 : vector<1x128xf32> to vector<4x128xf32>
    %256 = arith.mulf %20, %255 : vector<4x128xf32>
    %cst_85 = arith.constant dense<0.000000e+00> : vector<4xf32>
    %257 = vector.multi_reduction <add>, %256, %cst_85 [1] : vector<4x128xf32> to vector<4xf32>
    %258 = vector.shape_cast %257 : vector<4xf32> to vector<4x1xf32>
    %259 = vector.broadcast %254 : vector<1x128xf32> to vector<4x128xf32>
    %260 = arith.mulf %20, %259 : vector<4x128xf32>
    %cst_86 = arith.constant dense<0.000000e+00> : vector<4xf32>
    %261 = vector.multi_reduction <add>, %260, %cst_86 [1] : vector<4x128xf32> to vector<4xf32>
    %262 = vector.shape_cast %261 : vector<4xf32> to vector<4x1xf32>
    %263 = vector.broadcast %258 : vector<4x1xf32> to vector<4x128xf32>
    %264 = arith.mulf %20, %263 : vector<4x128xf32>
    %cst_87 = arith.constant dense<0.000000e+00> : vector<128xf32>
    %265 = vector.multi_reduction <add>, %264, %cst_87 [0] : vector<4x128xf32> to vector<128xf32>
    %266 = vector.shape_cast %265 : vector<128xf32> to vector<1x128xf32>
    %cst_88 = arith.constant 0.001953125 : f32
    %267 = vector.broadcast %cst_88 : f32 to vector<1x128xf32>
    %268 = arith.mulf %266, %267 : vector<1x128xf32>
    %269 = vector.broadcast %262 : vector<4x1xf32> to vector<4x128xf32>
    %270 = arith.mulf %20, %269 : vector<4x128xf32>
    %cst_89 = arith.constant dense<0.000000e+00> : vector<128xf32>
    %271 = vector.multi_reduction <add>, %270, %cst_89 [0] : vector<4x128xf32> to vector<128xf32>
    %272 = vector.shape_cast %271 : vector<128xf32> to vector<1x128xf32>
    %cst_90 = arith.constant 0.001953125 : f32
    %273 = vector.broadcast %cst_90 : f32 to vector<1x128xf32>
    %274 = arith.mulf %272, %273 : vector<1x128xf32>
    %275 = arith.mulf %268, %268 : vector<1x128xf32>
    %276 = arith.subf %274, %275 : vector<1x128xf32>
    %cst_91 = arith.constant 0.000000e+00 : f32
    %277 = vector.broadcast %cst_91 : f32 to vector<1x128xf32>
    %278 = arith.maximumf %276, %277 : vector<1x128xf32>
    %cst_92 = arith.constant 9.99999974E-6 : f32
    %279 = vector.broadcast %cst_92 : f32 to vector<1x128xf32>
    %280 = arith.addf %278, %279 : vector<1x128xf32>
    %281 = math.rsqrt %280 : vector<1x128xf32>
    %282 = arith.mulf %248, %281 : vector<1x128xf32>
    %283 = vector.broadcast %282 : vector<1x128xf32> to vector<16x128xf32>
    %284 = arith.mulf %247, %283 : vector<16x128xf32>
    %285 = arith.mulf %268, %282 : vector<1x128xf32>
    %286 = arith.subf %249, %285 : vector<1x128xf32>
    %287 = vector.broadcast %286 : vector<1x128xf32> to vector<16x128xf32>
    %288 = arith.addf %284, %287 : vector<16x128xf32>
    %289 = arith.truncf %288 : vector<16x128xf32> to vector<16x128xbf16>
    %c1_93 = arith.constant 1 : index
    %c0_94 = arith.constant 0 : index
    %c0_95 = arith.constant 0 : index
    %290 = vector.load %arg8[%c1_93, %c0_94, %c0_95] : memref<3x128x256xbf16, #tpu.memory_space<vmem>>, vector<1x128x256xbf16>
    %291 = vector.shape_cast %290 : vector<1x128x256xbf16> to vector<128x256xbf16>
    %cst_96 = arith.constant dense<0.000000e+00> : vector<16x256xf32>
    %292 = tpu.matmul %289, %291, %cst_96 {dimension_numbers = #tpu.dot_dimension_numbers<[1], [0], [0], [1], [0, 0, 1, 1], [], []>} : vector<16x128xbf16>, vector<128x256xbf16>, vector<16x256xf32> -> vector<16x256xf32>
    %c1_i32_97 = arith.constant 1 : i32
    %293 = tpu.dynamic_rotate %288 by %c1_i32_97 dim 0 : vector<16x128xf32>, i32 -> vector<16x128xf32>
    %c0_98 = arith.constant 0 : index
    %c0_99 = arith.constant 0 : index
    %c0_100 = arith.constant 0 : index
    %294 = vector.load %arg1[%c0_98, %c0_99, %c0_100] : memref<3x16x1xf32, #tpu.memory_space<vmem>>, vector<1x16x1xf32>
    %295 = vector.shape_cast %294 : vector<1x16x1xf32> to vector<16x1xf32>
    %296 = vector.broadcast %295 : vector<16x1xf32> to vector<16x128xf32>
    %297 = arith.mulf %293, %296 : vector<16x128xf32>
    %298 = arith.truncf %297 : vector<16x128xf32> to vector<16x128xbf16>
    %c0_101 = arith.constant 0 : index
    %c0_102 = arith.constant 0 : index
    %c0_103 = arith.constant 0 : index
    %299 = vector.load %arg8[%c0_101, %c0_102, %c0_103] : memref<3x128x256xbf16, #tpu.memory_space<vmem>>, vector<1x128x256xbf16>
    %300 = vector.shape_cast %299 : vector<1x128x256xbf16> to vector<128x256xbf16>
    %cst_104 = arith.constant dense<0.000000e+00> : vector<16x256xf32>
    %301 = tpu.matmul %298, %300, %cst_104 {dimension_numbers = #tpu.dot_dimension_numbers<[1], [0], [0], [1], [0, 0, 1, 1], [], []>} : vector<16x128xbf16>, vector<128x256xbf16>, vector<16x256xf32> -> vector<16x256xf32>
    %302 = arith.addf %292, %301 : vector<16x256xf32>
    %c15_i32_105 = arith.constant 15 : i32
    %303 = tpu.dynamic_rotate %288 by %c15_i32_105 dim 0 : vector<16x128xf32>, i32 -> vector<16x128xf32>
    %c2_106 = arith.constant 2 : index
    %c0_107 = arith.constant 0 : index
    %c0_108 = arith.constant 0 : index
    %304 = vector.load %arg1[%c2_106, %c0_107, %c0_108] : memref<3x16x1xf32, #tpu.memory_space<vmem>>, vector<1x16x1xf32>
    %305 = vector.shape_cast %304 : vector<1x16x1xf32> to vector<16x1xf32>
    %306 = vector.broadcast %305 : vector<16x1xf32> to vector<16x128xf32>
    %307 = arith.mulf %303, %306 : vector<16x128xf32>
    %308 = arith.truncf %307 : vector<16x128xf32> to vector<16x128xbf16>
    %c2_109 = arith.constant 2 : index
    %c0_110 = arith.constant 0 : index
    %c0_111 = arith.constant 0 : index
    %309 = vector.load %arg8[%c2_109, %c0_110, %c0_111] : memref<3x128x256xbf16, #tpu.memory_space<vmem>>, vector<1x128x256xbf16>
    %310 = vector.shape_cast %309 : vector<1x128x256xbf16> to vector<128x256xbf16>
    %cst_112 = arith.constant dense<0.000000e+00> : vector<16x256xf32>
    %311 = tpu.matmul %308, %310, %cst_112 {dimension_numbers = #tpu.dot_dimension_numbers<[1], [0], [0], [1], [0, 0, 1, 1], [], []>} : vector<16x128xbf16>, vector<128x256xbf16>, vector<16x256xf32> -> vector<16x256xf32>
    %312 = arith.addf %302, %311 : vector<16x256xf32>
    %c0_113 = arith.constant 0 : index
    %c0_114 = arith.constant 0 : index
    %313 = vector.load %arg5[%c0_113, %c0_114] : memref<2x256xf32, #tpu.memory_space<vmem>>, vector<2x256xf32>
    %314 = vector.extract_strided_slice %313 {offsets = [0, 0], sizes = [1, 256], strides = [1, 1]} : vector<2x256xf32> to vector<1x256xf32>
    %315 = vector.extract_strided_slice %313 {offsets = [1, 0], sizes = [1, 256], strides = [1, 1]} : vector<2x256xf32> to vector<1x256xf32>
    %cst_115 = arith.constant dense<0.000000e+00> : vector<256xf32>
    %316 = vector.multi_reduction <add>, %312, %cst_115 [0] : vector<16x256xf32> to vector<256xf32>
    %317 = vector.shape_cast %316 : vector<256xf32> to vector<1x256xf32>
    %318 = arith.mulf %312, %312 : vector<16x256xf32>
    %cst_116 = arith.constant dense<0.000000e+00> : vector<256xf32>
    %319 = vector.multi_reduction <add>, %318, %cst_116 [0] : vector<16x256xf32> to vector<256xf32>
    %320 = vector.shape_cast %319 : vector<256xf32> to vector<1x256xf32>
    %321 = vector.broadcast %317 : vector<1x256xf32> to vector<8x256xf32>
    %322 = arith.mulf %62, %321 : vector<8x256xf32>
    %cst_117 = arith.constant dense<0.000000e+00> : vector<8xf32>
    %323 = vector.multi_reduction <add>, %322, %cst_117 [1] : vector<8x256xf32> to vector<8xf32>
    %324 = vector.shape_cast %323 : vector<8xf32> to vector<8x1xf32>
    %325 = vector.broadcast %320 : vector<1x256xf32> to vector<8x256xf32>
    %326 = arith.mulf %62, %325 : vector<8x256xf32>
    %cst_118 = arith.constant dense<0.000000e+00> : vector<8xf32>
    %327 = vector.multi_reduction <add>, %326, %cst_118 [1] : vector<8x256xf32> to vector<8xf32>
    %328 = vector.shape_cast %327 : vector<8xf32> to vector<8x1xf32>
    %329 = vector.broadcast %324 : vector<8x1xf32> to vector<8x256xf32>
    %330 = arith.mulf %62, %329 : vector<8x256xf32>
    %cst_119 = arith.constant dense<0.000000e+00> : vector<256xf32>
    %331 = vector.multi_reduction <add>, %330, %cst_119 [0] : vector<8x256xf32> to vector<256xf32>
    %332 = vector.shape_cast %331 : vector<256xf32> to vector<1x256xf32>
    %cst_120 = arith.constant 0.001953125 : f32
    %333 = vector.broadcast %cst_120 : f32 to vector<1x256xf32>
    %334 = arith.mulf %332, %333 : vector<1x256xf32>
    %335 = vector.broadcast %328 : vector<8x1xf32> to vector<8x256xf32>
    %336 = arith.mulf %62, %335 : vector<8x256xf32>
    %cst_121 = arith.constant dense<0.000000e+00> : vector<256xf32>
    %337 = vector.multi_reduction <add>, %336, %cst_121 [0] : vector<8x256xf32> to vector<256xf32>
    %338 = vector.shape_cast %337 : vector<256xf32> to vector<1x256xf32>
    %cst_122 = arith.constant 0.001953125 : f32
    %339 = vector.broadcast %cst_122 : f32 to vector<1x256xf32>
    %340 = arith.mulf %338, %339 : vector<1x256xf32>
    %341 = arith.mulf %334, %334 : vector<1x256xf32>
    %342 = arith.subf %340, %341 : vector<1x256xf32>
    %cst_123 = arith.constant 0.000000e+00 : f32
    %343 = vector.broadcast %cst_123 : f32 to vector<1x256xf32>
    %344 = arith.maximumf %342, %343 : vector<1x256xf32>
    %cst_124 = arith.constant 9.99999974E-6 : f32
    %345 = vector.broadcast %cst_124 : f32 to vector<1x256xf32>
    %346 = arith.addf %344, %345 : vector<1x256xf32>
    %347 = math.rsqrt %346 : vector<1x256xf32>
    %348 = arith.mulf %314, %347 : vector<1x256xf32>
    %349 = vector.broadcast %348 : vector<1x256xf32> to vector<16x256xf32>
    %350 = arith.mulf %312, %349 : vector<16x256xf32>
    %351 = arith.mulf %334, %348 : vector<1x256xf32>
    %352 = arith.subf %315, %351 : vector<1x256xf32>
    %353 = vector.broadcast %352 : vector<1x256xf32> to vector<16x256xf32>
    %354 = arith.addf %350, %353 : vector<16x256xf32>
    %cst_125 = arith.constant 0.000000e+00 : f32
    %355 = vector.broadcast %cst_125 : f32 to vector<16x256xf32>
    %356 = arith.maximumf %354, %355 : vector<16x256xf32>
    %c0_126 = arith.constant 0 : index
    %c0_127 = arith.constant 0 : index
    %357 = vector.load %arg9[%c0_126, %c0_127] : memref<16x256xf32, #tpu.memory_space<vmem>>, vector<16x256xf32>
    tpu.vector_store %arg9[%c0_126, %c0_127], %356 {strides = array<i32>} : memref<16x256xf32, #tpu.memory_space<vmem>>, vector<16x256xf32>,
    return
  }
}

</mosaic_0001>

<llo_original>
// kernel: tile.141
$region0: #{tile.141}
  #allocation0 [shape = 's32[1]{0}', space=sflag, size = 0x4, scoped, tag = 'scoped memory for tile.141']
  %s0 = inlined_call_operand.vmem [shape: f32[4], index: 0, kind: input, shape index: {}]
  %s1 = inlined_call_operand.vmem [shape: f32[32,4], index: 1, kind: output, shape index: {}]
  // Predicated region
  $region2: #{tile.141} parent=0 // pred_check
    _
  $region3: #{tile.141} parent=0 // pred_check_branch
    %3 = sbr.rel (0) target = $region5
  $region4: #{tile.141} parent=0 // pred_region
    _
  $region5: #{tile.141} parent=0 // pred_fallthru
    _
  %v4 = vld [vmem:[%s0] ss:$0 sm:$0xff]
  %5 = vst [vmem:[%s1] sm:$0xff] %v4
  %s6 = scalar_lea.vmem %s1, 8
  %7 = vst [vmem:[%s6] sm:$0xff] %v4
  %s8 = scalar_lea.vmem %s1, 16
  %9 = vst [vmem:[%s8] sm:$0xff] %v4
  %s10 = scalar_lea.vmem %s1, 24
  %11 = vst [vmem:[%s10] sm:$0xff] %v4

// kernel: tile.136
$region0: #{tile.136}
  %s0 = inlined_call_operand.vmem [shape: f32[16,4], index: 0, kind: input, shape index: {}]
  %s1 = inlined_call_operand.vmem [shape: f32[64], index: 1, kind: output, shape index: {}]
  $region1: #{tile.136} parent=0
    #allocation0 [shape = 'u8[4096]{0}', space=vmem, size = 0x1000, scoped, tag = 'scoped mem for output reshape']
    %v2 = vld [vmem:[%s0] sm:$0x1]
    %vm3 = vcmask 31744
    %4 = vst.msk [vmem:[#allocation0] sm:$0x1] %vm3, %v2
    %s5 = scalar_lea.vmem %s0, 15
    %v6 = vld [vmem:[%s5] sm:$0x1]
    %7 = vrot.lane.b32.xlu0 %v6, 60
    %v8 = vpop.permute.xlu0 %7
    %vm9 = vcmask 523744
    %10 = vst.msk [vmem:[#allocation0] sm:$0x1] %vm9, %v8
    %s11 = scalar_lea.vmem %s0, 14
    %v12 = vld [vmem:[%s11] sm:$0x1]
    %13 = vrot.lane.b32.xlu0 %v12, 56
    %v14 = vpop.permute.xlu0 %13
    %vm15 = vcmask 490944
    %16 = vst.msk [vmem:[#allocation0] sm:$0x1] %vm15, %v14
    %s17 = scalar_lea.vmem %s0, 13
    %v18 = vld [vmem:[%s17] sm:$0x1]
    %19 = vrot.lane.b32.xlu0 %v18, 52
    %v20 = vpop.permute.xlu0 %19
    %vm21 = vcmask 458144
    %22 = vst.msk [vmem:[#allocation0] sm:$0x1] %vm21, %v20
    %s23 = scalar_lea.vmem %s0, 12
    %v24 = vld [vmem:[%s23] sm:$0x1]
    %25 = vrot.lane.b32.xlu0 %v24, 48
    %v26 = vpop.permute.xlu0 %25
    %vm27 = vcmask 425344
    %28 = vst.msk [vmem:[#allocation0] sm:$0x1] %vm27, %v26
    %s29 = scalar_lea.vmem %s0, 11
    %v30 = vld [vmem:[%s29] sm:$0x1]
    %31 = vrot.lane.b32.xlu0 %v30, 44
    %v32 = vpop.permute.xlu0 %31
    %vm33 = vcmask 392544
    %34 = vst.msk [vmem:[#allocation0] sm:$0x1] %vm33, %v32
    %s35 = scalar_lea.vmem %s0, 10
    %v36 = vld [vmem:[%s35] sm:$0x1]
    %37 = vrot.lane.b32.xlu0 %v36, 40
    %v38 = vpop.permute.xlu0 %37
    %vm39 = vcmask 359744
    %40 = vst.msk [vmem:[#allocation0] sm:$0x1] %vm39, %v38
    %s41 = scalar_lea.vmem %s0, 9
    %v42 = vld [vmem:[%s41] sm:$0x1]
    %43 = vrot.lane.b32.xlu0 %v42, 36
    %v44 = vpop.permute.xlu0 %43
    %vm45 = vcmask 326944
    %46 = vst.msk [vmem:[#allocation0] sm:$0x1] %vm45, %v44
    %s47 = scalar_lea.vmem %s0, 8
    %v48 = vld [vmem:[%s47] sm:$0x1]
    %49 = vrot.lane.b32.xlu0 %v48, 32
    %v50 = vpop.permute.xlu0 %49
    %vm51 = vcmask 294144
    %52 = vst.msk [vmem:[#allocation0] sm:$0x1] %vm51, %v50
    %s53 = scalar_lea.vmem %s0, 7
    %v54 = vld [vmem:[%s53] sm:$0x1]
    %55 = vrot.lane.b32.xlu0 %v54, 28
    %v56 = vpop.permute.xlu0 %55
    %vm57 = vcmask 261344
    %58 = vst.msk [vmem:[#allocation0] sm:$0x1] %vm57, %v56
    %s59 = scalar_lea.vmem %s0, 6
    %v60 = vld [vmem:[%s59] sm:$0x1]
    %61 = vrot.lane.b32.xlu0 %v60, 24
    %v62 = vpop.permute.xlu0 %61
    %vm63 = vcmask 228544
    %64 = vst.msk [vmem:[#allocation0] sm:$0x1] %vm63, %v62
    %s65 = scalar_lea.vmem %s0, 5
    %v66 = vld [vmem:[%s65] sm:$0x1]
    %67 = vrot.lane.b32.xlu0 %v66, 20
    %v68 = vpop.permute.xlu0 %67
    %vm69 = vcmask 195744
    %70 = vst.msk [vmem:[#allocation0] sm:$0x1] %vm69, %v68
    %s71 = scalar_lea.vmem %s0, 4
    %v72 = vld [vmem:[%s71] sm:$0x1]
    %73 = vrot.lane.b32.xlu0 %v72, 16
    %v74 = vpop.permute.xlu0 %73
    %vm75 = vcmask 162944
    %76 = vst.msk [vmem:[#allocation0] sm:$0x1] %vm75, %v74
    %s77 = scalar_lea.vmem %s0, 3
    %v78 = vld [vmem:[%s77] sm:$0x1]
    %79 = vrot.lane.b32.xlu0 %v78, 12
    %v80 = vpop.permute.xlu0 %79
    %vm81 = vcmask 130144
    %82 = vst.msk [vmem:[#allocation0] sm:$0x1] %vm81, %v80
    %s83 = scalar_lea.vmem %s0, 2
    %v84 = vld [vmem:[%s83] sm:$0x1]
    %85 = vrot.lane.b32.xlu0 %v84, 8
    %v86 = vpop.permute.xlu0 %85
    %vm87 = vcmask 97344
    %88 = vst.msk [vmem:[#allocation0] sm:$0x1] %vm87, %v86
    %s89 = scalar_lea.vmem %s0, 1
    %v90 = vld [vmem:[%s89] sm:$0x1]
    %91 = vrot.lane.b32.xlu0 %v90, 4
    %v92 = vpop.permute.xlu0 %91
    %vm93 = vcmask 64544
    %94 = vst.msk [vmem:[#allocation0] sm:$0x1] %vm93, %v92
    %s96 = sshllo.u32 0, 1
    %v98 = vld [vmem:[#allocation0] sm:%s96]
    %s99 = sshllo.u32 0, 1
    %100 = vst [vmem:[%s1] sm:%s99] %v98

// kernel: tile.137
$region0: #{tile.137}
  #allocation0 [shape = 's32[1]{0}', space=sflag, size = 0x4, scoped, tag = 'scoped memory for tile.137']
  %s0 = inlined_call_operand.vmem [shape: f32[64], index: 0, kind: input, shape index: {}]
  %s1 = inlined_call_operand.vmem [shape: f32[2,64], index: 1, kind: output, shape index: {}]
  // Predicated region
  $region2: #{tile.137} parent=0 // pred_check
    _
  $region3: #{tile.137} parent=0 // pred_check_branch
    %3 = sbr.rel (0) target = $region5
  $region4: #{tile.137} parent=0 // pred_region
    _
  $region5: #{tile.137} parent=0 // pred_fallthru
    _
  %v4 = vld [vmem:[%s0] ss:$0 sm:$0xff]
  %5 = vst [vmem:[%s1] sm:$0x3] %v4

// kernel: mul.18
$region0: #{mul.18}
  %s0 = inlined_call_operand.vmem [shape: f32[16,4,16,8], index: 0, kind: input, shape index: {}]
  %s1 = inlined_call_operand.vmem [shape: f32[64,128], index: 1, kind: output, shape index: {}]
  %s2 = smov 3
  %v3 = vld [vmem:[%s0] ss:$16 sm:%s2]
  %s4 = smov 12
  %v5 = vld [vmem:[%s0] ss:$16 sm:%s4]
  %vm6 = vcmask 1043458
  %v7 = vsel %vm6, %v5, %v3
  %s8 = smov 48
  %v9 = vld [vmem:[%s0] ss:$16 sm:%s8]
  %vm10 = vcmask 1045508
  %v11 = vsel %vm10, %v9, %v7
  %s12 = smov 192
  %v13 = vld [vmem:[%s0] ss:$16 sm:%s12]
  %vm14 = vcmask 1047558
  %v15 = vsel %vm14, %v13, %v11
  %vm16 = vcmask 64512
  %17 = vst.msk [vmem:[%s1] sm:$0xff] %vm16, %v15
  %s18 = scalar_lea.vmem %s0, 128
  %s19 = smov 3
  %v20 = vld [vmem:[%s18] ss:$16 sm:%s19]
  %s21 = scalar_lea.vmem %s0, 128
  %s22 = smov 12
  %v23 = vld [vmem:[%s21] ss:$16 sm:%s22]
  %vm24 = vcmask 1043458
  %v25 = vsel %vm24, %v23, %v20
  %s26 = scalar_lea.vmem %s0, 128
  %s27 = smov 48
  %v28 = vld [vmem:[%s26] ss:$16 sm:%s27]
  %vm29 = vcmask 1045508
  %v30 = vsel %vm29, %v28, %v25
  %s31 = scalar_lea.vmem %s0, 128
  %s32 = smov 192
  %v33 = vld [vmem:[%s31] ss:$16 sm:%s32]
  %vm34 = vcmask 1047558
  %v35 = vsel %vm34, %v33, %v30
  %vm36 = vcmask 64512
  %s37 = scalar_lea.vmem %s1, 8
  %38 = vst.msk [vmem:[%s37] sm:$0xff] %vm36, %v35
  %s39 = scalar_lea.vmem %s0, 256
  %s40 = smov 3
  %v41 = vld [vmem:[%s39] ss:$16 sm:%s40]
  %s42 = scalar_lea.vmem %s0, 256
  %s43 = smov 12
  %v44 = vld [vmem:[%s42] ss:$16 sm:%s43]
  %vm45 = vcmask 1043458
  %v46 = vsel %vm45, %v44, %v41
  %s47 = scalar_lea.vmem %s0, 256
  %s48 = smov 48
  %v49 = vld [vmem:[%s47] ss:$16 sm:%s48]
  %vm50 = vcmask 1045508
  %v51 = vsel %vm50, %v49, %v46
  %s52 = scalar_lea.vmem %s0, 256
  %s53 = smov 192
  %v54 = vld [vmem:[%s52] ss:$16 sm:%s53]
  %vm55 = vcmask 1047558
  %v56 = vsel %vm55, %v54, %v51
  %vm57 = vcmask 64512
  %s58 = scalar_lea.vmem %s1, 16
  %59 = vst.msk [vmem:[%s58] sm:$0xff] %vm57, %v56
  %s60 = scalar_lea.vmem %s0, 384
  %s61 = smov 3
  %v62 = vld [vmem:[%s60] ss:$16 sm:%s61]
  %s63 = scalar_lea.vmem %s0, 384
  %s64 = smov 12
  %v65 = vld [vmem:[%s63] ss:$16 sm:%s64]
  %vm66 = vcmask 1043458
  %v67 = vsel %vm66, %v65, %v62
  %s68 = scalar_lea.vmem %s0, 384
  %s69 = smov 48
  %v70 = vld [vmem:[%s68] ss:$16 sm:%s69]
  %vm71 = vcmask 1045508
  %v72 = vsel %vm71, %v70, %v67
  %s73 = scalar_lea.vmem %s0, 384
  %s74 = smov 192
  %v75 = vld [vmem:[%s73] ss:$16 sm:%s74]
  %vm76 = vcmask 1047558
  %v77 = vsel %vm76, %v75, %v72
  %vm78 = vcmask 64512
  %s79 = scalar_lea.vmem %s1, 24
  %80 = vst.msk [vmem:[%s79] sm:$0xff] %vm78, %v77
  %s81 = scalar_lea.vmem %s0, 512
  %s82 = smov 3
  %v83 = vld [vmem:[%s81] ss:$16 sm:%s82]
  %s84 = scalar_lea.vmem %s0, 512
  %s85 = smov 12
  %v86 = vld [vmem:[%s84] ss:$16 sm:%s85]
  %vm87 = vcmask 1043458
  %v88 = vsel %vm87, %v86, %v83
  %s89 = scalar_lea.vmem %s0, 512
  %s90 = smov 48
  %v91 = vld [vmem:[%s89] ss:$16 sm:%s90]
  %vm92 = vcmask 1045508
  %v93 = vsel %vm92, %v91, %v88
  %s94 = scalar_lea.vmem %s0, 512
  %s95 = smov 192
  %v96 = vld [vmem:[%s94] ss:$16 sm:%s95]
  %vm97 = vcmask 1047558
  %v98 = vsel %vm97, %v96, %v93
  %vm99 = vcmask 64512
  %s100 = scalar_lea.vmem %s1, 32
  %101 = vst.msk [vmem:[%s100] sm:$0xff] %vm99, %v98
  %s102 = scalar_lea.vmem %s0, 640
  %s103 = smov 3
  %v104 = vld [vmem:[%s102] ss:$16 sm:%s103]
  %s105 = scalar_lea.vmem %s0, 640
  %s106 = smov 12
  %v107 = vld [vmem:[%s105] ss:$16 sm:%s106]
  %vm108 = vcmask 1043458
  %v109 = vsel %vm108, %v107, %v104
  %s110 = scalar_lea.vmem %s0, 640
  %s111 = smov 48
  %v112 = vld [vmem:[%s110] ss:$16 sm:%s111]
  %vm113 = vcmask 1045508
  %v114 = vsel %vm113, %v112, %v109
  %s115 = scalar_lea.vmem %s0, 640
  %s116 = smov 192
  %v117 = vld [vmem:[%s115] ss:$16 sm:%s116]
  %vm118 = vcmask 1047558
  %v119 = vsel %vm118, %v117, %v114
  %vm120 = vcmask 64512
  %s121 = scalar_lea.vmem %s1, 40
  %122 = vst.msk [vmem:[%s121] sm:$0xff] %vm120, %v119
  %s123 = scalar_lea.vmem %s0, 768
  %s124 = smov 3
  %v125 = vld [vmem:[%s123] ss:$16 sm:%s124]
  %s126 = scalar_lea.vmem %s0, 768
  %s127 = smov 12
  %v128 = vld [vmem:[%s126] ss:$16 sm:%s127]
  %vm129 = vcmask 1043458
  %v130 = vsel %vm129, %v128, %v125
  %s131 = scalar_lea.vmem %s0, 768
  %s132 = smov 48
  %v133 = vld [vmem:[%s131] ss:$16 sm:%s132]
  %vm134 = vcmask 1045508
  %v135 = vsel %vm134, %v133, %v130
  %s136 = scalar_lea.vmem %s0, 768
  %s137 = smov 192
  %v138 = vld [vmem:[%s136] ss:$16 sm:%s137]
  %vm139 = vcmask 1047558
  %v140 = vsel %vm139, %v138, %v135
  %vm141 = vcmask 64512
  %s142 = scalar_lea.vmem %s1, 48
  %143 = vst.msk [vmem:[%s142] sm:$0xff] %vm141, %v140
  %s144 = scalar_lea.vmem %s0, 896
  %s145 = smov 3
  %v146 = vld [vmem:[%s144] ss:$16 sm:%s145]
  %s147 = scalar_lea.vmem %s0, 896
  %s148 = smov 12
  %v149 = vld [vmem:[%s147] ss:$16 sm:%s148]
  %vm150 = vcmask 1043458
  %v151 = vsel %vm150, %v149, %v146
  %s152 = scalar_lea.vmem %s0, 896
  %s153 = smov 48
  %v154 = vld [vmem:[%s152] ss:$16 sm:%s153]
  %vm155 = vcmask 1045508
  %v156 = vsel %vm155, %v154, %v151
  %s157 = scalar_lea.vmem %s0, 896
  %s158 = smov 192
  %v159 = vld [vmem:[%s157] ss:$16 sm:%s158]
  %vm160 = vcmask 1047558
  %v161 = vsel %vm160, %v159, %v156
  %vm162 = vcmask 64512
  %s163 = scalar_lea.vmem %s1, 56
  %164 = vst.msk [vmem:[%s163] sm:$0xff] %vm162, %v161
  %s165 = scalar_lea.vmem %s0, 15
  %s166 = smov 3
  %v167 = vld [vmem:[%s165] ss:$16 sm:%s166]
  %s168 = scalar_lea.vmem %s0, 15
  %s169 = smov 12
  %v170 = vld [vmem:[%s168] ss:$16 sm:%s169]
  %vm171 = vcmask 1043458
  %v172 = vsel %vm171, %v170, %v167
  %s173 = scalar_lea.vmem %s0, 15
  %s174 = smov 48
  %v175 = vld [vmem:[%s173] ss:$16 sm:%s174]
  %vm176 = vcmask 1045508
  %v177 = vsel %vm176, %v175, %v172
  %s178 = scalar_lea.vmem %s0, 15
  %s179 = smov 192
  %v180 = vld [vmem:[%s178] ss:$16 sm:%s179]
  %vm181 = vcmask 1047558
  %v182 = vsel %vm181, %v180, %v177
  %183 = vrot.lane.b32.xlu0 %v182, 120
  %v184 = vpop.permute.xlu0 %183
  %vm185 = vcmask 1048512
  %186 = vst.msk [vmem:[%s1] sm:$0xff] %vm185, %v184
  %s187 = scalar_lea.vmem %s0, 527
  %s188 = smov 3
  %v189 = vld [vmem:[%s187] ss:$16 sm:%s188]
  %s190 = scalar_lea.vmem %s0, 527
  %s191 = smov 12
  %v192 = vld [vmem:[%s190] ss:$16 sm:%s191]
  %vm193 = vcmask 1043458
  %v194 = vsel %vm193, %v192, %v189
  %s195 = scalar_lea.vmem %s0, 527
  %s196 = smov 48
  %v197 = vld [vmem:[%s195] ss:$16 sm:%s196]
  %vm198 = vcmask 1045508
  %v199 = vsel %vm198, %v197, %v194
  %s200 = scalar_lea.vmem %s0, 527
  %s201 = smov 192
  %v202 = vld [vmem:[%s200] ss:$16 sm:%s201]
  %vm203 = vcmask 1047558
  %v204 = vsel %vm203, %v202, %v199
  %205 = vrot.lane.b32.xlu0 %v204, 120
  %v206 = vpop.permute.xlu0 %205
  %vm207 = vcmask 1048512
  %s208 = scalar_lea.vmem %s1, 32
  %209 = vst.msk [vmem:[%s208] sm:$0xff] %vm207, %v206
  %s210 = scalar_lea.vmem %s0, 143
  %s211 = smov 3
  %v212 = vld [vmem:[%s210] ss:$16 sm:%s211]
  %s213 = scalar_lea.vmem %s0, 143
  %s214 = smov 12
  %v215 = vld [vmem:[%s213] ss:$16 sm:%s214]
  %vm216 = vcmask 1043458
  %v217 = vsel %vm216, %v215, %v212
  %s218 = scalar_lea.vmem %s0, 143
  %s219 = smov 48
  %v220 = vld [vmem:[%s218] ss:$16 sm:%s219]
  %vm221 = vcmask 1045508
  %v222 = vsel %vm221, %v220, %v217
  %s223 = scalar_lea.vmem %s0, 143
  %s224 = smov 192
  %v225 = vld [vmem:[%s223] ss:$16 sm:%s224]
  %vm226 = vcmask 1047558
  %v227 = vsel %vm226, %v225, %v222
  %228 = vrot.lane.b32.xlu0 %v227, 120
  %v229 = vpop.permute.xlu0 %228
  %vm230 = vcmask 1048512
  %s231 = scalar_lea.vmem %s1, 8
  %232 = vst.msk [vmem:[%s231] sm:$0xff] %vm230, %v229
  %s233 = scalar_lea.vmem %s0, 655
  %s234 = smov 3
  %v235 = vld [vmem:[%s233] ss:$16 sm:%s234]
  %s236 = scalar_lea.vmem %s0, 655
  %s237 = smov 12
  %v238 = vld [vmem:[%s236] ss:$16 sm:%s237]
  %vm239 = vcmask 1043458
  %v240 = vsel %vm239, %v238, %v235
  %s241 = scalar_lea.vmem %s0, 655
  %s242 = smov 48
  %v243 = vld [vmem:[%s241] ss:$16 sm:%s242]
  %vm244 = vcmask 1045508
  %v245 = vsel %vm244, %v243, %v240
  %s246 = scalar_lea.vmem %s0, 655
  %s247 = smov 192
  %v248 = vld [vmem:[%s246] ss:$16 sm:%s247]
  %vm249 = vcmask 1047558
  %v250 = vsel %vm249, %v248, %v245
  %251 = vrot.lane.b32.xlu0 %v250, 120
  %v252 = vpop.permute.xlu0 %251
  %vm253 = vcmask 1048512
  %s254 = scalar_lea.vmem %s1, 40
  %255 = vst.msk [vmem:[%s254] sm:$0xff] %vm253, %v252
  %s256 = scalar_lea.vmem %s0, 271
  %s257 = smov 3
  %v258 = vld [vmem:[%s256] ss:$16 sm:%s257]
  %s259 = scalar_lea.vmem %s0, 271
  %s260 = smov 12
  %v261 = vld [vmem:[%s259] ss:$16 sm:%s260]
  %vm262 = vcmask 1043458
  %v263 = vsel %vm262, %v261, %v258
  %s264 = scalar_lea.vmem %s0, 271
  %s265 = smov 48
  %v266 = vld [vmem:[%s264] ss:$16 sm:%s265]
  %vm267 = vcmask 1045508
  %v268 = vsel %vm267, %v266, %v263
  %s269 = scalar_lea.vmem %s0, 271
  %s270 = smov 192
  %v271 = vld [vmem:[%s269] ss:$16 sm:%s270]
  %vm272 = vcmask 1047558
  %v273 = vsel %vm272, %v271, %v268
  %274 = vrot.lane.b32.xlu0 %v273, 120
  %v275 = vpop.permute.xlu0 %274
  %vm276 = vcmask 1048512
  %s277 = scalar_lea.vmem %s1, 16
  %278 = vst.msk [vmem:[%s277] sm:$0xff] %vm276, %v275
  %s279 = scalar_lea.vmem %s0, 783
  %s280 = smov 3
  %v281 = vld [vmem:[%s279] ss:$16 sm:%s280]
  %s282 = scalar_lea.vmem %s0, 783
  %s283 = smov 12
  %v284 = vld [vmem:[%s282] ss:$16 sm:%s283]
  %vm285 = vcmask 1043458
  %v286 = vsel %vm285, %v284, %v281
  %s287 = scalar_lea.vmem %s0, 783
  %s288 = smov 48
  %v289 = vld [vmem:[%s287] ss:$16 sm:%s288]
  %vm290 = vcmask 1045508
  %v291 = vsel %vm290, %v289, %v286
  %s292 = scalar_lea.vmem %s0, 783
  %s293 = smov 192
  %v294 = vld [vmem:[%s292] ss:$16 sm:%s293]
  %vm295 = vcmask 1047558
  %v296 = vsel %vm295, %v294, %v291
  %297 = vrot.lane.b32.xlu0 %v296, 120
  %v298 = vpop.permute.xlu0 %297
  %vm299 = vcmask 1048512
  %s300 = scalar_lea.vmem %s1, 48
  %301 = vst.msk [vmem:[%s300] sm:$0xff] %vm299, %v298
  %s302 = scalar_lea.vmem %s0, 399
  %s303 = smov 3
  %v304 = vld [vmem:[%s302] ss:$16 sm:%s303]
  %s305 = scalar_lea.vmem %s0, 399
  %s306 = smov 12
  %v307 = vld [vmem:[%s305] ss:$16 sm:%s306]
  %vm308 = vcmask 1043458
  %v309 = vsel %vm308, %v307, %v304
  %s310 = scalar_lea.vmem %s0, 399
  %s311 = smov 48
  %v312 = vld [vmem:[%s310] ss:$16 sm:%s311]
  %vm313 = vcmask 1045508
  %v314 = vsel %vm313, %v312, %v309
  %s315 = scalar_lea.vmem %s0, 399
  %s316 = smov 192
  %v317 = vld [vmem:[%s315] ss:$16 sm:%s316]
  %vm318 = vcmask 1047558
  %v319 = vsel %vm318, %v317, %v314
  %320 = vrot.lane.b32.xlu0 %v319, 120
  %v321 = vpop.permute.xlu0 %320
  %vm322 = vcmask 1048512
  %s323 = scalar_lea.vmem %s1, 24
  %324 = vst.msk [vmem:[%s323] sm:$0xff] %vm322, %v321
  %s325 = scalar_lea.vmem %s0, 911
  %s326 = smov 3
  %v327 = vld [vmem:[%s325] ss:$16 sm:%s326]
  %s328 = scalar_lea.vmem %s0, 911
  %s329 = smov 12
  %v330 = vld [vmem:[%s328] ss:$16 sm:%s329]
  %vm331 = vcmask 1043458
  %v332 = vsel %vm331, %v330, %v327
  %s333 = scalar_lea.vmem %s0, 911
  %s334 = smov 48
  %v335 = vld [vmem:[%s333] ss:$16 sm:%s334]
  %vm336 = vcmask 1045508
  %v337 = vsel %vm336, %v335, %v332
  %s338 = scalar_lea.vmem %s0, 911
  %s339 = smov 192
  %v340 = vld [vmem:[%s338] ss:$16 sm:%s339]
  %vm341 = vcmask 1047558
  %v342 = vsel %vm341, %v340, %v337
  %343 = vrot.lane.b32.xlu0 %v342, 120
  %v344 = vpop.permute.xlu0 %343
  %vm345 = vcmask 1048512
  %s346 = scalar_lea.vmem %s1, 56
  %347 = vst.msk [vmem:[%s346] sm:$0xff] %vm345, %v344
  %s348 = scalar_lea.vmem %s0, 14
  %s349 = smov 3
  %v350 = vld [vmem:[%s348] ss:$16 sm:%s349]
  %s351 = scalar_lea.vmem %s0, 14
  %s352 = smov 12
  %v353 = vld [vmem:[%s351] ss:$16 sm:%s352]
  %vm354 = vcmask 1043458
  %v355 = vsel %vm354, %v353, %v350
  %s356 = scalar_lea.vmem %s0, 14
  %s357 = smov 48
  %v358 = vld [vmem:[%s356] ss:$16 sm:%s357]
  %vm359 = vcmask 1045508
  %v360 = vsel %vm359, %v358, %v355
  %s361 = scalar_lea.vmem %s0, 14
  %s362 = smov 192
  %v363 = vld [vmem:[%s361] ss:$16 sm:%s362]
  %vm364 = vcmask 1047558
  %v365 = vsel %vm364, %v363, %v360
  %366 = vrot.lane.b32.xlu0 %v365, 112
  %v367 = vpop.permute.xlu0 %366
  %vm368 = vcmask 982912
  %369 = vst.msk [vmem:[%s1] sm:$0xff] %vm368, %v367
  %s370 = scalar_lea.vmem %s0, 526
  %s371 = smov 3
  %v372 = vld [vmem:[%s370] ss:$16 sm:%s371]
  %s373 = scalar_lea.vmem %s0, 526
  %s374 = smov 12
  %v375 = vld [vmem:[%s373] ss:$16 sm:%s374]
  %vm376 = vcmask 1043458
  %v377 = vsel %vm376, %v375, %v372
  %s378 = scalar_lea.vmem %s0, 526
  %s379 = smov 48
  %v380 = vld [vmem:[%s378] ss:$16 sm:%s379]
  %vm381 = vcmask 1045508
  %v382 = vsel %vm381, %v380, %v377
  %s383 = scalar_lea.vmem %s0, 526
  %s384 = smov 192
  %v385 = vld [vmem:[%s383] ss:$16 sm:%s384]
  %vm386 = vcmask 1047558
  %v387 = vsel %vm386, %v385, %v382
  %388 = vrot.lane.b32.xlu0 %v387, 112
  %v389 = vpop.permute.xlu0 %388
  %vm390 = vcmask 982912
  %s391 = scalar_lea.vmem %s1, 32
  %392 = vst.msk [vmem:[%s391] sm:$0xff] %vm390, %v389
  %s393 = scalar_lea.vmem %s0, 142
  %s394 = smov 3
  %v395 = vld [vmem:[%s393] ss:$16 sm:%s394]
  %s396 = scalar_lea.vmem %s0, 142
  %s397 = smov 12
  %v398 = vld [vmem:[%s396] ss:$16 sm:%s397]
  %vm399 = vcmask 1043458
  %v400 = vsel %vm399, %v398, %v395
  %s401 = scalar_lea.vmem %s0, 142
  %s402 = smov 48
  %v403 = vld [vmem:[%s401] ss:$16 sm:%s402]
  %vm404 = vcmask 1045508
  %v405 = vsel %vm404, %v403, %v400
  %s406 = scalar_lea.vmem %s0, 142
  %s407 = smov 192
  %v408 = vld [vmem:[%s406] ss:$16 sm:%s407]
  %vm409 = vcmask 1047558
  %v410 = vsel %vm409, %v408, %v405
  %411 = vrot.lane.b32.xlu0 %v410, 112
  %v412 = vpop.permute.xlu0 %411
  %vm413 = vcmask 982912
  %s414 = scalar_lea.vmem %s1, 8
  %415 = vst.msk [vmem:[%s414] sm:$0xff] %vm413, %v412
  %s416 = scalar_lea.vmem %s0, 654
  %s417 = smov 3
  %v418 = vld [vmem:[%s416] ss:$16 sm:%s417]
  %s419 = scalar_lea.vmem %s0, 654
  %s420 = smov 12
  %v421 = vld [vmem:[%s419] ss:$16 sm:%s420]
  %vm422 = vcmask 1043458
  %v423 = vsel %vm422, %v421, %v418
  %s424 = scalar_lea.vmem %s0, 654
  %s425 = smov 48
  %v426 = vld [vmem:[%s424] ss:$16 sm:%s425]
  %vm427 = vcmask 1045508
  %v428 = vsel %vm427, %v426, %v423
  %s429 = scalar_lea.vmem %s0, 654
  %s430 = smov 192
  %v431 = vld [vmem:[%s429] ss:$16 sm:%s430]
  %vm432 = vcmask 1047558
  %v433 = vsel %vm432, %v431, %v428
  %434 = vrot.lane.b32.xlu0 %v433, 112
  %v435 = vpop.permute.xlu0 %434
  %vm436 = vcmask 982912
  %s437 = scalar_lea.vmem %s1, 40
  %438 = vst.msk [vmem:[%s437] sm:$0xff] %vm436, %v435
  %s439 = scalar_lea.vmem %s0, 270
  %s440 = smov 3
  %v441 = vld [vmem:[%s439] ss:$16 sm:%s440]
  %s442 = scalar_lea.vmem %s0, 270
  %s443 = smov 12
  %v444 = vld [vmem:[%s442] ss:$16 sm:%s443]
  %vm445 = vcmask 1043458
  %v446 = vsel %vm445, %v444, %v441
  %s447 = scalar_lea.vmem %s0, 270
  %s448 = smov 48
  %v449 = vld [vmem:[%s447] ss:$16 sm:%s448]
  %vm450 = vcmask 1045508
  %v451 = vsel %vm450, %v449, %v446
  %s452 = scalar_lea.vmem %s0, 270
  %s453 = smov 192
  %v454 = vld [vmem:[%s452] ss:$16 sm:%s453]
  %vm455 = vcmask 1047558
  %v456 = vsel %vm455, %v454, %v451
  %457 = vrot.lane.b32.xlu0 %v456, 112
  %v458 = vpop.permute.xlu0 %457
  %vm459 = vcmask 982912
  %s460 = scalar_lea.vmem %s1, 16
  %461 = vst.msk [vmem:[%s460] sm:$0xff] %vm459, %v458
  %s462 = scalar_lea.vmem %s0, 782
  %s463 = smov 3
  %v464 = vld [vmem:[%s462] ss:$16 sm:%s463]
  %s465 = scalar_lea.vmem %s0, 782
  %s466 = smov 12
  %v467 = vld [vmem:[%s465] ss:$16 sm:%s466]
  %vm468 = vcmask 1043458
  %v469 = vsel %vm468, %v467, %v464
  %s470 = scalar_lea.vmem %s0, 782
  %s471 = smov 48
  %v472 = vld [vmem:[%s470] ss:$16 sm:%s471]
  %vm473 = vcmask 1045508
  %v474 = vsel %vm473, %v472, %v469
  %s475 = scalar_lea.vmem %s0, 782
  %s476 = smov 192
  %v477 = vld [vmem:[%s475] ss:$16 sm:%s476]
  %vm478 = vcmask 1047558
  %v479 = vsel %vm478, %v477, %v474
  %480 = vrot.lane.b32.xlu0 %v479, 112
  %v481 = vpop.permute.xlu0 %480
  %vm482 = vcmask 982912
  %s483 = scalar_lea.vmem %s1, 48
  %484 = vst.msk [vmem:[%s483] sm:$0xff] %vm482, %v481
  %s485 = scalar_lea.vmem %s0, 398
  %s486 = smov 3
  %v487 = vld [vmem:[%s485] ss:$16 sm:%s486]
  %s488 = scalar_lea.vmem %s0, 398
  %s489 = smov 12
  %v490 = vld [vmem:[%s488] ss:$16 sm:%s489]
  %vm491 = vcmask 1043458
  %v492 = vsel %vm491, %v490, %v487
  %s493 = scalar_lea.vmem %s0, 398
  %s494 = smov 48
  %v495 = vld [vmem:[%s493] ss:$16 sm:%s494]
  %vm496 = vcmask 1045508
  %v497 = vsel %vm496, %v495, %v492
  %s498 = scalar_lea.vmem %s0, 398
  %s499 = smov 192
  %v500 = vld [vmem:[%s498] ss:$16 sm:%s499]
  %vm501 = vcmask 1047558
  %v502 = vsel %vm501, %v500, %v497
  %503 = vrot.lane.b32.xlu0 %v502, 112
  %v504 = vpop.permute.xlu0 %503
  %vm505 = vcmask 982912
  %s506 = scalar_lea.vmem %s1, 24
  %507 = vst.msk [vmem:[%s506] sm:$0xff] %vm505, %v504
  %s508 = scalar_lea.vmem %s0, 910
  %s509 = smov 3
  %v510 = vld [vmem:[%s508] ss:$16 sm:%s509]
  %s511 = scalar_lea.vmem %s0, 910
  %s512 = smov 12
  %v513 = vld [vmem:[%s511] ss:$16 sm:%s512]
  %vm514 = vcmask 1043458
  %v515 = vsel %vm514, %v513, %v510
  %s516 = scalar_lea.vmem %s0, 910
  %s517 = smov 48
  %v518 = vld [vmem:[%s516] ss:$16 sm:%s517]
  %vm519 = vcmask 1045508
  %v520 = vsel %vm519, %v518, %v515
  %s521 = scalar_lea.vmem %s0, 910
  %s522 = smov 192
  %v523 = vld [vmem:[%s521] ss:$16 sm:%s522]
  %vm524 = vcmask 1047558
  %v525 = vsel %vm524, %v523, %v520
  %526 = vrot.lane.b32.xlu0 %v525, 112
  %v527 = vpop.permute.xlu0 %526
  %vm528 = vcmask 982912
  %s529 = scalar_lea.vmem %s1, 56
  %530 = vst.msk [vmem:[%s529] sm:$0xff] %vm528, %v527
  %s531 = scalar_lea.vmem %s0, 13
  %s532 = smov 3
  %v533 = vld [vmem:[%s531] ss:$16 sm:%s532]
  %s534 = scalar_lea.vmem %s0, 13
  %s535 = smov 12
  %v536 = vld [vmem:[%s534] ss:$16 sm:%s535]
  %vm537 = vcmask 1043458
  %v538 = vsel %vm537, %v536, %v533
  %s539 = scalar_lea.vmem %s0, 13
  %s540 = smov 48
  %v541 = vld [vmem:[%s539] ss:$16 sm:%s540]
  %vm542 = vcmask 1045508
  %v543 = vsel %vm542, %v541, %v538
  %s544 = scalar_lea.vmem %s0, 13
  %s545 = smov 192
  %v546 = vld [vmem:[%s544] ss:$16 sm:%s545]
  %vm547 = vcmask 1047558
  %v548 = vsel %vm547, %v546, %v543
  %549 = vrot.lane.b32.xlu0 %v548, 104
  %v550 = vpop.permute.xlu0 %549
  %vm551 = vcmask 917312
  %552 = vst.msk [vmem:[%s1] sm:$0xff] %vm551, %v550
  %s553 = scalar_lea.vmem %s0, 525
  %s554 = smov 3
  %v555 = vld [vmem:[%s553] ss:$16 sm:%s554]
  %s556 = scalar_lea.vmem %s0, 525
  %s557 = smov 12
  %v558 = vld [vmem:[%s556] ss:$16 sm:%s557]
  %vm559 = vcmask 1043458
  %v560 = vsel %vm559, %v558, %v555
  %s561 = scalar_lea.vmem %s0, 525
  %s562 = smov 48
  %v563 = vld [vmem:[%s561] ss:$16 sm:%s562]
  %vm564 = vcmask 1045508
  %v565 = vsel %vm564, %v563, %v560
  %s566 = scalar_lea.vmem %s0, 525
  %s567 = smov 192
  %v568 = vld [vmem:[%s566] ss:$16 sm:%s567]
  %vm569 = vcmask 1047558
  %v570 = vsel %vm569, %v568, %v565
  %571 = vrot.lane.b32.xlu0 %v570, 104
  %v572 = vpop.permute.xlu0 %571
  %vm573 = vcmask 917312
  %s574 = scalar_lea.vmem %s1, 32
  %575 = vst.msk [vmem:[%s574] sm:$0xff] %vm573, %v572
  %s576 = scalar_lea.vmem %s0, 141
  %s577 = smov 3
  %v578 = vld [vmem:[%s576] ss:$16 sm:%s577]
  %s579 = scalar_lea.vmem %s0, 141
  %s580 = smov 12
  %v581 = vld [vmem:[%s579] ss:$16 sm:%s580]
  %vm582 = vcmask 1043458
  %v583 = vsel %vm582, %v581, %v578
  %s584 = scalar_lea.vmem %s0, 141
  %s585 = smov 48
  %v586 = vld [vmem:[%s584] ss:$16 sm:%s585]
  %vm587 = vcmask 1045508
  %v588 = vsel %vm587, %v586, %v583
  %s589 = scalar_lea.vmem %s0, 141
  %s590 = smov 192
  %v591 = vld [vmem:[%s589] ss:$16 sm:%s590]
  %vm592 = vcmask 1047558
  %v593 = vsel %vm592, %v591, %v588
  %594 = vrot.lane.b32.xlu0 %v593, 104
  %v595 = vpop.permute.xlu0 %594
  %vm596 = vcmask 917312
  %s597 = scalar_lea.vmem %s1, 8
  %598 = vst.msk [vmem:[%s597] sm:$0xff] %vm596, %v595
  %s599 = scalar_lea.vmem %s0, 653
  %s600 = smov 3
  %v601 = vld [vmem:[%s599] ss:$16 sm:%s600]
  %s602 = scalar_lea.vmem %s0, 653
  %s603 = smov 12
  %v604 = vld [vmem:[%s602] ss:$16 sm:%s603]
  %vm605 = vcmask 1043458
  %v606 = vsel %vm605, %v604, %v601
  %s607 = scalar_lea.vmem %s0, 653
  %s608 = smov 48
  %v609 = vld [vmem:[%s607] ss:$16 sm:%s608]
  %vm610 = vcmask 1045508
  %v611 = vsel %vm610, %v609, %v606
  %s612 = scalar_lea.vmem %s0, 653
  %s613 = smov 192
  %v614 = vld [vmem:[%s612] ss:$16 sm:%s613]
  %vm615 = vcmask 1047558
  %v616 = vsel %vm615, %v614, %v611
  %617 = vrot.lane.b32.xlu0 %v616, 104
  %v618 = vpop.permute.xlu0 %617
  %vm619 = vcmask 917312
  %s620 = scalar_lea.vmem %s1, 40
  %621 = vst.msk [vmem:[%s620] sm:$0xff] %vm619, %v618
  %s622 = scalar_lea.vmem %s0, 269
  %s623 = smov 3
  %v624 = vld [vmem:[%s622] ss:$16 sm:%s623]
  %s625 = scalar_lea.vmem %s0, 269
  %s626 = smov 12
  %v627 = vld [vmem:[%s625] ss:$16 sm:%s626]
  %vm628 = vcmask 1043458
  %v629 = vsel %vm628, %v627, %v624
  %s630 = scalar_lea.vmem %s0, 269
  %s631 = smov 48
  %v632 = vld [vmem:[%s630] ss:$16 sm:%s631]
  %vm633 = vcmask 1045508
  %v634 = vsel %vm633, %v632, %v629
  %s635 = scalar_lea.vmem %s0, 269
  %s636 = smov 192
  %v637 = vld [vmem:[%s635] ss:$16 sm:%s636]
  %vm638 = vcmask 1047558
  %v639 = vsel %vm638, %v637, %v634
  %640 = vrot.lane.b32.xlu0 %v639, 104
  %v641 = vpop.permute.xlu0 %640
  %vm642 = vcmask 917312
  %s643 = scalar_lea.vmem %s1, 16
  %644 = vst.msk [vmem:[%s643] sm:$0xff] %vm642, %v641
  %s645 = scalar_lea.vmem %s0, 781
  %s646 = smov 3
  %v647 = vld [vmem:[%s645] ss:$16 sm:%s646]
  %s648 = scalar_lea.vmem %s0, 781
  %s649 = smov 12
  %v650 = vld [vmem:[%s648] ss:$16 sm:%s649]
  %vm651 = vcmask 1043458
  %v652 = vsel %vm651, %v650, %v647
  %s653 = scalar_lea.vmem %s0, 781
  %s654 = smov 48
  %v655 = vld [vmem:[%s653] ss:$16 sm:%s654]
  %vm656 = vcmask 1045508
  %v657 = vsel %vm656, %v655, %v652
  %s658 = scalar_lea.vmem %s0, 781
  %s659 = smov 192
  %v660 = vld [vmem:[%s658] ss:$16 sm:%s659]
  %vm661 = vcmask 1047558
  %v662 = vsel %vm661, %v660, %v657
  %663 = vrot.lane.b32.xlu0 %v662, 104
  %v664 = vpop.permute.xlu0 %663
  %vm665 = vcmask 917312
  %s666 = scalar_lea.vmem %s1, 48
  %667 = vst.msk [vmem:[%s666] sm:$0xff] %vm665, %v664
  %s668 = scalar_lea.vmem %s0, 397
  %s669 = smov 3
  %v670 = vld [vmem:[%s668] ss:$16 sm:%s669]
  %s671 = scalar_lea.vmem %s0, 397
  %s672 = smov 12
  %v673 = vld [vmem:[%s671] ss:$16 sm:%s672]
  %vm674 = vcmask 1043458
  %v675 = vsel %vm674, %v673, %v670
  %s676 = scalar_lea.vmem %s0, 397
  %s677 = smov 48
  %v678 = vld [vmem:[%s676] ss:$16 sm:%s677]
  %vm679 = vcmask 1045508
  %v680 = vsel %vm679, %v678, %v675
  %s681 = scalar_lea.vmem %s0, 397
  %s682 = smov 192
  %v683 = vld [vmem:[%s681] ss:$16 sm:%s682]
  %vm684 = vcmask 1047558
  %v685 = vsel %vm684, %v683, %v680
  %686 = vrot.lane.b32.xlu0 %v685, 104
  %v687 = vpop.permute.xlu0 %686
  %vm688 = vcmask 917312
  %s689 = scalar_lea.vmem %s1, 24
  %690 = vst.msk [vmem:[%s689] sm:$0xff] %vm688, %v687
  %s691 = scalar_lea.vmem %s0, 909
  %s692 = smov 3
  %v693 = vld [vmem:[%s691] ss:$16 sm:%s692]
  %s694 = scalar_lea.vmem %s0, 909
  %s695 = smov 12
  %v696 = vld [vmem:[%s694] ss:$16 sm:%s695]
  %vm697 = vcmask 1043458
  %v698 = vsel %vm697, %v696, %v693
  %s699 = scalar_lea.vmem %s0, 909
  %s700 = smov 48
  %v701 = vld [vmem:[%s699] ss:$16 sm:%s700]
  %vm702 = vcmask 1045508
  %v703 = vsel %vm702, %v701, %v698
  %s704 = scalar_lea.vmem %s0, 909
  %s705 = smov 192
  %v706 = vld [vmem:[%s704] ss:$16 sm:%s705]
  %vm707 = vcmask 1047558
  %v708 = vsel %vm707, %v706, %v703
  %709 = vrot.lane.b32.xlu0 %v708, 104
  %v710 = vpop.permute.xlu0 %709
  %vm711 = vcmask 917312
  %s712 = scalar_lea.vmem %s1, 56
  %713 = vst.msk [vmem:[%s712] sm:$0xff] %vm711, %v710
  %s714 = scalar_lea.vmem %s0, 12
  %s715 = smov 3
  %v716 = vld [vmem:[%s714] ss:$16 sm:%s715]
  %s717 = scalar_lea.vmem %s0, 12
  %s718 = smov 12
  %v719 = vld [vmem:[%s717] ss:$16 sm:%s718]
  %vm720 = vcmask 1043458
  %v721 = vsel %vm720, %v719, %v716
  %s722 = scalar_lea.vmem %s0, 12
  %s723 = smov 48
  %v724 = vld [vmem:[%s722] ss:$16 sm:%s723]
  %vm725 = vcmask 1045508
  %v726 = vsel %vm725, %v724, %v721
  %s727 = scalar_lea.vmem %s0, 12
  %s728 = smov 192
  %v729 = vld [vmem:[%s727] ss:$16 sm:%s728]
  %vm730 = vcmask 1047558
  %v731 = vsel %vm730, %v729, %v726
  %732 = vrot.lane.b32.xlu0 %v731, 96
  %v733 = vpop.permute.xlu0 %732
  %vm734 = vcmask 851712
  %735 = vst.msk [vmem:[%s1] sm:$0xff] %vm734, %v733
  %s736 = scalar_lea.vmem %s0, 524
  %s737 = smov 3
  %v738 = vld [vmem:[%s736] ss:$16 sm:%s737]
  %s739 = scalar_lea.vmem %s0, 524
  %s740 = smov 12
  %v741 = vld [vmem:[%s739] ss:$16 sm:%s740]
  %vm742 = vcmask 1043458
  %v743 = vsel %vm742, %v741, %v738
  %s744 = scalar_lea.vmem %s0, 524
  %s745 = smov 48
  %v746 = vld [vmem:[%s744] ss:$16 sm:%s745]
  %vm747 = vcmask 1045508
  %v748 = vsel %vm747, %v746, %v743
  %s749 = scalar_lea.vmem %s0, 524
  %s750 = smov 192
  %v751 = vld [vmem:[%s749] ss:$16 sm:%s750]
  %vm752 = vcmask 1047558
  %v753 = vsel %vm752, %v751, %v748
  %754 = vrot.lane.b32.xlu0 %v753, 96
  %v755 = vpop.permute.xlu0 %754
  %vm756 = vcmask 851712
  %s757 = scalar_lea.vmem %s1, 32
  %758 = vst.msk [vmem:[%s757] sm:$0xff] %vm756, %v755
  %s759 = scalar_lea.vmem %s0, 140
  %s760 = smov 3
  %v761 = vld [vmem:[%s759] ss:$16 sm:%s760]
  %s762 = scalar_lea.vmem %s0, 140
  %s763 = smov 12
  %v764 = vld [vmem:[%s762] ss:$16 sm:%s763]
  %vm765 = vcmask 1043458
  %v766 = vsel %vm765, %v764, %v761
  %s767 = scalar_lea.vmem %s0, 140
  %s768 = smov 48
  %v769 = vld [vmem:[%s767] ss:$16 sm:%s768]
  %vm770 = vcmask 1045508
  %v771 = vsel %vm770, %v769, %v766
  %s772 = scalar_lea.vmem %s0, 140
  %s773 = smov 192
  %v774 = vld [vmem:[%s772] ss:$16 sm:%s773]
  %vm775 = vcmask 1047558
  %v776 = vsel %vm775, %v774, %v771
  %777 = vrot.lane.b32.xlu0 %v776, 96
  %v778 = vpop.permute.xlu0 %777
  %vm779 = vcmask 851712
  %s780 = scalar_lea.vmem %s1, 8
  %781 = vst.msk [vmem:[%s780] sm:$0xff] %vm779, %v778
  %s782 = scalar_lea.vmem %s0, 652
  %s783 = smov 3
  %v784 = vld [vmem:[%s782] ss:$16 sm:%s783]
  %s785 = scalar_lea.vmem %s0, 652
  %s786 = smov 12
  %v787 = vld [vmem:[%s785] ss:$16 sm:%s786]
  %vm788 = vcmask 1043458
  %v789 = vsel %vm788, %v787, %v784
  %s790 = scalar_lea.vmem %s0, 652
  %s791 = smov 48
  %v792 = vld [vmem:[%s790] ss:$16 sm:%s791]
  %vm793 = vcmask 1045508
  %v794 = vsel %vm793, %v792, %v789
  %s795 = scalar_lea.vmem %s0, 652
  %s796 = smov 192
  %v797 = vld [vmem:[%s795] ss:$16 sm:%s796]
  %vm798 = vcmask 1047558
  %v799 = vsel %vm798, %v797, %v794
  %800 = vrot.lane.b32.xlu0 %v799, 96
  %v801 = vpop.permute.xlu0 %800
  %vm802 = vcmask 851712
  %s803 = scalar_lea.vmem %s1, 40
  %804 = vst.msk [vmem:[%s803] sm:$0xff] %vm802, %v801
  %s805 = scalar_lea.vmem %s0, 268
  %s806 = smov 3
  %v807 = vld [vmem:[%s805] ss:$16 sm:%s806]
  %s808 = scalar_lea.vmem %s0, 268
  %s809 = smov 12
  %v810 = vld [vmem:[%s808] ss:$16 sm:%s809]
  %vm811 = vcmask 1043458
  %v812 = vsel %vm811, %v810, %v807
  %s813 = scalar_lea.vmem %s0, 268
  %s814 = smov 48
  %v815 = vld [vmem:[%s813] ss:$16 sm:%s814]
  %vm816 = vcmask 1045508
  %v817 = vsel %vm816, %v815, %v812
  %s818 = scalar_lea.vmem %s0, 268
  %s819 = smov 192
  %v820 = vld [vmem:[%s818] ss:$16 sm:%s819]
  %vm821 = vcmask 1047558
  %v822 = vsel %vm821, %v820, %v817
  %823 = vrot.lane.b32.xlu0 %v822, 96
  %v824 = vpop.permute.xlu0 %823
  %vm825 = vcmask 851712
  %s826 = scalar_lea.vmem %s1, 16
  %827 = vst.msk [vmem:[%s826] sm:$0xff] %vm825, %v824
  %s828 = scalar_lea.vmem %s0, 780
  %s829 = smov 3
  %v830 = vld [vmem:[%s828] ss:$16 sm:%s829]
  %s831 = scalar_lea.vmem %s0, 780
  %s832 = smov 12
  %v833 = vld [vmem:[%s831] ss:$16 sm:%s832]
  %vm834 = vcmask 1043458
  %v835 = vsel %vm834, %v833, %v830
  %s836 = scalar_lea.vmem %s0, 780
  %s837 = smov 48
  %v838 = vld [vmem:[%s836] ss:$16 sm:%s837]
  %vm839 = vcmask 1045508
  %v840 = vsel %vm839, %v838, %v835
  %s841 = scalar_lea.vmem %s0, 780
  %s842 = smov 192
  %v843 = vld [vmem:[%s841] ss:$16 sm:%s842]
  %vm844 = vcmask 1047558
  %v845 = vsel %vm844, %v843, %v840
  %846 = vrot.lane.b32.xlu0 %v845, 96
  %v847 = vpop.permute.xlu0 %846
  %vm848 = vcmask 851712
  %s849 = scalar_lea.vmem %s1, 48
  %850 = vst.msk [vmem:[%s849] sm:$0xff] %vm848, %v847
  %s851 = scalar_lea.vmem %s0, 396
  %s852 = smov 3
  %v853 = vld [vmem:[%s851] ss:$16 sm:%s852]
  %s854 = scalar_lea.vmem %s0, 396
  %s855 = smov 12
  %v856 = vld [vmem:[%s854] ss:$16 sm:%s855]
  %vm857 = vcmask 1043458
  %v858 = vsel %vm857, %v856, %v853
  %s859 = scalar_lea.vmem %s0, 396
  %s860 = smov 48
  %v861 = vld [vmem:[%s859] ss:$16 sm:%s860]
  %vm862 = vcmask 1045508
  %v863 = vsel %vm862, %v861, %v858
  %s864 = scalar_lea.vmem %s0, 396
  %s865 = smov 192
  %v866 = vld [vmem:[%s864] ss:$16 sm:%s865]
  %vm867 = vcmask 1047558
  %v868 = vsel %vm867, %v866, %v863
  %869 = vrot.lane.b32.xlu0 %v868, 96
  %v870 = vpop.permute.xlu0 %869
  %vm871 = vcmask 851712
  %s872 = scalar_lea.vmem %s1, 24
  %873 = vst.msk [vmem:[%s872] sm:$0xff] %vm871, %v870
  %s874 = scalar_lea.vmem %s0, 908
  %s875 = smov 3
  %v876 = vld [vmem:[%s874] ss:$16 sm:%s875]
  %s877 = scalar_lea.vmem %s0, 908
  %s878 = smov 12
  %v879 = vld [vmem:[%s877] ss:$16 sm:%s878]
  %vm880 = vcmask 1043458
  %v881 = vsel %vm880, %v879, %v876
  %s882 = scalar_lea.vmem %s0, 908
  %s883 = smov 48
  %v884 = vld [vmem:[%s882] ss:$16 sm:%s883]
  %vm885 = vcmask 1045508
  %v886 = vsel %vm885, %v884, %v881
  %s887 = scalar_lea.vmem %s0, 908
  %s888 = smov 192
  %v889 = vld [vmem:[%s887] ss:$16 sm:%s888]
  %vm890 = vcmask 1047558
  %v891 = vsel %vm890, %v889, %v886
  %892 = vrot.lane.b32.xlu0 %v891, 96
  %v893 = vpop.permute.xlu0 %892
  %vm894 = vcmask 851712
  %s895 = scalar_lea.vmem %s1, 56
  %896 = vst.msk [vmem:[%s895] sm:$0xff] %vm894, %v893
  %s897 = scalar_lea.vmem %s0, 11
  %s898 = smov 3
  %v899 = vld [vmem:[%s897] ss:$16 sm:%s898]
  %s900 = scalar_lea.vmem %s0, 11
  %s901 = smov 12
  %v902 = vld [vmem:[%s900] ss:$16 sm:%s901]
  %vm903 = vcmask 1043458
  %v904 = vsel %vm903, %v902, %v899
  %s905 = scalar_lea.vmem %s0, 11
  %s906 = smov 48
  %v907 = vld [vmem:[%s905] ss:$16 sm:%s906]
  %vm908 = vcmask 1045508
  %v909 = vsel %vm908, %v907, %v904
  %s910 = scalar_lea.vmem %s0, 11
  %s911 = smov 192
  %v912 = vld [vmem:[%s910] ss:$16 sm:%s911]
  %vm913 = vcmask 1047558
  %v914 = vsel %vm913, %v912, %v909
  %915 = vrot.lane.b32.xlu0 %v914, 88
  %v916 = vpop.permute.xlu0 %915
  %vm917 = vcmask 786112
  %918 = vst.msk [vmem:[%s1] sm:$0xff] %vm917, %v916
  %s919 = scalar_lea.vmem %s0, 523
  %s920 = smov 3
  %v921 = vld [vmem:[%s919] ss:$16 sm:%s920]
  %s922 = scalar_lea.vmem %s0, 523
  %s923 = smov 12
  %v924 = vld [vmem:[%s922] ss:$16 sm:%s923]
  %vm925 = vcmask 1043458
  %v926 = vsel %vm925, %v924, %v921
  %s927 = scalar_lea.vmem %s0, 523
  %s928 = smov 48
  %v929 = vld [vmem:[%s927] ss:$16 sm:%s928]
  %vm930 = vcmask 1045508
  %v931 = vsel %vm930, %v929, %v926
  %s932 = scalar_lea.vmem %s0, 523
  %s933 = smov 192
  %v934 = vld [vmem:[%s932] ss:$16 sm:%s933]
  %vm935 = vcmask 1047558
  %v936 = vsel %vm935, %v934, %v931
  %937 = vrot.lane.b32.xlu0 %v936, 88
  %v938 = vpop.permute.xlu0 %937
  %vm939 = vcmask 786112
  %s940 = scalar_lea.vmem %s1, 32
  %941 = vst.msk [vmem:[%s940] sm:$0xff] %vm939, %v938
  %s942 = scalar_lea.vmem %s0, 139
  %s943 = smov 3
  %v944 = vld [vmem:[%s942] ss:$16 sm:%s943]
  %s945 = scalar_lea.vmem %s0, 139
  %s946 = smov 12
  %v947 = vld [vmem:[%s945] ss:$16 sm:%s946]
  %vm948 = vcmask 1043458
  %v949 = vsel %vm948, %v947, %v944
  %s950 = scalar_lea.vmem %s0, 139
  %s951 = smov 48
  %v952 = vld [vmem:[%s950] ss:$16 sm:%s951]
  %vm953 = vcmask 1045508
  %v954 = vsel %vm953, %v952, %v949
  %s955 = scalar_lea.vmem %s0, 139
  %s956 = smov 192
  %v957 = vld [vmem:[%s955] ss:$16 sm:%s956]
  %vm958 = vcmask 1047558
  %v959 = vsel %vm958, %v957, %v954
  %960 = vrot.lane.b32.xlu0 %v959, 88
  %v961 = vpop.permute.xlu0 %960
  %vm962 = vcmask 786112
  %s963 = scalar_lea.vmem %s1, 8
  %964 = vst.msk [vmem:[%s963] sm:$0xff] %vm962, %v961
  %s965 = scalar_lea.vmem %s0, 651
  %s966 = smov 3
  %v967 = vld [vmem:[%s965] ss:$16 sm:%s966]
  %s968 = scalar_lea.vmem %s0, 651
  %s969 = smov 12
  %v970 = vld [vmem:[%s968] ss:$16 sm:%s969]
  %vm971 = vcmask 1043458
  %v972 = vsel %vm971, %v970, %v967
  %s973 = scalar_lea.vmem %s0, 651
  %s974 = smov 48
  %v975 = vld [vmem:[%s973] ss:$16 sm:%s974]
  %vm976 = vcmask 1045508
  %v977 = vsel %vm976, %v975, %v972
  %s978 = scalar_lea.vmem %s0, 651
  %s979 = smov 192
  %v980 = vld [vmem:[%s978] ss:$16 sm:%s979]
  %vm981 = vcmask 1047558
  %v982 = vsel %vm981, %v980, %v977
  %983 = vrot.lane.b32.xlu0 %v982, 88
  %v984 = vpop.permute.xlu0 %983
  %vm985 = vcmask 786112
  %s986 = scalar_lea.vmem %s1, 40
  %987 = vst.msk [vmem:[%s986] sm:$0xff] %vm985, %v984
  %s988 = scalar_lea.vmem %s0, 267
  %s989 = smov 3
  %v990 = vld [vmem:[%s988] ss:$16 sm:%s989]
  %s991 = scalar_lea.vmem %s0, 267
  %s992 = smov 12
  %v993 = vld [vmem:[%s991] ss:$16 sm:%s992]
  %vm994 = vcmask 1043458
  %v995 = vsel %vm994, %v993, %v990
  %s996 = scalar_lea.vmem %s0, 267
  %s997 = smov 48
  %v998 = vld [vmem:[%s996] ss:$16 sm:%s997]
  %vm999 = vcmask 1045508
  %v1000 = vsel %vm999, %v998, %v995
  %s1001 = scalar_lea.vmem %s0, 267
  %s1002 = smov 192
  %v1003 = vld [vmem:[%s1001] ss:$16 sm:%s1002]
  %vm1004 = vcmask 1047558
  %v1005 = vsel %vm1004, %v1003, %v1000
  %1006 = vrot.lane.b32.xlu0 %v1005, 88
  %v1007 = vpop.permute.xlu0 %1006
  %vm1008 = vcmask 786112
  %s1009 = scalar_lea.vmem %s1, 16
  %1010 = vst.msk [vmem:[%s1009] sm:$0xff] %vm1008, %v1007
  %s1011 = scalar_lea.vmem %s0, 779
  %s1012 = smov 3
  %v1013 = vld [vmem:[%s1011] ss:$16 sm:%s1012]
  %s1014 = scalar_lea.vmem %s0, 779
  %s1015 = smov 12
  %v1016 = vld [vmem:[%s1014] ss:$16 sm:%s1015]
  %vm1017 = vcmask 1043458
  %v1018 = vsel %vm1017, %v1016, %v1013
  %s1019 = scalar_lea.vmem %s0, 779
  %s1020 = smov 48
  %v1021 = vld [vmem:[%s1019] ss:$16 sm:%s1020]
  %vm1022 = vcmask 1045508
  %v1023 = vsel %vm1022, %v1021, %v1018
  %s1024 = scalar_lea.vmem %s0, 779
  %s1025 = smov 192
  %v1026 = vld [vmem:[%s1024] ss:$16 sm:%s1025]
  %vm1027 = vcmask 1047558
  %v1028 = vsel %vm1027, %v1026, %v1023
  %1029 = vrot.lane.b32.xlu0 %v1028, 88
  %v1030 = vpop.permute.xlu0 %1029
  %vm1031 = vcmask 786112
  %s1032 = scalar_lea.vmem %s1, 48
  %1033 = vst.msk [vmem:[%s1032] sm:$0xff] %vm1031, %v1030
  %s1034 = scalar_lea.vmem %s0, 395
  %s1035 = smov 3
  %v1036 = vld [vmem:[%s1034] ss:$16 sm:%s1035]
  %s1037 = scalar_lea.vmem %s0, 395
  %s1038 = smov 12
  %v1039 = vld [vmem:[%s1037] ss:$16 sm:%s1038]
  %vm1040 = vcmask 1043458
  %v1041 = vsel %vm1040, %v1039, %v1036
  %s1042 = scalar_lea.vmem %s0, 395
  %s1043 = smov 48
  %v1044 = vld [vmem:[%s1042] ss:$16 sm:%s1043]
  %vm1045 = vcmask 1045508
  %v1046 = vsel %vm1045, %v1044, %v1041
  %s1047 = scalar_lea.vmem %s0, 395
  %s1048 = smov 192
  %v1049 = vld [vmem:[%s1047] ss:$16 sm:%s1048]
  %vm1050 = vcmask 1047558
  %v1051 = vsel %vm1050, %v1049, %v1046
  %1052 = vrot.lane.b32.xlu0 %v1051, 88
  %v1053 = vpop.permute.xlu0 %1052
  %vm1054 = vcmask 786112
  %s1055 = scalar_lea.vmem %s1, 24
  %1056 = vst.msk [vmem:[%s1055] sm:$0xff] %vm1054, %v1053
  %s1057 = scalar_lea.vmem %s0, 907
  %s1058 = smov 3
  %v1059 = vld [vmem:[%s1057] ss:$16 sm:%s1058]
  %s1060 = scalar_lea.vmem %s0, 907
  %s1061 = smov 12
  %v1062 = vld [vmem:[%s1060] ss:$16 sm:%s1061]
  %vm1063 = vcmask 1043458
  %v1064 = vsel %vm1063, %v1062, %v1059
  %s1065 = scalar_lea.vmem %s0, 907
  %s1066 = smov 48
  %v1067 = vld [vmem:[%s1065] ss:$16 sm:%s1066]
  %vm1068 = vcmask 1045508
  %v1069 = vsel %vm1068, %v1067, %v1064
  %s1070 = scalar_lea.vmem %s0, 907
  %s1071 = smov 192
  %v1072 = vld [vmem:[%s1070] ss:$16 sm:%s1071]
  %vm1073 = vcmask 1047558
  %v1074 = vsel %vm1073, %v1072, %v1069
  %1075 = vrot.lane.b32.xlu0 %v1074, 88
  %v1076 = vpop.permute.xlu0 %1075
  %vm1077 = vcmask 786112
  %s1078 = scalar_lea.vmem %s1, 56
  %1079 = vst.msk [vmem:[%s1078] sm:$0xff] %vm1077, %v1076
  %s1080 = scalar_lea.vmem %s0, 10
  %s1081 = smov 3
  %v1082 = vld [vmem:[%s1080] ss:$16 sm:%s1081]
  %s1083 = scalar_lea.vmem %s0, 10
  %s1084 = smov 12
  %v1085 = vld [vmem:[%s1083] ss:$16 sm:%s1084]
  %vm1086 = vcmask 1043458
  %v1087 = vsel %vm1086, %v1085, %v1082
  %s1088 = scalar_lea.vmem %s0, 10
  %s1089 = smov 48
  %v1090 = vld [vmem:[%s1088] ss:$16 sm:%s1089]
  %vm1091 = vcmask 1045508
  %v1092 = vsel %vm1091, %v1090, %v1087
  %s1093 = scalar_lea.vmem %s0, 10
  %s1094 = smov 192
  %v1095 = vld [vmem:[%s1093] ss:$16 sm:%s1094]
  %vm1096 = vcmask 1047558
  %v1097 = vsel %vm1096, %v1095, %v1092
  %1098 = vrot.lane.b32.xlu0 %v1097, 80
  %v1099 = vpop.permute.xlu0 %1098
  %vm1100 = vcmask 720512
  %1101 = vst.msk [vmem:[%s1] sm:$0xff] %vm1100, %v1099
  %s1102 = scalar_lea.vmem %s0, 522
  %s1103 = smov 3
  %v1104 = vld [vmem:[%s1102] ss:$16 sm:%s1103]
  %s1105 = scalar_lea.vmem %s0, 522
  %s1106 = smov 12
  %v1107 = vld [vmem:[%s1105] ss:$16 sm:%s1106]
  %vm1108 = vcmask 1043458
  %v1109 = vsel %vm1108, %v1107, %v1104
  %s1110 = scalar_lea.vmem %s0, 522
  %s1111 = smov 48
  %v1112 = vld [vmem:[%s1110] ss:$16 sm:%s1111]
  %vm1113 = vcmask 1045508
  %v1114 = vsel %vm1113, %v1112, %v1109
  %s1115 = scalar_lea.vmem %s0, 522
  %s1116 = smov 192
  %v1117 = vld [vmem:[%s1115] ss:$16 sm:%s1116]
  %vm1118 = vcmask 1047558
  %v1119 = vsel %vm1118, %v1117, %v1114
  %1120 = vrot.lane.b32.xlu0 %v1119, 80
  %v1121 = vpop.permute.xlu0 %1120
  %vm1122 = vcmask 720512
  %s1123 = scalar_lea.vmem %s1, 32
  %1124 = vst.msk [vmem:[%s1123] sm:$0xff] %vm1122, %v1121
  %s1125 = scalar_lea.vmem %s0, 138
  %s1126 = smov 3
  %v1127 = vld [vmem:[%s1125] ss:$16 sm:%s1126]
  %s1128 = scalar_lea.vmem %s0, 138
  %s1129 = smov 12
  %v1130 = vld [vmem:[%s1128] ss:$16 sm:%s1129]
  %vm1131 = vcmask 1043458
  %v1132 = vsel %vm1131, %v1130, %v1127
  %s1133 = scalar_lea.vmem %s0, 138
  %s1134 = smov 48
  %v1135 = vld [vmem:[%s1133] ss:$16 sm:%s1134]
  %vm1136 = vcmask 1045508
  %v1137 = vsel %vm1136, %v1135, %v1132
  %s1138 = scalar_lea.vmem %s0, 138
  %s1139 = smov 192
  %v1140 = vld [vmem:[%s1138] ss:$16 sm:%s1139]
  %vm1141 = vcmask 1047558
  %v1142 = vsel %vm1141, %v1140, %v1137
  %1143 = vrot.lane.b32.xlu0 %v1142, 80
  %v1144 = vpop.permute.xlu0 %1143
  %vm1145 = vcmask 720512
  %s1146 = scalar_lea.vmem %s1, 8
  %1147 = vst.msk [vmem:[%s1146] sm:$0xff] %vm1145, %v1144
  %s1148 = scalar_lea.vmem %s0, 650
  %s1149 = smov 3
  %v1150 = vld [vmem:[%s1148] ss:$16 sm:%s1149]
  %s1151 = scalar_lea.vmem %s0, 650
  %s1152 = smov 12
  %v1153 = vld [vmem:[%s1151] ss:$16 sm:%s1152]
  %vm1154 = vcmask 1043458
  %v1155 = vsel %vm1154, %v1153, %v1150
  %s1156 = scalar_lea.vmem %s0, 650
  %s1157 = smov 48
  %v1158 = vld [vmem:[%s1156] ss:$16 sm:%s1157]
  %vm1159 = vcmask 1045508
  %v1160 = vsel %vm1159, %v1158, %v1155
  %s1161 = scalar_lea.vmem %s0, 650
  %s1162 = smov 192
  %v1163 = vld [vmem:[%s1161] ss:$16 sm:%s1162]
  %vm1164 = vcmask 1047558
  %v1165 = vsel %vm1164, %v1163, %v1160
  %1166 = vrot.lane.b32.xlu0 %v1165, 80
  %v1167 = vpop.permute.xlu0 %1166
  %vm1168 = vcmask 720512
  %s1169 = scalar_lea.vmem %s1, 40
  %1170 = vst.msk [vmem:[%s1169] sm:$0xff] %vm1168, %v1167
  %s1171 = scalar_lea.vmem %s0, 266
  %s1172 = smov 3
  %v1173 = vld [vmem:[%s1171] ss:$16 sm:%s1172]
  %s1174 = scalar_lea.vmem %s0, 266
  %s1175 = smov 12
  %v1176 = vld [vmem:[%s1174] ss:$16 sm:%s1175]
  %vm1177 = vcmask 1043458
  %v1178 = vsel %vm1177, %v1176, %v1173
  %s1179 = scalar_lea.vmem %s0, 266
  %s1180 = smov 48
  %v1181 = vld [vmem:[%s1179] ss:$16 sm:%s1180]
  %vm1182 = vcmask 1045508
  %v1183 = vsel %vm1182, %v1181, %v1178
  %s1184 = scalar_lea.vmem %s0, 266
  %s1185 = smov 192
  %v1186 = vld [vmem:[%s1184] ss:$16 sm:%s1185]
  %vm1187 = vcmask 1047558
  %v1188 = vsel %vm1187, %v1186, %v1183
  %1189 = vrot.lane.b32.xlu0 %v1188, 80
  %v1190 = vpop.permute.xlu0 %1189
  %vm1191 = vcmask 720512
  %s1192 = scalar_lea.vmem %s1, 16
  %1193 = vst.msk [vmem:[%s1192] sm:$0xff] %vm1191, %v1190
  %s1194 = scalar_lea.vmem %s0, 778
  %s1195 = smov 3
  %v1196 = vld [vmem:[%s1194] ss:$16 sm:%s1195]
  %s1197 = scalar_lea.vmem %s0, 778
  %s1198 = smov 12
  %v1199 = vld [vmem:[%s1197] ss:$16 sm:%s1198]
  %vm1200 = vcmask 1043458
  %v1201 = vsel %vm1200, %v1199, %v1196
  %s1202 = scalar_lea.vmem %s0, 778
  %s1203 = smov 48
  %v1204 = vld [vmem:[%s1202] ss:$16 sm:%s1203]
  %vm1205 = vcmask 1045508
  %v1206 = vsel %vm1205, %v1204, %v1201
  %s1207 = scalar_lea.vmem %s0, 778
  %s1208 = smov 192
  %v1209 = vld [vmem:[%s1207] ss:$16 sm:%s1208]
  %vm1210 = vcmask 1047558
  %v1211 = vsel %vm1210, %v1209, %v1206
  %1212 = vrot.lane.b32.xlu0 %v1211, 80
  %v1213 = vpop.permute.xlu0 %1212
  %vm1214 = vcmask 720512
  %s1215 = scalar_lea.vmem %s1, 48
  %1216 = vst.msk [vmem:[%s1215] sm:$0xff] %vm1214, %v1213
  %s1217 = scalar_lea.vmem %s0, 394
  %s1218 = smov 3
  %v1219 = vld [vmem:[%s1217] ss:$16 sm:%s1218]
  %s1220 = scalar_lea.vmem %s0, 394
  %s1221 = smov 12
  %v1222 = vld [vmem:[%s1220] ss:$16 sm:%s1221]
  %vm1223 = vcmask 1043458
  %v1224 = vsel %vm1223, %v1222, %v1219
  %s1225 = scalar_lea.vmem %s0, 394
  %s1226 = smov 48
  %v1227 = vld [vmem:[%s1225] ss:$16 sm:%s1226]
  %vm1228 = vcmask 1045508
  %v1229 = vsel %vm1228, %v1227, %v1224
  %s1230 = scalar_lea.vmem %s0, 394
  %s1231 = smov 192
  %v1232 = vld [vmem:[%s1230] ss:$16 sm:%s1231]
  %vm1233 = vcmask 1047558
  %v1234 = vsel %vm1233, %v1232, %v1229
  %1235 = vrot.lane.b32.xlu0 %v1234, 80
  %v1236 = vpop.permute.xlu0 %1235
  %vm1237 = vcmask 720512
  %s1238 = scalar_lea.vmem %s1, 24
  %1239 = vst.msk [vmem:[%s1238] sm:$0xff] %vm1237, %v1236
  %s1240 = scalar_lea.vmem %s0, 906
  %s1241 = smov 3
  %v1242 = vld [vmem:[%s1240] ss:$16 sm:%s1241]
  %s1243 = scalar_lea.vmem %s0, 906
  %s1244 = smov 12
  %v1245 = vld [vmem:[%s1243] ss:$16 sm:%s1244]
  %vm1246 = vcmask 1043458
  %v1247 = vsel %vm1246, %v1245, %v1242
  %s1248 = scalar_lea.vmem %s0, 906
  %s1249 = smov 48
  %v1250 = vld [vmem:[%s1248] ss:$16 sm:%s1249]
  %vm1251 = vcmask 1045508
  %v1252 = vsel %vm1251, %v1250, %v1247
  %s1253 = scalar_lea.vmem %s0, 906
  %s1254 = smov 192
  %v1255 = vld [vmem:[%s1253] ss:$16 sm:%s1254]
  %vm1256 = vcmask 1047558
  %v1257 = vsel %vm1256, %v1255, %v1252
  %1258 = vrot.lane.b32.xlu0 %v1257, 80
  %v1259 = vpop.permute.xlu0 %1258
  %vm1260 = vcmask 720512
  %s1261 = scalar_lea.vmem %s1, 56
  %1262 = vst.msk [vmem:[%s1261] sm:$0xff] %vm1260, %v1259
  %s1263 = scalar_lea.vmem %s0, 9
  %s1264 = smov 3
  %v1265 = vld [vmem:[%s1263] ss:$16 sm:%s1264]
  %s1266 = scalar_lea.vmem %s0, 9
  %s1267 = smov 12
  %v1268 = vld [vmem:[%s1266] ss:$16 sm:%s1267]
  %vm1269 = vcmask 1043458
  %v1270 = vsel %vm1269, %v1268, %v1265
  %s1271 = scalar_lea.vmem %s0, 9
  %s1272 = smov 48
  %v1273 = vld [vmem:[%s1271] ss:$16 sm:%s1272]
  %vm1274 = vcmask 1045508
  %v1275 = vsel %vm1274, %v1273, %v1270
  %s1276 = scalar_lea.vmem %s0, 9
  %s1277 = smov 192
  %v1278 = vld [vmem:[%s1276] ss:$16 sm:%s1277]
  %vm1279 = vcmask 1047558
  %v1280 = vsel %vm1279, %v1278, %v1275
  %1281 = vrot.lane.b32.xlu0 %v1280, 72
  %v1282 = vpop.permute.xlu0 %1281
  %vm1283 = vcmask 654912
  %1284 = vst.msk [vmem:[%s1] sm:$0xff] %vm1283, %v1282
  %s1285 = scalar_lea.vmem %s0, 521
  %s1286 = smov 3
  %v1287 = vld [vmem:[%s1285] ss:$16 sm:%s1286]
  %s1288 = scalar_lea.vmem %s0, 521
  %s1289 = smov 12
  %v1290 = vld [vmem:[%s1288] ss:$16 sm:%s1289]
  %vm1291 = vcmask 1043458
  %v1292 = vsel %vm1291, %v1290, %v1287
  %s1293 = scalar_lea.vmem %s0, 521
  %s1294 = smov 48
  %v1295 = vld [vmem:[%s1293] ss:$16 sm:%s1294]
  %vm1296 = vcmask 1045508
  %v1297 = vsel %vm1296, %v1295, %v1292
  %s1298 = scalar_lea.vmem %s0, 521
  %s1299 = smov 192
  %v1300 = vld [vmem:[%s1298] ss:$16 sm:%s1299]
  %vm1301 = vcmask 1047558
  %v1302 = vsel %vm1301, %v1300, %v1297
  %1303 = vrot.lane.b32.xlu0 %v1302, 72
  %v1304 = vpop.permute.xlu0 %1303
  %vm1305 = vcmask 654912
  %s1306 = scalar_lea.vmem %s1, 32
  %1307 = vst.msk [vmem:[%s1306] sm:$0xff] %vm1305, %v1304
  %s1308 = scalar_lea.vmem %s0, 137
  %s1309 = smov 3
  %v1310 = vld [vmem:[%s1308] ss:$16 sm:%s1309]
  %s1311 = scalar_lea.vmem %s0, 137
  %s1312 = smov 12
  %v1313 = vld [vmem:[%s1311] ss:$16 sm:%s1312]
  %vm1314 = vcmask 1043458
  %v1315 = vsel %vm1314, %v1313, %v1310
  %s1316 = scalar_lea.vmem %s0, 137
  %s1317 = smov 48
  %v1318 = vld [vmem:[%s1316] ss:$16 sm:%s1317]
  %vm1319 = vcmask 1045508
  %v1320 = vsel %vm1319, %v1318, %v1315
  %s1321 = scalar_lea.vmem %s0, 137
  %s1322 = smov 192
  %v1323 = vld [vmem:[%s1321] ss:$16 sm:%s1322]
  %vm1324 = vcmask 1047558
  %v1325 = vsel %vm1324, %v1323, %v1320
  %1326 = vrot.lane.b32.xlu0 %v1325, 72
  %v1327 = vpop.permute.xlu0 %1326
  %vm1328 = vcmask 654912
  %s1329 = scalar_lea.vmem %s1, 8
  %1330 = vst.msk [vmem:[%s1329] sm:$0xff] %vm1328, %v1327
  %s1331 = scalar_lea.vmem %s0, 649
  %s1332 = smov 3
  %v1333 = vld [vmem:[%s1331] ss:$16 sm:%s1332]
  %s1334 = scalar_lea.vmem %s0, 649
  %s1335 = smov 12
  %v1336 = vld [vmem:[%s1334] ss:$16 sm:%s1335]
  %vm1337 = vcmask 1043458
  %v1338 = vsel %vm1337, %v1336, %v1333
  %s1339 = scalar_lea.vmem %s0, 649
  %s1340 = smov 48
  %v1341 = vld [vmem:[%s1339] ss:$16 sm:%s1340]
  %vm1342 = vcmask 1045508
  %v1343 = vsel %vm1342, %v1341, %v1338
  %s1344 = scalar_lea.vmem %s0, 649
  %s1345 = smov 192
  %v1346 = vld [vmem:[%s1344] ss:$16 sm:%s1345]
  %vm1347 = vcmask 1047558
  %v1348 = vsel %vm1347, %v1346, %v1343
  %1349 = vrot.lane.b32.xlu0 %v1348, 72
  %v1350 = vpop.permute.xlu0 %1349
  %vm1351 = vcmask 654912
  %s1352 = scalar_lea.vmem %s1, 40
  %1353 = vst.msk [vmem:[%s1352] sm:$0xff] %vm1351, %v1350
  %s1354 = scalar_lea.vmem %s0, 265
  %s1355 = smov 3
  %v1356 = vld [vmem:[%s1354] ss:$16 sm:%s1355]
  %s1357 = scalar_lea.vmem %s0, 265
  %s1358 = smov 12
  %v1359 = vld [vmem:[%s1357] ss:$16 sm:%s1358]
  %vm1360 = vcmask 1043458
  %v1361 = vsel %vm1360, %v1359, %v1356
  %s1362 = scalar_lea.vmem %s0, 265
  %s1363 = smov 48
  %v1364 = vld [vmem:[%s1362] ss:$16 sm:%s1363]
  %vm1365 = vcmask 1045508
  %v1366 = vsel %vm1365, %v1364, %v1361
  %s1367 = scalar_lea.vmem %s0, 265
  %s1368 = smov 192
  %v1369 = vld [vmem:[%s1367] ss:$16 sm:%s1368]
  %vm1370 = vcmask 1047558
  %v1371 = vsel %vm1370, %v1369, %v1366
  %1372 = vrot.lane.b32.xlu0 %v1371, 72
  %v1373 = vpop.permute.xlu0 %1372
  %vm1374 = vcmask 654912
  %s1375 = scalar_lea.vmem %s1, 16
  %1376 = vst.msk [vmem:[%s1375] sm:$0xff] %vm1374, %v1373
  %s1377 = scalar_lea.vmem %s0, 777
  %s1378 = smov 3
  %v1379 = vld [vmem:[%s1377] ss:$16 sm:%s1378]
  %s1380 = scalar_lea.vmem %s0, 777
  %s1381 = smov 12
  %v1382 = vld [vmem:[%s1380] ss:$16 sm:%s1381]
  %vm1383 = vcmask 1043458
  %v1384 = vsel %vm1383, %v1382, %v1379
  %s1385 = scalar_lea.vmem %s0, 777
  %s1386 = smov 48
  %v1387 = vld [vmem:[%s1385] ss:$16 sm:%s1386]
  %vm1388 = vcmask 1045508
  %v1389 = vsel %vm1388, %v1387, %v1384
  %s1390 = scalar_lea.vmem %s0, 777
  %s1391 = smov 192
  %v1392 = vld [vmem:[%s1390] ss:$16 sm:%s1391]
  %vm1393 = vcmask 1047558
  %v1394 = vsel %vm1393, %v1392, %v1389
  %1395 = vrot.lane.b32.xlu0 %v1394, 72
  %v1396 = vpop.permute.xlu0 %1395
  %vm1397 = vcmask 654912
  %s1398 = scalar_lea.vmem %s1, 48
  %1399 = vst.msk [vmem:[%s1398] sm:$0xff] %vm1397, %v1396
  %s1400 = scalar_lea.vmem %s0, 393
  %s1401 = smov 3
  %v1402 = vld [vmem:[%s1400] ss:$16 sm:%s1401]
  %s1403 = scalar_lea.vmem %s0, 393
  %s1404 = smov 12
  %v1405 = vld [vmem:[%s1403] ss:$16 sm:%s1404]
  %vm1406 = vcmask 1043458
  %v1407 = vsel %vm1406, %v1405, %v1402
  %s1408 = scalar_lea.vmem %s0, 393
  %s1409 = smov 48
  %v1410 = vld [vmem:[%s1408] ss:$16 sm:%s1409]
  %vm1411 = vcmask 1045508
  %v1412 = vsel %vm1411, %v1410, %v1407
  %s1413 = scalar_lea.vmem %s0, 393
  %s1414 = smov 192
  %v1415 = vld [vmem:[%s1413] ss:$16 sm:%s1414]
  %vm1416 = vcmask 1047558
  %v1417 = vsel %vm1416, %v1415, %v1412
  %1418 = vrot.lane.b32.xlu0 %v1417, 72
  %v1419 = vpop.permute.xlu0 %1418
  %vm1420 = vcmask 654912
  %s1421 = scalar_lea.vmem %s1, 24
  %1422 = vst.msk [vmem:[%s1421] sm:$0xff] %vm1420, %v1419
  %s1423 = scalar_lea.vmem %s0, 905
  %s1424 = smov 3
  %v1425 = vld [vmem:[%s1423] ss:$16 sm:%s1424]
  %s1426 = scalar_lea.vmem %s0, 905
  %s1427 = smov 12
  %v1428 = vld [vmem:[%s1426] ss:$16 sm:%s1427]
  %vm1429 = vcmask 1043458
  %v1430 = vsel %vm1429, %v1428, %v1425
  %s1431 = scalar_lea.vmem %s0, 905
  %s1432 = smov 48
  %v1433 = vld [vmem:[%s1431] ss:$16 sm:%s1432]
  %vm1434 = vcmask 1045508
  %v1435 = vsel %vm1434, %v1433, %v1430
  %s1436 = scalar_lea.vmem %s0, 905
  %s1437 = smov 192
  %v1438 = vld [vmem:[%s1436] ss:$16 sm:%s1437]
  %vm1439 = vcmask 1047558
  %v1440 = vsel %vm1439, %v1438, %v1435
  %1441 = vrot.lane.b32.xlu0 %v1440, 72
  %v1442 = vpop.permute.xlu0 %1441
  %vm1443 = vcmask 654912
  %s1444 = scalar_lea.vmem %s1, 56
  %1445 = vst.msk [vmem:[%s1444] sm:$0xff] %vm1443, %v1442
  %s1446 = scalar_lea.vmem %s0, 8
  %s1447 = smov 3
  %v1448 = vld [vmem:[%s1446] ss:$16 sm:%s1447]
  %s1449 = scalar_lea.vmem %s0, 8
  %s1450 = smov 12
  %v1451 = vld [vmem:[%s1449] ss:$16 sm:%s1450]
  %vm1452 = vcmask 1043458
  %v1453 = vsel %vm1452, %v1451, %v1448
  %s1454 = scalar_lea.vmem %s0, 8
  %s1455 = smov 48
  %v1456 = vld [vmem:[%s1454] ss:$16 sm:%s1455]
  %vm1457 = vcmask 1045508
  %v1458 = vsel %vm1457, %v1456, %v1453
  %s1459 = scalar_lea.vmem %s0, 8
  %s1460 = smov 192
  %v1461 = vld [vmem:[%s1459] ss:$16 sm:%s1460]
  %vm1462 = vcmask 1047558
  %v1463 = vsel %vm1462, %v1461, %v1458
  %1464 = vrot.lane.b32.xlu0 %v1463, 64
  %v1465 = vpop.permute.xlu0 %1464
  %vm1466 = vcmask 589312
  %1467 = vst.msk [vmem:[%s1] sm:$0xff] %vm1466, %v1465
  %s1468 = scalar_lea.vmem %s0, 520
  %s1469 = smov 3
  %v1470 = vld [vmem:[%s1468] ss:$16 sm:%s1469]
  %s1471 = scalar_lea.vmem %s0, 520
  %s1472 = smov 12
  %v1473 = vld [vmem:[%s1471] ss:$16 sm:%s1472]
  %vm1474 = vcmask 1043458
  %v1475 = vsel %vm1474, %v1473, %v1470
  %s1476 = scalar_lea.vmem %s0, 520
  %s1477 = smov 48
  %v1478 = vld [vmem:[%s1476] ss:$16 sm:%s1477]
  %vm1479 = vcmask 1045508
  %v1480 = vsel %vm1479, %v1478, %v1475
  %s1481 = scalar_lea.vmem %s0, 520
  %s1482 = smov 192
  %v1483 = vld [vmem:[%s1481] ss:$16 sm:%s1482]
  %vm1484 = vcmask 1047558
  %v1485 = vsel %vm1484, %v1483, %v1480
  %1486 = vrot.lane.b32.xlu0 %v1485, 64
  %v1487 = vpop.permute.xlu0 %1486
  %vm1488 = vcmask 589312
  %s1489 = scalar_lea.vmem %s1, 32
  %1490 = vst.msk [vmem:[%s1489] sm:$0xff] %vm1488, %v1487
  %s1491 = scalar_lea.vmem %s0, 136
  %s1492 = smov 3
  %v1493 = vld [vmem:[%s1491] ss:$16 sm:%s1492]
  %s1494 = scalar_lea.vmem %s0, 136
  %s1495 = smov 12
  %v1496 = vld [vmem:[%s1494] ss:$16 sm:%s1495]
  %vm1497 = vcmask 1043458
  %v1498 = vsel %vm1497, %v1496, %v1493
  %s1499 = scalar_lea.vmem %s0, 136
  %s1500 = smov 48
  %v1501 = vld [vmem:[%s1499] ss:$16 sm:%s1500]
  %vm1502 = vcmask 1045508
  %v1503 = vsel %vm1502, %v1501, %v1498
  %s1504 = scalar_lea.vmem %s0, 136
  %s1505 = smov 192
  %v1506 = vld [vmem:[%s1504] ss:$16 sm:%s1505]
  %vm1507 = vcmask 1047558
  %v1508 = vsel %vm1507, %v1506, %v1503
  %1509 = vrot.lane.b32.xlu0 %v1508, 64
  %v1510 = vpop.permute.xlu0 %1509
  %vm1511 = vcmask 589312
  %s1512 = scalar_lea.vmem %s1, 8
  %1513 = vst.msk [vmem:[%s1512] sm:$0xff] %vm1511, %v1510
  %s1514 = scalar_lea.vmem %s0, 648
  %s1515 = smov 3
  %v1516 = vld [vmem:[%s1514] ss:$16 sm:%s1515]
  %s1517 = scalar_lea.vmem %s0, 648
  %s1518 = smov 12
  %v1519 = vld [vmem:[%s1517] ss:$16 sm:%s1518]
  %vm1520 = vcmask 1043458
  %v1521 = vsel %vm1520, %v1519, %v1516
  %s1522 = scalar_lea.vmem %s0, 648
  %s1523 = smov 48
  %v1524 = vld [vmem:[%s1522] ss:$16 sm:%s1523]
  %vm1525 = vcmask 1045508
  %v1526 = vsel %vm1525, %v1524, %v1521
  %s1527 = scalar_lea.vmem %s0, 648
  %s1528 = smov 192
  %v1529 = vld [vmem:[%s1527] ss:$16 sm:%s1528]
  %vm1530 = vcmask 1047558
  %v1531 = vsel %vm1530, %v1529, %v1526
  %1532 = vrot.lane.b32.xlu0 %v1531, 64
  %v1533 = vpop.permute.xlu0 %1532
  %vm1534 = vcmask 589312
  %s1535 = scalar_lea.vmem %s1, 40
  %1536 = vst.msk [vmem:[%s1535] sm:$0xff] %vm1534, %v1533
  %s1537 = scalar_lea.vmem %s0, 264
  %s1538 = smov 3
  %v1539 = vld [vmem:[%s1537] ss:$16 sm:%s1538]
  %s1540 = scalar_lea.vmem %s0, 264
  %s1541 = smov 12
  %v1542 = vld [vmem:[%s1540] ss:$16 sm:%s1541]
  %vm1543 = vcmask 1043458
  %v1544 = vsel %vm1543, %v1542, %v1539
  %s1545 = scalar_lea.vmem %s0, 264
  %s1546 = smov 48
  %v1547 = vld [vmem:[%s1545] ss:$16 sm:%s1546]
  %vm1548 = vcmask 1045508
  %v1549 = vsel %vm1548, %v1547, %v1544
  %s1550 = scalar_lea.vmem %s0, 264
  %s1551 = smov 192
  %v1552 = vld [vmem:[%s1550] ss:$16 sm:%s1551]
  %vm1553 = vcmask 1047558
  %v1554 = vsel %vm1553, %v1552, %v1549
  %1555 = vrot.lane.b32.xlu0 %v1554, 64
  %v1556 = vpop.permute.xlu0 %1555
  %vm1557 = vcmask 589312
  %s1558 = scalar_lea.vmem %s1, 16
  %1559 = vst.msk [vmem:[%s1558] sm:$0xff] %vm1557, %v1556
  %s1560 = scalar_lea.vmem %s0, 776
  %s1561 = smov 3
  %v1562 = vld [vmem:[%s1560] ss:$16 sm:%s1561]
  %s1563 = scalar_lea.vmem %s0, 776
  %s1564 = smov 12
  %v1565 = vld [vmem:[%s1563] ss:$16 sm:%s1564]
  %vm1566 = vcmask 1043458
  %v1567 = vsel %vm1566, %v1565, %v1562
  %s1568 = scalar_lea.vmem %s0, 776
  %s1569 = smov 48
  %v1570 = vld [vmem:[%s1568] ss:$16 sm:%s1569]
  %vm1571 = vcmask 1045508
  %v1572 = vsel %vm1571, %v1570, %v1567
  %s1573 = scalar_lea.vmem %s0, 776
  %s1574 = smov 192
  %v1575 = vld [vmem:[%s1573] ss:$16 sm:%s1574]
  %vm1576 = vcmask 1047558
  %v1577 = vsel %vm1576, %v1575, %v1572
  %1578 = vrot.lane.b32.xlu0 %v1577, 64
  %v1579 = vpop.permute.xlu0 %1578
  %vm1580 = vcmask 589312
  %s1581 = scalar_lea.vmem %s1, 48
  %1582 = vst.msk [vmem:[%s1581] sm:$0xff] %vm1580, %v1579
  %s1583 = scalar_lea.vmem %s0, 392
  %s1584 = smov 3
  %v1585 = vld [vmem:[%s1583] ss:$16 sm:%s1584]
  %s1586 = scalar_lea.vmem %s0, 392
  %s1587 = smov 12
  %v1588 = vld [vmem:[%s1586] ss:$16 sm:%s1587]
  %vm1589 = vcmask 1043458
  %v1590 = vsel %vm1589, %v1588, %v1585
  %s1591 = scalar_lea.vmem %s0, 392
  %s1592 = smov 48
  %v1593 = vld [vmem:[%s1591] ss:$16 sm:%s1592]
  %vm1594 = vcmask 1045508
  %v1595 = vsel %vm1594, %v1593, %v1590
  %s1596 = scalar_lea.vmem %s0, 392
  %s1597 = smov 192
  %v1598 = vld [vmem:[%s1596] ss:$16 sm:%s1597]
  %vm1599 = vcmask 1047558
  %v1600 = vsel %vm1599, %v1598, %v1595
  %1601 = vrot.lane.b32.xlu0 %v1600, 64
  %v1602 = vpop.permute.xlu0 %1601
  %vm1603 = vcmask 589312
  %s1604 = scalar_lea.vmem %s1, 24
  %1605 = vst.msk [vmem:[%s1604] sm:$0xff] %vm1603, %v1602
  %s1606 = scalar_lea.vmem %s0, 904
  %s1607 = smov 3
  %v1608 = vld [vmem:[%s1606] ss:$16 sm:%s1607]
  %s1609 = scalar_lea.vmem %s0, 904
  %s1610 = smov 12
  %v1611 = vld [vmem:[%s1609] ss:$16 sm:%s1610]
  %vm1612 = vcmask 1043458
  %v1613 = vsel %vm1612, %v1611, %v1608
  %s1614 = scalar_lea.vmem %s0, 904
  %s1615 = smov 48
  %v1616 = vld [vmem:[%s1614] ss:$16 sm:%s1615]
  %vm1617 = vcmask 1045508
  %v1618 = vsel %vm1617, %v1616, %v1613
  %s1619 = scalar_lea.vmem %s0, 904
  %s1620 = smov 192
  %v1621 = vld [vmem:[%s1619] ss:$16 sm:%s1620]
  %vm1622 = vcmask 1047558
  %v1623 = vsel %vm1622, %v1621, %v1618
  %1624 = vrot.lane.b32.xlu0 %v1623, 64
  %v1625 = vpop.permute.xlu0 %1624
  %vm1626 = vcmask 589312
  %s1627 = scalar_lea.vmem %s1, 56
  %1628 = vst.msk [vmem:[%s1627] sm:$0xff] %vm1626, %v1625
  %s1629 = scalar_lea.vmem %s0, 7
  %s1630 = smov 3
  %v1631 = vld [vmem:[%s1629] ss:$16 sm:%s1630]
  %s1632 = scalar_lea.vmem %s0, 7
  %s1633 = smov 12
  %v1634 = vld [vmem:[%s1632] ss:$16 sm:%s1633]
  %vm1635 = vcmask 1043458
  %v1636 = vsel %vm1635, %v1634, %v1631
  %s1637 = scalar_lea.vmem %s0, 7
  %s1638 = smov 48
  %v1639 = vld [vmem:[%s1637] ss:$16 sm:%s1638]
  %vm1640 = vcmask 1045508
  %v1641 = vsel %vm1640, %v1639, %v1636
  %s1642 = scalar_lea.vmem %s0, 7
  %s1643 = smov 192
  %v1644 = vld [vmem:[%s1642] ss:$16 sm:%s1643]
  %vm1645 = vcmask 1047558
  %v1646 = vsel %vm1645, %v1644, %v1641
  %1647 = vrot.lane.b32.xlu0 %v1646, 56
  %v1648 = vpop.permute.xlu0 %1647
  %vm1649 = vcmask 523712
  %1650 = vst.msk [vmem:[%s1] sm:$0xff] %vm1649, %v1648
  %s1651 = scalar_lea.vmem %s0, 519
  %s1652 = smov 3
  %v1653 = vld [vmem:[%s1651] ss:$16 sm:%s1652]
  %s1654 = scalar_lea.vmem %s0, 519
  %s1655 = smov 12
  %v1656 = vld [vmem:[%s1654] ss:$16 sm:%s1655]
  %vm1657 = vcmask 1043458
  %v1658 = vsel %vm1657, %v1656, %v1653
  %s1659 = scalar_lea.vmem %s0, 519
  %s1660 = smov 48
  %v1661 = vld [vmem:[%s1659] ss:$16 sm:%s1660]
  %vm1662 = vcmask 1045508
  %v1663 = vsel %vm1662, %v1661, %v1658
  %s1664 = scalar_lea.vmem %s0, 519
  %s1665 = smov 192
  %v1666 = vld [vmem:[%s1664] ss:$16 sm:%s1665]
  %vm1667 = vcmask 1047558
  %v1668 = vsel %vm1667, %v1666, %v1663
  %1669 = vrot.lane.b32.xlu0 %v1668, 56
  %v1670 = vpop.permute.xlu0 %1669
  %vm1671 = vcmask 523712
  %s1672 = scalar_lea.vmem %s1, 32
  %1673 = vst.msk [vmem:[%s1672] sm:$0xff] %vm1671, %v1670
  %s1674 = scalar_lea.vmem %s0, 135
  %s1675 = smov 3
  %v1676 = vld [vmem:[%s1674] ss:$16 sm:%s1675]
  %s1677 = scalar_lea.vmem %s0, 135
  %s1678 = smov 12
  %v1679 = vld [vmem:[%s1677] ss:$16 sm:%s1678]
  %vm1680 = vcmask 1043458
  %v1681 = vsel %vm1680, %v1679, %v1676
  %s1682 = scalar_lea.vmem %s0, 135
  %s1683 = smov 48
  %v1684 = vld [vmem:[%s1682] ss:$16 sm:%s1683]
  %vm1685 = vcmask 1045508
  %v1686 = vsel %vm1685, %v1684, %v1681
  %s1687 = scalar_lea.vmem %s0, 135
  %s1688 = smov 192
  %v1689 = vld [vmem:[%s1687] ss:$16 sm:%s1688]
  %vm1690 = vcmask 1047558
  %v1691 = vsel %vm1690, %v1689, %v1686
  %1692 = vrot.lane.b32.xlu0 %v1691, 56
  %v1693 = vpop.permute.xlu0 %1692
  %vm1694 = vcmask 523712
  %s1695 = scalar_lea.vmem %s1, 8
  %1696 = vst.msk [vmem:[%s1695] sm:$0xff] %vm1694, %v1693
  %s1697 = scalar_lea.vmem %s0, 647
  %s1698 = smov 3
  %v1699 = vld [vmem:[%s1697] ss:$16 sm:%s1698]
  %s1700 = scalar_lea.vmem %s0, 647
  %s1701 = smov 12
  %v1702 = vld [vmem:[%s1700] ss:$16 sm:%s1701]
  %vm1703 = vcmask 1043458
  %v1704 = vsel %vm1703, %v1702, %v1699
  %s1705 = scalar_lea.vmem %s0, 647
  %s1706 = smov 48
  %v1707 = vld [vmem:[%s1705] ss:$16 sm:%s1706]
  %vm1708 = vcmask 1045508
  %v1709 = vsel %vm1708, %v1707, %v1704
  %s1710 = scalar_lea.vmem %s0, 647
  %s1711 = smov 192
  %v1712 = vld [vmem:[%s1710] ss:$16 sm:%s1711]
  %vm1713 = vcmask 1047558
  %v1714 = vsel %vm1713, %v1712, %v1709
  %1715 = vrot.lane.b32.xlu0 %v1714, 56
  %v1716 = vpop.permute.xlu0 %1715
  %vm1717 = vcmask 523712
  %s1718 = scalar_lea.vmem %s1, 40
  %1719 = vst.msk [vmem:[%s1718] sm:$0xff] %vm1717, %v1716
  %s1720 = scalar_lea.vmem %s0, 263
  %s1721 = smov 3
  %v1722 = vld [vmem:[%s1720] ss:$16 sm:%s1721]
  %s1723 = scalar_lea.vmem %s0, 263
  %s1724 = smov 12
  %v1725 = vld [vmem:[%s1723] ss:$16 sm:%s1724]
  %vm1726 = vcmask 1043458
  %v1727 = vsel %vm1726, %v1725, %v1722
  %s1728 = scalar_lea.vmem %s0, 263
  %s1729 = smov 48
  %v1730 = vld [vmem:[%s1728] ss:$16 sm:%s1729]
  %vm1731 = vcmask 1045508
  %v1732 = vsel %vm1731, %v1730, %v1727
  %s1733 = scalar_lea.vmem %s0, 263
  %s1734 = smov 192
  %v1735 = vld [vmem:[%s1733] ss:$16 sm:%s1734]
  %vm1736 = vcmask 1047558
  %v1737 = vsel %vm1736, %v1735, %v1732
  %1738 = vrot.lane.b32.xlu0 %v1737, 56
  %v1739 = vpop.permute.xlu0 %1738
  %vm1740 = vcmask 523712
  %s1741 = scalar_lea.vmem %s1, 16
  %1742 = vst.msk [vmem:[%s1741] sm:$0xff] %vm1740, %v1739
  %s1743 = scalar_lea.vmem %s0, 775
  %s1744 = smov 3
  %v1745 = vld [vmem:[%s1743] ss:$16 sm:%s1744]
  %s1746 = scalar_lea.vmem %s0, 775
  %s1747 = smov 12
  %v1748 = vld [vmem:[%s1746] ss:$16 sm:%s1747]
  %vm1749 = vcmask 1043458
  %v1750 = vsel %vm1749, %v1748, %v1745
  %s1751 = scalar_lea.vmem %s0, 775
  %s1752 = smov 48
  %v1753 = vld [vmem:[%s1751] ss:$16 sm:%s1752]
  %vm1754 = vcmask 1045508
  %v1755 = vsel %vm1754, %v1753, %v1750
  %s1756 = scalar_lea.vmem %s0, 775
  %s1757 = smov 192
  %v1758 = vld [vmem:[%s1756] ss:$16 sm:%s1757]
  %vm1759 = vcmask 1047558
  %v1760 = vsel %vm1759, %v1758, %v1755
  %1761 = vrot.lane.b32.xlu0 %v1760, 56
  %v1762 = vpop.permute.xlu0 %1761
  %vm1763 = vcmask 523712
  %s1764 = scalar_lea.vmem %s1, 48
  %1765 = vst.msk [vmem:[%s1764] sm:$0xff] %vm1763, %v1762
  %s1766 = scalar_lea.vmem %s0, 391
  %s1767 = smov 3
  %v1768 = vld [vmem:[%s1766] ss:$16 sm:%s1767]
  %s1769 = scalar_lea.vmem %s0, 391
  %s1770 = smov 12
  %v1771 = vld [vmem:[%s1769] ss:$16 sm:%s1770]
  %vm1772 = vcmask 1043458
  %v1773 = vsel %vm1772, %v1771, %v1768
  %s1774 = scalar_lea.vmem %s0, 391
  %s1775 = smov 48
  %v1776 = vld [vmem:[%s1774] ss:$16 sm:%s1775]
  %vm1777 = vcmask 1045508
  %v1778 = vsel %vm1777, %v1776, %v1773
  %s1779 = scalar_lea.vmem %s0, 391
  %s1780 = smov 192
  %v1781 = vld [vmem:[%s1779] ss:$16 sm:%s1780]
  %vm1782 = vcmask 1047558
  %v1783 = vsel %vm1782, %v1781, %v1778
  %1784 = vrot.lane.b32.xlu0 %v1783, 56
  %v1785 = vpop.permute.xlu0 %1784
  %vm1786 = vcmask 523712
  %s1787 = scalar_lea.vmem %s1, 24
  %1788 = vst.msk [vmem:[%s1787] sm:$0xff] %vm1786, %v1785
  %s1789 = scalar_lea.vmem %s0, 903
  %s1790 = smov 3
  %v1791 = vld [vmem:[%s1789] ss:$16 sm:%s1790]
  %s1792 = scalar_lea.vmem %s0, 903
  %s1793 = smov 12
  %v1794 = vld [vmem:[%s1792] ss:$16 sm:%s1793]
  %vm1795 = vcmask 1043458
  %v1796 = vsel %vm1795, %v1794, %v1791
  %s1797 = scalar_lea.vmem %s0, 903
  %s1798 = smov 48
  %v1799 = vld [vmem:[%s1797] ss:$16 sm:%s1798]
  %vm1800 = vcmask 1045508
  %v1801 = vsel %vm1800, %v1799, %v1796
  %s1802 = scalar_lea.vmem %s0, 903
  %s1803 = smov 192
  %v1804 = vld [vmem:[%s1802] ss:$16 sm:%s1803]
  %vm1805 = vcmask 1047558
  %v1806 = vsel %vm1805, %v1804, %v1801
  %1807 = vrot.lane.b32.xlu0 %v1806, 56
  %v1808 = vpop.permute.xlu0 %1807
  %vm1809 = vcmask 523712
  %s1810 = scalar_lea.vmem %s1, 56
  %1811 = vst.msk [vmem:[%s1810] sm:$0xff] %vm1809, %v1808
  %s1812 = scalar_lea.vmem %s0, 6
  %s1813 = smov 3
  %v1814 = vld [vmem:[%s1812] ss:$16 sm:%s1813]
  %s1815 = scalar_lea.vmem %s0, 6
  %s1816 = smov 12
  %v1817 = vld [vmem:[%s1815] ss:$16 sm:%s1816]
  %vm1818 = vcmask 1043458
  %v1819 = vsel %vm1818, %v1817, %v1814
  %s1820 = scalar_lea.vmem %s0, 6
  %s1821 = smov 48
  %v1822 = vld [vmem:[%s1820] ss:$16 sm:%s1821]
  %vm1823 = vcmask 1045508
  %v1824 = vsel %vm1823, %v1822, %v1819
  %s1825 = scalar_lea.vmem %s0, 6
  %s1826 = smov 192
  %v1827 = vld [vmem:[%s1825] ss:$16 sm:%s1826]
  %vm1828 = vcmask 1047558
  %v1829 = vsel %vm1828, %v1827, %v1824
  %1830 = vrot.lane.b32.xlu0 %v1829, 48
  %v1831 = vpop.permute.xlu0 %1830
  %vm1832 = vcmask 458112
  %1833 = vst.msk [vmem:[%s1] sm:$0xff] %vm1832, %v1831
  %s1834 = scalar_lea.vmem %s0, 518
  %s1835 = smov 3
  %v1836 = vld [vmem:[%s1834] ss:$16 sm:%s1835]
  %s1837 = scalar_lea.vmem %s0, 518
  %s1838 = smov 12
  %v1839 = vld [vmem:[%s1837] ss:$16 sm:%s1838]
  %vm1840 = vcmask 1043458
  %v1841 = vsel %vm1840, %v1839, %v1836
  %s1842 = scalar_lea.vmem %s0, 518
  %s1843 = smov 48
  %v1844 = vld [vmem:[%s1842] ss:$16 sm:%s1843]
  %vm1845 = vcmask 1045508
  %v1846 = vsel %vm1845, %v1844, %v1841
  %s1847 = scalar_lea.vmem %s0, 518
  %s1848 = smov 192
  %v1849 = vld [vmem:[%s1847] ss:$16 sm:%s1848]
  %vm1850 = vcmask 1047558
  %v1851 = vsel %vm1850, %v1849, %v1846
  %1852 = vrot.lane.b32.xlu0 %v1851, 48
  %v1853 = vpop.permute.xlu0 %1852
  %vm1854 = vcmask 458112
  %s1855 = scalar_lea.vmem %s1, 32
  %1856 = vst.msk [vmem:[%s1855] sm:$0xff] %vm1854, %v1853
  %s1857 = scalar_lea.vmem %s0, 134
  %s1858 = smov 3
  %v1859 = vld [vmem:[%s1857] ss:$16 sm:%s1858]
  %s1860 = scalar_lea.vmem %s0, 134
  %s1861 = smov 12
  %v1862 = vld [vmem:[%s1860] ss:$16 sm:%s1861]
  %vm1863 = vcmask 1043458
  %v1864 = vsel %vm1863, %v1862, %v1859
  %s1865 = scalar_lea.vmem %s0, 134
  %s1866 = smov 48
  %v1867 = vld [vmem:[%s1865] ss:$16 sm:%s1866]
  %vm1868 = vcmask 1045508
  %v1869 = vsel %vm1868, %v1867, %v1864
  %s1870 = scalar_lea.vmem %s0, 134
  %s1871 = smov 192
  %v1872 = vld [vmem:[%s1870] ss:$16 sm:%s1871]
  %vm1873 = vcmask 1047558
  %v1874 = vsel %vm1873, %v1872, %v1869
  %1875 = vrot.lane.b32.xlu0 %v1874, 48
  %v1876 = vpop.permute.xlu0 %1875
  %vm1877 = vcmask 458112
  %s1878 = scalar_lea.vmem %s1, 8
  %1879 = vst.msk [vmem:[%s1878] sm:$0xff] %vm1877, %v1876
  %s1880 = scalar_lea.vmem %s0, 646
  %s1881 = smov 3
  %v1882 = vld [vmem:[%s1880] ss:$16 sm:%s1881]
  %s1883 = scalar_lea.vmem %s0, 646
  %s1884 = smov 12
  %v1885 = vld [vmem:[%s1883] ss:$16 sm:%s1884]
  %vm1886 = vcmask 1043458
  %v1887 = vsel %vm1886, %v1885, %v1882
  %s1888 = scalar_lea.vmem %s0, 646
  %s1889 = smov 48
  %v1890 = vld [vmem:[%s1888] ss:$16 sm:%s1889]
  %vm1891 = vcmask 1045508
  %v1892 = vsel %vm1891, %v1890, %v1887
  %s1893 = scalar_lea.vmem %s0, 646
  %s1894 = smov 192
  %v1895 = vld [vmem:[%s1893] ss:$16 sm:%s1894]
  %vm1896 = vcmask 1047558
  %v1897 = vsel %vm1896, %v1895, %v1892
  %1898 = vrot.lane.b32.xlu0 %v1897, 48
  %v1899 = vpop.permute.xlu0 %1898
  %vm1900 = vcmask 458112
  %s1901 = scalar_lea.vmem %s1, 40
  %1902 = vst.msk [vmem:[%s1901] sm:$0xff] %vm1900, %v1899
  %s1903 = scalar_lea.vmem %s0, 262
  %s1904 = smov 3
  %v1905 = vld [vmem:[%s1903] ss:$16 sm:%s1904]
  %s1906 = scalar_lea.vmem %s0, 262
  %s1907 = smov 12
  %v1908 = vld [vmem:[%s1906] ss:$16 sm:%s1907]
  %vm1909 = vcmask 1043458
  %v1910 = vsel %vm1909, %v1908, %v1905
  %s1911 = scalar_lea.vmem %s0, 262
  %s1912 = smov 48
  %v1913 = vld [vmem:[%s1911] ss:$16 sm:%s1912]
  %vm1914 = vcmask 1045508
  %v1915 = vsel %vm1914, %v1913, %v1910
  %s1916 = scalar_lea.vmem %s0, 262
  %s1917 = smov 192
  %v1918 = vld [vmem:[%s1916] ss:$16 sm:%s1917]
  %vm1919 = vcmask 1047558
  %v1920 = vsel %vm1919, %v1918, %v1915
  %1921 = vrot.lane.b32.xlu0 %v1920, 48
  %v1922 = vpop.permute.xlu0 %1921
  %vm1923 = vcmask 458112
  %s1924 = scalar_lea.vmem %s1, 16
  %1925 = vst.msk [vmem:[%s1924] sm:$0xff] %vm1923, %v1922
  %s1926 = scalar_lea.vmem %s0, 774
  %s1927 = smov 3
  %v1928 = vld [vmem:[%s1926] ss:$16 sm:%s1927]
  %s1929 = scalar_lea.vmem %s0, 774
  %s1930 = smov 12
  %v1931 = vld [vmem:[%s1929] ss:$16 sm:%s1930]
  %vm1932 = vcmask 1043458
  %v1933 = vsel %vm1932, %v1931, %v1928
  %s1934 = scalar_lea.vmem %s0, 774
  %s1935 = smov 48
  %v1936 = vld [vmem:[%s1934] ss:$16 sm:%s1935]
  %vm1937 = vcmask 1045508
  %v1938 = vsel %vm1937, %v1936, %v1933
  %s1939 = scalar_lea.vmem %s0, 774
  %s1940 = smov 192
  %v1941 = vld [vmem:[%s1939] ss:$16 sm:%s1940]
  %vm1942 = vcmask 1047558
  %v1943 = vsel %vm1942, %v1941, %v1938
  %1944 = vrot.lane.b32.xlu0 %v1943, 48
  %v1945 = vpop.permute.xlu0 %1944
  %vm1946 = vcmask 458112
  %s1947 = scalar_lea.vmem %s1, 48
  %1948 = vst.msk [vmem:[%s1947] sm:$0xff] %vm1946, %v1945
  %s1949 = scalar_lea.vmem %s0, 390
  %s1950 = smov 3
  %v1951 = vld [vmem:[%s1949] ss:$16 sm:%s1950]
  %s1952 = scalar_lea.vmem %s0, 390
  %s1953 = smov 12
  %v1954 = vld [vmem:[%s1952] ss:$16 sm:%s1953]
  %vm1955 = vcmask 1043458
  %v1956 = vsel %vm1955, %v1954, %v1951
  %s1957 = scalar_lea.vmem %s0, 390
  %s1958 = smov 48
  %v1959 = vld [vmem:[%s1957] ss:$16 sm:%s1958]
  %vm1960 = vcmask 1045508
  %v1961 = vsel %vm1960, %v1959, %v1956
  %s1962 = scalar_lea.vmem %s0, 390
  %s1963 = smov 192
  %v1964 = vld [vmem:[%s1962] ss:$16 sm:%s1963]
  %vm1965 = vcmask 1047558
  %v1966 = vsel %vm1965, %v1964, %v1961
  %1967 = vrot.lane.b32.xlu0 %v1966, 48
  %v1968 = vpop.permute.xlu0 %1967
  %vm1969 = vcmask 458112
  %s1970 = scalar_lea.vmem %s1, 24
  %1971 = vst.msk [vmem:[%s1970] sm:$0xff] %vm1969, %v1968
  %s1972 = scalar_lea.vmem %s0, 902
  %s1973 = smov 3
  %v1974 = vld [vmem:[%s1972] ss:$16 sm:%s1973]
  %s1975 = scalar_lea.vmem %s0, 902
  %s1976 = smov 12
  %v1977 = vld [vmem:[%s1975] ss:$16 sm:%s1976]
  %vm1978 = vcmask 1043458
  %v1979 = vsel %vm1978, %v1977, %v1974
  %s1980 = scalar_lea.vmem %s0, 902
  %s1981 = smov 48
  %v1982 = vld [vmem:[%s1980] ss:$16 sm:%s1981]
  %vm1983 = vcmask 1045508
  %v1984 = vsel %vm1983, %v1982, %v1979
  %s1985 = scalar_lea.vmem %s0, 902
  %s1986 = smov 192
  %v1987 = vld [vmem:[%s1985] ss:$16 sm:%s1986]
  %vm1988 = vcmask 1047558
  %v1989 = vsel %vm1988, %v1987, %v1984
  %1990 = vrot.lane.b32.xlu0 %v1989, 48
  %v1991 = vpop.permute.xlu0 %1990
  %vm1992 = vcmask 458112
  %s1993 = scalar_lea.vmem %s1, 56
  %1994 = vst.msk [vmem:[%s1993] sm:$0xff] %vm1992, %v1991
  %s1995 = scalar_lea.vmem %s0, 5
  %s1996 = smov 3
  %v1997 = vld [vmem:[%s1995] ss:$16 sm:%s1996]
  %s1998 = scalar_lea.vmem %s0, 5
  %s1999 = smov 12
  %v2000 = vld [vmem:[%s1998] ss:$16 sm:%s1999]
  %vm2001 = vcmask 1043458
  %v2002 = vsel %vm2001, %v2000, %v1997
  %s2003 = scalar_lea.vmem %s0, 5
  %s2004 = smov 48
  %v2005 = vld [vmem:[%s2003] ss:$16 sm:%s2004]
  %vm2006 = vcmask 1045508
  %v2007 = vsel %vm2006, %v2005, %v2002
  %s2008 = scalar_lea.vmem %s0, 5
  %s2009 = smov 192
  %v2010 = vld [vmem:[%s2008] ss:$16 sm:%s2009]
  %vm2011 = vcmask 1047558
  %v2012 = vsel %vm2011, %v2010, %v2007
  %2013 = vrot.lane.b32.xlu0 %v2012, 40
  %v2014 = vpop.permute.xlu0 %2013
  %vm2015 = vcmask 392512
  %2016 = vst.msk [vmem:[%s1] sm:$0xff] %vm2015, %v2014
  %s2017 = scalar_lea.vmem %s0, 517
  %s2018 = smov 3
  %v2019 = vld [vmem:[%s2017] ss:$16 sm:%s2018]
  %s2020 = scalar_lea.vmem %s0, 517
  %s2021 = smov 12
  %v2022 = vld [vmem:[%s2020] ss:$16 sm:%s2021]
  %vm2023 = vcmask 1043458
  %v2024 = vsel %vm2023, %v2022, %v2019
  %s2025 = scalar_lea.vmem %s0, 517
  %s2026 = smov 48
  %v2027 = vld [vmem:[%s2025] ss:$16 sm:%s2026]
  %vm2028 = vcmask 1045508
  %v2029 = vsel %vm2028, %v2027, %v2024
  %s2030 = scalar_lea.vmem %s0, 517
  %s2031 = smov 192
  %v2032 = vld [vmem:[%s2030] ss:$16 sm:%s2031]
  %vm2033 = vcmask 1047558
  %v2034 = vsel %vm2033, %v2032, %v2029
  %2035 = vrot.lane.b32.xlu0 %v2034, 40
  %v2036 = vpop.permute.xlu0 %2035
  %vm2037 = vcmask 392512
  %s2038 = scalar_lea.vmem %s1, 32
  %2039 = vst.msk [vmem:[%s2038] sm:$0xff] %vm2037, %v2036
  %s2040 = scalar_lea.vmem %s0, 133
  %s2041 = smov 3
  %v2042 = vld [vmem:[%s2040] ss:$16 sm:%s2041]
  %s2043 = scalar_lea.vmem %s0, 133
  %s2044 = smov 12
  %v2045 = vld [vmem:[%s2043] ss:$16 sm:%s2044]
  %vm2046 = vcmask 1043458
  %v2047 = vsel %vm2046, %v2045, %v2042
  %s2048 = scalar_lea.vmem %s0, 133
  %s2049 = smov 48
  %v2050 = vld [vmem:[%s2048] ss:$16 sm:%s2049]
  %vm2051 = vcmask 1045508
  %v2052 = vsel %vm2051, %v2050, %v2047
  %s2053 = scalar_lea.vmem %s0, 133
  %s2054 = smov 192
  %v2055 = vld [vmem:[%s2053] ss:$16 sm:%s2054]
  %vm2056 = vcmask 1047558
  %v2057 = vsel %vm2056, %v2055, %v2052
  %2058 = vrot.lane.b32.xlu0 %v2057, 40
  %v2059 = vpop.permute.xlu0 %2058
  %vm2060 = vcmask 392512
  %s2061 = scalar_lea.vmem %s1, 8
  %2062 = vst.msk [vmem:[%s2061] sm:$0xff] %vm2060, %v2059
  %s2063 = scalar_lea.vmem %s0, 645
  %s2064 = smov 3
  %v2065 = vld [vmem:[%s2063] ss:$16 sm:%s2064]
  %s2066 = scalar_lea.vmem %s0, 645
  %s2067 = smov 12
  %v2068 = vld [vmem:[%s2066] ss:$16 sm:%s2067]
  %vm2069 = vcmask 1043458
  %v2070 = vsel %vm2069, %v2068, %v2065
  %s2071 = scalar_lea.vmem %s0, 645
  %s2072 = smov 48
  %v2073 = vld [vmem:[%s2071] ss:$16 sm:%s2072]
  %vm2074 = vcmask 1045508
  %v2075 = vsel %vm2074, %v2073, %v2070
  %s2076 = scalar_lea.vmem %s0, 645
  %s2077 = smov 192
  %v2078 = vld [vmem:[%s2076] ss:$16 sm:%s2077]
  %vm2079 = vcmask 1047558
  %v2080 = vsel %vm2079, %v2078, %v2075
  %2081 = vrot.lane.b32.xlu0 %v2080, 40
  %v2082 = vpop.permute.xlu0 %2081
  %vm2083 = vcmask 392512
  %s2084 = scalar_lea.vmem %s1, 40
  %2085 = vst.msk [vmem:[%s2084] sm:$0xff] %vm2083, %v2082
  %s2086 = scalar_lea.vmem %s0, 261
  %s2087 = smov 3
  %v2088 = vld [vmem:[%s2086] ss:$16 sm:%s2087]
  %s2089 = scalar_lea.vmem %s0, 261
  %s2090 = smov 12
  %v2091 = vld [vmem:[%s2089] ss:$16 sm:%s2090]
  %vm2092 = vcmask 1043458
  %v2093 = vsel %vm2092, %v2091, %v2088
  %s2094 = scalar_lea.vmem %s0, 261
  %s2095 = smov 48
  %v2096 = vld [vmem:[%s2094] ss:$16 sm:%s2095]
  %vm2097 = vcmask 1045508
  %v2098 = vsel %vm2097, %v2096, %v2093
  %s2099 = scalar_lea.vmem %s0, 261
  %s2100 = smov 192
  %v2101 = vld [vmem:[%s2099] ss:$16 sm:%s2100]
  %vm2102 = vcmask 1047558
  %v2103 = vsel %vm2102, %v2101, %v2098
  %2104 = vrot.lane.b32.xlu0 %v2103, 40
  %v2105 = vpop.permute.xlu0 %2104
  %vm2106 = vcmask 392512
  %s2107 = scalar_lea.vmem %s1, 16
  %2108 = vst.msk [vmem:[%s2107] sm:$0xff] %vm2106, %v2105
  %s2109 = scalar_lea.vmem %s0, 773
  %s2110 = smov 3
  %v2111 = vld [vmem:[%s2109] ss:$16 sm:%s2110]
  %s2112 = scalar_lea.vmem %s0, 773
  %s2113 = smov 12
  %v2114 = vld [vmem:[%s2112] ss:$16 sm:%s2113]
  %vm2115 = vcmask 1043458
  %v2116 = vsel %vm2115, %v2114, %v2111
  %s2117 = scalar_lea.vmem %s0, 773
  %s2118 = smov 48
  %v2119 = vld [vmem:[%s2117] ss:$16 sm:%s2118]
  %vm2120 = vcmask 1045508
  %v2121 = vsel %vm2120, %v2119, %v2116
  %s2122 = scalar_lea.vmem %s0, 773
  %s2123 = smov 192
  %v2124 = vld [vmem:[%s2122] ss:$16 sm:%s2123]
  %vm2125 = vcmask 1047558
  %v2126 = vsel %vm2125, %v2124, %v2121
  %2127 = vrot.lane.b32.xlu0 %v2126, 40
  %v2128 = vpop.permute.xlu0 %2127
  %vm2129 = vcmask 392512
  %s2130 = scalar_lea.vmem %s1, 48
  %2131 = vst.msk [vmem:[%s2130] sm:$0xff] %vm2129, %v2128
  %s2132 = scalar_lea.vmem %s0, 389
  %s2133 = smov 3
  %v2134 = vld [vmem:[%s2132] ss:$16 sm:%s2133]
  %s2135 = scalar_lea.vmem %s0, 389
  %s2136 = smov 12
  %v2137 = vld [vmem:[%s2135] ss:$16 sm:%s2136]
  %vm2138 = vcmask 1043458
  %v2139 = vsel %vm2138, %v2137, %v2134
  %s2140 = scalar_lea.vmem %s0, 389
  %s2141 = smov 48
  %v2142 = vld [vmem:[%s2140] ss:$16 sm:%s2141]
  %vm2143 = vcmask 1045508
  %v2144 = vsel %vm2143, %v2142, %v2139
  %s2145 = scalar_lea.vmem %s0, 389
  %s2146 = smov 192
  %v2147 = vld [vmem:[%s2145] ss:$16 sm:%s2146]
  %vm2148 = vcmask 1047558
  %v2149 = vsel %vm2148, %v2147, %v2144
  %2150 = vrot.lane.b32.xlu0 %v2149, 40
  %v2151 = vpop.permute.xlu0 %2150
  %vm2152 = vcmask 392512
  %s2153 = scalar_lea.vmem %s1, 24
  %2154 = vst.msk [vmem:[%s2153] sm:$0xff] %vm2152, %v2151
  %s2155 = scalar_lea.vmem %s0, 901
  %s2156 = smov 3
  %v2157 = vld [vmem:[%s2155] ss:$16 sm:%s2156]
  %s2158 = scalar_lea.vmem %s0, 901
  %s2159 = smov 12
  %v2160 = vld [vmem:[%s2158] ss:$16 sm:%s2159]
  %vm2161 = vcmask 1043458
  %v2162 = vsel %vm2161, %v2160, %v2157
  %s2163 = scalar_lea.vmem %s0, 901
  %s2164 = smov 48
  %v2165 = vld [vmem:[%s2163] ss:$16 sm:%s2164]
  %vm2166 = vcmask 1045508
  %v2167 = vsel %vm2166, %v2165, %v2162
  %s2168 = scalar_lea.vmem %s0, 901
  %s2169 = smov 192
  %v2170 = vld [vmem:[%s2168] ss:$16 sm:%s2169]
  %vm2171 = vcmask 1047558
  %v2172 = vsel %vm2171, %v2170, %v2167
  %2173 = vrot.lane.b32.xlu0 %v2172, 40
  %v2174 = vpop.permute.xlu0 %2173
  %vm2175 = vcmask 392512
  %s2176 = scalar_lea.vmem %s1, 56
  %2177 = vst.msk [vmem:[%s2176] sm:$0xff] %vm2175, %v2174
  %s2178 = scalar_lea.vmem %s0, 4
  %s2179 = smov 3
  %v2180 = vld [vmem:[%s2178] ss:$16 sm:%s2179]
  %s2181 = scalar_lea.vmem %s0, 4
  %s2182 = smov 12
  %v2183 = vld [vmem:[%s2181] ss:$16 sm:%s2182]
  %vm2184 = vcmask 1043458
  %v2185 = vsel %vm2184, %v2183, %v2180
  %s2186 = scalar_lea.vmem %s0, 4
  %s2187 = smov 48
  %v2188 = vld [vmem:[%s2186] ss:$16 sm:%s2187]
  %vm2189 = vcmask 1045508
  %v2190 = vsel %vm2189, %v2188, %v2185
  %s2191 = scalar_lea.vmem %s0, 4
  %s2192 = smov 192
  %v2193 = vld [vmem:[%s2191] ss:$16 sm:%s2192]
  %vm2194 = vcmask 1047558
  %v2195 = vsel %vm2194, %v2193, %v2190
  %2196 = vrot.lane.b32.xlu0 %v2195, 32
  %v2197 = vpop.permute.xlu0 %2196
  %vm2198 = vcmask 326912
  %2199 = vst.msk [vmem:[%s1] sm:$0xff] %vm2198, %v2197
  %s2200 = scalar_lea.vmem %s0, 516
  %s2201 = smov 3
  %v2202 = vld [vmem:[%s2200] ss:$16 sm:%s2201]
  %s2203 = scalar_lea.vmem %s0, 516
  %s2204 = smov 12
  %v2205 = vld [vmem:[%s2203] ss:$16 sm:%s2204]
  %vm2206 = vcmask 1043458
  %v2207 = vsel %vm2206, %v2205, %v2202
  %s2208 = scalar_lea.vmem %s0, 516
  %s2209 = smov 48
  %v2210 = vld [vmem:[%s2208] ss:$16 sm:%s2209]
  %vm2211 = vcmask 1045508
  %v2212 = vsel %vm2211, %v2210, %v2207
  %s2213 = scalar_lea.vmem %s0, 516
  %s2214 = smov 192
  %v2215 = vld [vmem:[%s2213] ss:$16 sm:%s2214]
  %vm2216 = vcmask 1047558
  %v2217 = vsel %vm2216, %v2215, %v2212
  %2218 = vrot.lane.b32.xlu0 %v2217, 32
  %v2219 = vpop.permute.xlu0 %2218
  %vm2220 = vcmask 326912
  %s2221 = scalar_lea.vmem %s1, 32
  %2222 = vst.msk [vmem:[%s2221] sm:$0xff] %vm2220, %v2219
  %s2223 = scalar_lea.vmem %s0, 132
  %s2224 = smov 3
  %v2225 = vld [vmem:[%s2223] ss:$16 sm:%s2224]
  %s2226 = scalar_lea.vmem %s0, 132
  %s2227 = smov 12
  %v2228 = vld [vmem:[%s2226] ss:$16 sm:%s2227]
  %vm2229 = vcmask 1043458
  %v2230 = vsel %vm2229, %v2228, %v2225
  %s2231 = scalar_lea.vmem %s0, 132
  %s2232 = smov 48
  %v2233 = vld [vmem:[%s2231] ss:$16 sm:%s2232]
  %vm2234 = vcmask 1045508
  %v2235 = vsel %vm2234, %v2233, %v2230
  %s2236 = scalar_lea.vmem %s0, 132
  %s2237 = smov 192
  %v2238 = vld [vmem:[%s2236] ss:$16 sm:%s2237]
  %vm2239 = vcmask 1047558
  %v2240 = vsel %vm2239, %v2238, %v2235
  %2241 = vrot.lane.b32.xlu0 %v2240, 32
  %v2242 = vpop.permute.xlu0 %2241
  %vm2243 = vcmask 326912
  %s2244 = scalar_lea.vmem %s1, 8
  %2245 = vst.msk [vmem:[%s2244] sm:$0xff] %vm2243, %v2242
  %s2246 = scalar_lea.vmem %s0, 644
  %s2247 = smov 3
  %v2248 = vld [vmem:[%s2246] ss:$16 sm:%s2247]
  %s2249 = scalar_lea.vmem %s0, 644
  %s2250 = smov 12
  %v2251 = vld [vmem:[%s2249] ss:$16 sm:%s2250]
  %vm2252 = vcmask 1043458
  %v2253 = vsel %vm2252, %v2251, %v2248
  %s2254 = scalar_lea.vmem %s0, 644
  %s2255 = smov 48
  %v2256 = vld [vmem:[%s2254] ss:$16 sm:%s2255]
  %vm2257 = vcmask 1045508
  %v2258 = vsel %vm2257, %v2256, %v2253
  %s2259 = scalar_lea.vmem %s0, 644
  %s2260 = smov 192
  %v2261 = vld [vmem:[%s2259] ss:$16 sm:%s2260]
  %vm2262 = vcmask 1047558
  %v2263 = vsel %vm2262, %v2261, %v2258
  %2264 = vrot.lane.b32.xlu0 %v2263, 32
  %v2265 = vpop.permute.xlu0 %2264
  %vm2266 = vcmask 326912
  %s2267 = scalar_lea.vmem %s1, 40
  %2268 = vst.msk [vmem:[%s2267] sm:$0xff] %vm2266, %v2265
  %s2269 = scalar_lea.vmem %s0, 260
  %s2270 = smov 3
  %v2271 = vld [vmem:[%s2269] ss:$16 sm:%s2270]
  %s2272 = scalar_lea.vmem %s0, 260
  %s2273 = smov 12
  %v2274 = vld [vmem:[%s2272] ss:$16 sm:%s2273]
  %vm2275 = vcmask 1043458
  %v2276 = vsel %vm2275, %v2274, %v2271
  %s2277 = scalar_lea.vmem %s0, 260
  %s2278 = smov 48
  %v2279 = vld [vmem:[%s2277] ss:$16 sm:%s2278]
  %vm2280 = vcmask 1045508
  %v2281 = vsel %vm2280, %v2279, %v2276
  %s2282 = scalar_lea.vmem %s0, 260
  %s2283 = smov 192
  %v2284 = vld [vmem:[%s2282] ss:$16 sm:%s2283]
  %vm2285 = vcmask 1047558
  %v2286 = vsel %vm2285, %v2284, %v2281
  %2287 = vrot.lane.b32.xlu0 %v2286, 32
  %v2288 = vpop.permute.xlu0 %2287
  %vm2289 = vcmask 326912
  %s2290 = scalar_lea.vmem %s1, 16
  %2291 = vst.msk [vmem:[%s2290] sm:$0xff] %vm2289, %v2288
  %s2292 = scalar_lea.vmem %s0, 772
  %s2293 = smov 3
  %v2294 = vld [vmem:[%s2292] ss:$16 sm:%s2293]
  %s2295 = scalar_lea.vmem %s0, 772
  %s2296 = smov 12
  %v2297 = vld [vmem:[%s2295] ss:$16 sm:%s2296]
  %vm2298 = vcmask 1043458
  %v2299 = vsel %vm2298, %v2297, %v2294
  %s2300 = scalar_lea.vmem %s0, 772
  %s2301 = smov 48
  %v2302 = vld [vmem:[%s2300] ss:$16 sm:%s2301]
  %vm2303 = vcmask 1045508
  %v2304 = vsel %vm2303, %v2302, %v2299
  %s2305 = scalar_lea.vmem %s0, 772
  %s2306 = smov 192
  %v2307 = vld [vmem:[%s2305] ss:$16 sm:%s2306]
  %vm2308 = vcmask 1047558
  %v2309 = vsel %vm2308, %v2307, %v2304
  %2310 = vrot.lane.b32.xlu0 %v2309, 32
  %v2311 = vpop.permute.xlu0 %2310
  %vm2312 = vcmask 326912
  %s2313 = scalar_lea.vmem %s1, 48
  %2314 = vst.msk [vmem:[%s2313] sm:$0xff] %vm2312, %v2311
  %s2315 = scalar_lea.vmem %s0, 388
  %s2316 = smov 3
  %v2317 = vld [vmem:[%s2315] ss:$16 sm:%s2316]
  %s2318 = scalar_lea.vmem %s0, 388
  %s2319 = smov 12
  %v2320 = vld [vmem:[%s2318] ss:$16 sm:%s2319]
  %vm2321 = vcmask 1043458
  %v2322 = vsel %vm2321, %v2320, %v2317
  %s2323 = scalar_lea.vmem %s0, 388
  %s2324 = smov 48
  %v2325 = vld [vmem:[%s2323] ss:$16 sm:%s2324]
  %vm2326 = vcmask 1045508
  %v2327 = vsel %vm2326, %v2325, %v2322
  %s2328 = scalar_lea.vmem %s0, 388
  %s2329 = smov 192
  %v2330 = vld [vmem:[%s2328] ss:$16 sm:%s2329]
  %vm2331 = vcmask 1047558
  %v2332 = vsel %vm2331, %v2330, %v2327
  %2333 = vrot.lane.b32.xlu0 %v2332, 32
  %v2334 = vpop.permute.xlu0 %2333
  %vm2335 = vcmask 326912
  %s2336 = scalar_lea.vmem %s1, 24
  %2337 = vst.msk [vmem:[%s2336] sm:$0xff] %vm2335, %v2334
  %s2338 = scalar_lea.vmem %s0, 900
  %s2339 = smov 3
  %v2340 = vld [vmem:[%s2338] ss:$16 sm:%s2339]
  %s2341 = scalar_lea.vmem %s0, 900
  %s2342 = smov 12
  %v2343 = vld [vmem:[%s2341] ss:$16 sm:%s2342]
  %vm2344 = vcmask 1043458
  %v2345 = vsel %vm2344, %v2343, %v2340
  %s2346 = scalar_lea.vmem %s0, 900
  %s2347 = smov 48
  %v2348 = vld [vmem:[%s2346] ss:$16 sm:%s2347]
  %vm2349 = vcmask 1045508
  %v2350 = vsel %vm2349, %v2348, %v2345
  %s2351 = scalar_lea.vmem %s0, 900
  %s2352 = smov 192
  %v2353 = vld [vmem:[%s2351] ss:$16 sm:%s2352]
  %vm2354 = vcmask 1047558
  %v2355 = vsel %vm2354, %v2353, %v2350
  %2356 = vrot.lane.b32.xlu0 %v2355, 32
  %v2357 = vpop.permute.xlu0 %2356
  %vm2358 = vcmask 326912
  %s2359 = scalar_lea.vmem %s1, 56
  %2360 = vst.msk [vmem:[%s2359] sm:$0xff] %vm2358, %v2357
  %s2361 = scalar_lea.vmem %s0, 3
  %s2362 = smov 3
  %v2363 = vld [vmem:[%s2361] ss:$16 sm:%s2362]
  %s2364 = scalar_lea.vmem %s0, 3
  %s2365 = smov 12
  %v2366 = vld [vmem:[%s2364] ss:$16 sm:%s2365]
  %vm2367 = vcmask 1043458
  %v2368 = vsel %vm2367, %v2366, %v2363
  %s2369 = scalar_lea.vmem %s0, 3
  %s2370 = smov 48
  %v2371 = vld [vmem:[%s2369] ss:$16 sm:%s2370]
  %vm2372 = vcmask 1045508
  %v2373 = vsel %vm2372, %v2371, %v2368
  %s2374 = scalar_lea.vmem %s0, 3
  %s2375 = smov 192
  %v2376 = vld [vmem:[%s2374] ss:$16 sm:%s2375]
  %vm2377 = vcmask 1047558
  %v2378 = vsel %vm2377, %v2376, %v2373
  %2379 = vrot.lane.b32.xlu0 %v2378, 24
  %v2380 = vpop.permute.xlu0 %2379
  %vm2381 = vcmask 261312
  %2382 = vst.msk [vmem:[%s1] sm:$0xff] %vm2381, %v2380
  %s2383 = scalar_lea.vmem %s0, 515
  %s2384 = smov 3
  %v2385 = vld [vmem:[%s2383] ss:$16 sm:%s2384]
  %s2386 = scalar_lea.vmem %s0, 515
  %s2387 = smov 12
  %v2388 = vld [vmem:[%s2386] ss:$16 sm:%s2387]
  %vm2389 = vcmask 1043458
  %v2390 = vsel %vm2389, %v2388, %v2385
  %s2391 = scalar_lea.vmem %s0, 515
  %s2392 = smov 48
  %v2393 = vld [vmem:[%s2391] ss:$16 sm:%s2392]
  %vm2394 = vcmask 1045508
  %v2395 = vsel %vm2394, %v2393, %v2390
  %s2396 = scalar_lea.vmem %s0, 515
  %s2397 = smov 192
  %v2398 = vld [vmem:[%s2396] ss:$16 sm:%s2397]
  %vm2399 = vcmask 1047558
  %v2400 = vsel %vm2399, %v2398, %v2395
  %2401 = vrot.lane.b32.xlu0 %v2400, 24
  %v2402 = vpop.permute.xlu0 %2401
  %vm2403 = vcmask 261312
  %s2404 = scalar_lea.vmem %s1, 32
  %2405 = vst.msk [vmem:[%s2404] sm:$0xff] %vm2403, %v2402
  %s2406 = scalar_lea.vmem %s0, 131
  %s2407 = smov 3
  %v2408 = vld [vmem:[%s2406] ss:$16 sm:%s2407]
  %s2409 = scalar_lea.vmem %s0, 131
  %s2410 = smov 12
  %v2411 = vld [vmem:[%s2409] ss:$16 sm:%s2410]
  %vm2412 = vcmask 1043458
  %v2413 = vsel %vm2412, %v2411, %v2408
  %s2414 = scalar_lea.vmem %s0, 131
  %s2415 = smov 48
  %v2416 = vld [vmem:[%s2414] ss:$16 sm:%s2415]
  %vm2417 = vcmask 1045508
  %v2418 = vsel %vm2417, %v2416, %v2413
  %s2419 = scalar_lea.vmem %s0, 131
  %s2420 = smov 192
  %v2421 = vld [vmem:[%s2419] ss:$16 sm:%s2420]
  %vm2422 = vcmask 1047558
  %v2423 = vsel %vm2422, %v2421, %v2418
  %2424 = vrot.lane.b32.xlu0 %v2423, 24
  %v2425 = vpop.permute.xlu0 %2424
  %vm2426 = vcmask 261312
  %s2427 = scalar_lea.vmem %s1, 8
  %2428 = vst.msk [vmem:[%s2427] sm:$0xff] %vm2426, %v2425
  %s2429 = scalar_lea.vmem %s0, 643
  %s2430 = smov 3
  %v2431 = vld [vmem:[%s2429] ss:$16 sm:%s2430]
  %s2432 = scalar_lea.vmem %s0, 643
  %s2433 = smov 12
  %v2434 = vld [vmem:[%s2432] ss:$16 sm:%s2433]
  %vm2435 = vcmask 1043458
  %v2436 = vsel %vm2435, %v2434, %v2431
  %s2437 = scalar_lea.vmem %s0, 643
  %s2438 = smov 48
  %v2439 = vld [vmem:[%s2437] ss:$16 sm:%s2438]
  %vm2440 = vcmask 1045508
  %v2441 = vsel %vm2440, %v2439, %v2436
  %s2442 = scalar_lea.vmem %s0, 643
  %s2443 = smov 192
  %v2444 = vld [vmem:[%s2442] ss:$16 sm:%s2443]
  %vm2445 = vcmask 1047558
  %v2446 = vsel %vm2445, %v2444, %v2441
  %2447 = vrot.lane.b32.xlu0 %v2446, 24
  %v2448 = vpop.permute.xlu0 %2447
  %vm2449 = vcmask 261312
  %s2450 = scalar_lea.vmem %s1, 40
  %2451 = vst.msk [vmem:[%s2450] sm:$0xff] %vm2449, %v2448
  %s2452 = scalar_lea.vmem %s0, 259
  %s2453 = smov 3
  %v2454 = vld [vmem:[%s2452] ss:$16 sm:%s2453]
  %s2455 = scalar_lea.vmem %s0, 259
  %s2456 = smov 12
  %v2457 = vld [vmem:[%s2455] ss:$16 sm:%s2456]
  %vm2458 = vcmask 1043458
  %v2459 = vsel %vm2458, %v2457, %v2454
  %s2460 = scalar_lea.vmem %s0, 259
  %s2461 = smov 48
  %v2462 = vld [vmem:[%s2460] ss:$16 sm:%s2461]
  %vm2463 = vcmask 1045508
  %v2464 = vsel %vm2463, %v2462, %v2459
  %s2465 = scalar_lea.vmem %s0, 259
  %s2466 = smov 192
  %v2467 = vld [vmem:[%s2465] ss:$16 sm:%s2466]
  %vm2468 = vcmask 1047558
  %v2469 = vsel %vm2468, %v2467, %v2464
  %2470 = vrot.lane.b32.xlu0 %v2469, 24
  %v2471 = vpop.permute.xlu0 %2470
  %vm2472 = vcmask 261312
  %s2473 = scalar_lea.vmem %s1, 16
  %2474 = vst.msk [vmem:[%s2473] sm:$0xff] %vm2472, %v2471
  %s2475 = scalar_lea.vmem %s0, 771
  %s2476 = smov 3
  %v2477 = vld [vmem:[%s2475] ss:$16 sm:%s2476]
  %s2478 = scalar_lea.vmem %s0, 771
  %s2479 = smov 12
  %v2480 = vld [vmem:[%s2478] ss:$16 sm:%s2479]
  %vm2481 = vcmask 1043458
  %v2482 = vsel %vm2481, %v2480, %v2477
  %s2483 = scalar_lea.vmem %s0, 771
  %s2484 = smov 48
  %v2485 = vld [vmem:[%s2483] ss:$16 sm:%s2484]
  %vm2486 = vcmask 1045508
  %v2487 = vsel %vm2486, %v2485, %v2482
  %s2488 = scalar_lea.vmem %s0, 771
  %s2489 = smov 192
  %v2490 = vld [vmem:[%s2488] ss:$16 sm:%s2489]
  %vm2491 = vcmask 1047558
  %v2492 = vsel %vm2491, %v2490, %v2487
  %2493 = vrot.lane.b32.xlu0 %v2492, 24
  %v2494 = vpop.permute.xlu0 %2493
  %vm2495 = vcmask 261312
  %s2496 = scalar_lea.vmem %s1, 48
  %2497 = vst.msk [vmem:[%s2496] sm:$0xff] %vm2495, %v2494
  %s2498 = scalar_lea.vmem %s0, 387
  %s2499 = smov 3
  %v2500 = vld [vmem:[%s2498] ss:$16 sm:%s2499]
  %s2501 = scalar_lea.vmem %s0, 387
  %s2502 = smov 12
  %v2503 = vld [vmem:[%s2501] ss:$16 sm:%s2502]
  %vm2504 = vcmask 1043458
  %v2505 = vsel %vm2504, %v2503, %v2500
  %s2506 = scalar_lea.vmem %s0, 387
  %s2507 = smov 48
  %v2508 = vld [vmem:[%s2506] ss:$16 sm:%s2507]
  %vm2509 = vcmask 1045508
  %v2510 = vsel %vm2509, %v2508, %v2505
  %s2511 = scalar_lea.vmem %s0, 387
  %s2512 = smov 192
  %v2513 = vld [vmem:[%s2511] ss:$16 sm:%s2512]
  %vm2514 = vcmask 1047558
  %v2515 = vsel %vm2514, %v2513, %v2510
  %2516 = vrot.lane.b32.xlu0 %v2515, 24
  %v2517 = vpop.permute.xlu0 %2516
  %vm2518 = vcmask 261312
  %s2519 = scalar_lea.vmem %s1, 24
  %2520 = vst.msk [vmem:[%s2519] sm:$0xff] %vm2518, %v2517
  %s2521 = scalar_lea.vmem %s0, 899
  %s2522 = smov 3
  %v2523 = vld [vmem:[%s2521] ss:$16 sm:%s2522]
  %s2524 = scalar_lea.vmem %s0, 899
  %s2525 = smov 12
  %v2526 = vld [vmem:[%s2524] ss:$16 sm:%s2525]
  %vm2527 = vcmask 1043458
  %v2528 = vsel %vm2527, %v2526, %v2523
  %s2529 = scalar_lea.vmem %s0, 899
  %s2530 = smov 48
  %v2531 = vld [vmem:[%s2529] ss:$16 sm:%s2530]
  %vm2532 = vcmask 1045508
  %v2533 = vsel %vm2532, %v2531, %v2528
  %s2534 = scalar_lea.vmem %s0, 899
  %s2535 = smov 192
  %v2536 = vld [vmem:[%s2534] ss:$16 sm:%s2535]
  %vm2537 = vcmask 1047558
  %v2538 = vsel %vm2537, %v2536, %v2533
  %2539 = vrot.lane.b32.xlu0 %v2538, 24
  %v2540 = vpop.permute.xlu0 %2539
  %vm2541 = vcmask 261312
  %s2542 = scalar_lea.vmem %s1, 56
  %2543 = vst.msk [vmem:[%s2542] sm:$0xff] %vm2541, %v2540
  %s2544 = scalar_lea.vmem %s0, 2
  %s2545 = smov 3
  %v2546 = vld [vmem:[%s2544] ss:$16 sm:%s2545]
  %s2547 = scalar_lea.vmem %s0, 2
  %s2548 = smov 12
  %v2549 = vld [vmem:[%s2547] ss:$16 sm:%s2548]
  %vm2550 = vcmask 1043458
  %v2551 = vsel %vm2550, %v2549, %v2546
  %s2552 = scalar_lea.vmem %s0, 2
  %s2553 = smov 48
  %v2554 = vld [vmem:[%s2552] ss:$16 sm:%s2553]
  %vm2555 = vcmask 1045508
  %v2556 = vsel %vm2555, %v2554, %v2551
  %s2557 = scalar_lea.vmem %s0, 2
  %s2558 = smov 192
  %v2559 = vld [vmem:[%s2557] ss:$16 sm:%s2558]
  %vm2560 = vcmask 1047558
  %v2561 = vsel %vm2560, %v2559, %v2556
  %2562 = vrot.lane.b32.xlu0 %v2561, 16
  %v2563 = vpop.permute.xlu0 %2562
  %vm2564 = vcmask 195712
  %2565 = vst.msk [vmem:[%s1] sm:$0xff] %vm2564, %v2563
  %s2566 = scalar_lea.vmem %s0, 514
  %s2567 = smov 3
  %v2568 = vld [vmem:[%s2566] ss:$16 sm:%s2567]
  %s2569 = scalar_lea.vmem %s0, 514
  %s2570 = smov 12
  %v2571 = vld [vmem:[%s2569] ss:$16 sm:%s2570]
  %vm2572 = vcmask 1043458
  %v2573 = vsel %vm2572, %v2571, %v2568
  %s2574 = scalar_lea.vmem %s0, 514
  %s2575 = smov 48
  %v2576 = vld [vmem:[%s2574] ss:$16 sm:%s2575]
  %vm2577 = vcmask 1045508
  %v2578 = vsel %vm2577, %v2576, %v2573
  %s2579 = scalar_lea.vmem %s0, 514
  %s2580 = smov 192
  %v2581 = vld [vmem:[%s2579] ss:$16 sm:%s2580]
  %vm2582 = vcmask 1047558
  %v2583 = vsel %vm2582, %v2581, %v2578
  %2584 = vrot.lane.b32.xlu0 %v2583, 16
  %v2585 = vpop.permute.xlu0 %2584
  %vm2586 = vcmask 195712
  %s2587 = scalar_lea.vmem %s1, 32
  %2588 = vst.msk [vmem:[%s2587] sm:$0xff] %vm2586, %v2585
  %s2589 = scalar_lea.vmem %s0, 130
  %s2590 = smov 3
  %v2591 = vld [vmem:[%s2589] ss:$16 sm:%s2590]
  %s2592 = scalar_lea.vmem %s0, 130
  %s2593 = smov 12
  %v2594 = vld [vmem:[%s2592] ss:$16 sm:%s2593]
  %vm2595 = vcmask 1043458
  %v2596 = vsel %vm2595, %v2594, %v2591
  %s2597 = scalar_lea.vmem %s0, 130
  %s2598 = smov 48
  %v2599 = vld [vmem:[%s2597] ss:$16 sm:%s2598]
  %vm2600 = vcmask 1045508
  %v2601 = vsel %vm2600, %v2599, %v2596
  %s2602 = scalar_lea.vmem %s0, 130
  %s2603 = smov 192
  %v2604 = vld [vmem:[%s2602] ss:$16 sm:%s2603]
  %vm2605 = vcmask 1047558
  %v2606 = vsel %vm2605, %v2604, %v2601
  %2607 = vrot.lane.b32.xlu0 %v2606, 16
  %v2608 = vpop.permute.xlu0 %2607
  %vm2609 = vcmask 195712
  %s2610 = scalar_lea.vmem %s1, 8
  %2611 = vst.msk [vmem:[%s2610] sm:$0xff] %vm2609, %v2608
  %s2612 = scalar_lea.vmem %s0, 642
  %s2613 = smov 3
  %v2614 = vld [vmem:[%s2612] ss:$16 sm:%s2613]
  %s2615 = scalar_lea.vmem %s0, 642
  %s2616 = smov 12
  %v2617 = vld [vmem:[%s2615] ss:$16 sm:%s2616]
  %vm2618 = vcmask 1043458
  %v2619 = vsel %vm2618, %v2617, %v2614
  %s2620 = scalar_lea.vmem %s0, 642
  %s2621 = smov 48
  %v2622 = vld [vmem:[%s2620] ss:$16 sm:%s2621]
  %vm2623 = vcmask 1045508
  %v2624 = vsel %vm2623, %v2622, %v2619
  %s2625 = scalar_lea.vmem %s0, 642
  %s2626 = smov 192
  %v2627 = vld [vmem:[%s2625] ss:$16 sm:%s2626]
  %vm2628 = vcmask 1047558
  %v2629 = vsel %vm2628, %v2627, %v2624
  %2630 = vrot.lane.b32.xlu0 %v2629, 16
  %v2631 = vpop.permute.xlu0 %2630
  %vm2632 = vcmask 195712
  %s2633 = scalar_lea.vmem %s1, 40
  %2634 = vst.msk [vmem:[%s2633] sm:$0xff] %vm2632, %v2631
  %s2635 = scalar_lea.vmem %s0, 258
  %s2636 = smov 3
  %v2637 = vld [vmem:[%s2635] ss:$16 sm:%s2636]
  %s2638 = scalar_lea.vmem %s0, 258
  %s2639 = smov 12
  %v2640 = vld [vmem:[%s2638] ss:$16 sm:%s2639]
  %vm2641 = vcmask 1043458
  %v2642 = vsel %vm2641, %v2640, %v2637
  %s2643 = scalar_lea.vmem %s0, 258
  %s2644 = smov 48
  %v2645 = vld [vmem:[%s2643] ss:$16 sm:%s2644]
  %vm2646 = vcmask 1045508
  %v2647 = vsel %vm2646, %v2645, %v2642
  %s2648 = scalar_lea.vmem %s0, 258
  %s2649 = smov 192
  %v2650 = vld [vmem:[%s2648] ss:$16 sm:%s2649]
  %vm2651 = vcmask 1047558
  %v2652 = vsel %vm2651, %v2650, %v2647
  %2653 = vrot.lane.b32.xlu0 %v2652, 16
  %v2654 = vpop.permute.xlu0 %2653
  %vm2655 = vcmask 195712
  %s2656 = scalar_lea.vmem %s1, 16
  %2657 = vst.msk [vmem:[%s2656] sm:$0xff] %vm2655, %v2654
  %s2658 = scalar_lea.vmem %s0, 770
  %s2659 = smov 3
  %v2660 = vld [vmem:[%s2658] ss:$16 sm:%s2659]
  %s2661 = scalar_lea.vmem %s0, 770
  %s2662 = smov 12
  %v2663 = vld [vmem:[%s2661] ss:$16 sm:%s2662]
  %vm2664 = vcmask 1043458
  %v2665 = vsel %vm2664, %v2663, %v2660
  %s2666 = scalar_lea.vmem %s0, 770
  %s2667 = smov 48
  %v2668 = vld [vmem:[%s2666] ss:$16 sm:%s2667]
  %vm2669 = vcmask 1045508
  %v2670 = vsel %vm2669, %v2668, %v2665
  %s2671 = scalar_lea.vmem %s0, 770
  %s2672 = smov 192
  %v2673 = vld [vmem:[%s2671] ss:$16 sm:%s2672]
  %vm2674 = vcmask 1047558
  %v2675 = vsel %vm2674, %v2673, %v2670
  %2676 = vrot.lane.b32.xlu0 %v2675, 16
  %v2677 = vpop.permute.xlu0 %2676
  %vm2678 = vcmask 195712
  %s2679 = scalar_lea.vmem %s1, 48
  %2680 = vst.msk [vmem:[%s2679] sm:$0xff] %vm2678, %v2677
  %s2681 = scalar_lea.vmem %s0, 386
  %s2682 = smov 3
  %v2683 = vld [vmem:[%s2681] ss:$16 sm:%s2682]
  %s2684 = scalar_lea.vmem %s0, 386
  %s2685 = smov 12
  %v2686 = vld [vmem:[%s2684] ss:$16 sm:%s2685]
  %vm2687 = vcmask 1043458
  %v2688 = vsel %vm2687, %v2686, %v2683
  %s2689 = scalar_lea.vmem %s0, 386
  %s2690 = smov 48
  %v2691 = vld [vmem:[%s2689] ss:$16 sm:%s2690]
  %vm2692 = vcmask 1045508
  %v2693 = vsel %vm2692, %v2691, %v2688
  %s2694 = scalar_lea.vmem %s0, 386
  %s2695 = smov 192
  %v2696 = vld [vmem:[%s2694] ss:$16 sm:%s2695]
  %vm2697 = vcmask 1047558
  %v2698 = vsel %vm2697, %v2696, %v2693
  %2699 = vrot.lane.b32.xlu0 %v2698, 16
  %v2700 = vpop.permute.xlu0 %2699
  %vm2701 = vcmask 195712
  %s2702 = scalar_lea.vmem %s1, 24
  %2703 = vst.msk [vmem:[%s2702] sm:$0xff] %vm2701, %v2700
  %s2704 = scalar_lea.vmem %s0, 898
  %s2705 = smov 3
  %v2706 = vld [vmem:[%s2704] ss:$16 sm:%s2705]
  %s2707 = scalar_lea.vmem %s0, 898
  %s2708 = smov 12
  %v2709 = vld [vmem:[%s2707] ss:$16 sm:%s2708]
  %vm2710 = vcmask 1043458
  %v2711 = vsel %vm2710, %v2709, %v2706
  %s2712 = scalar_lea.vmem %s0, 898
  %s2713 = smov 48
  %v2714 = vld [vmem:[%s2712] ss:$16 sm:%s2713]
  %vm2715 = vcmask 1045508
  %v2716 = vsel %vm2715, %v2714, %v2711
  %s2717 = scalar_lea.vmem %s0, 898
  %s2718 = smov 192
  %v2719 = vld [vmem:[%s2717] ss:$16 sm:%s2718]
  %vm2720 = vcmask 1047558
  %v2721 = vsel %vm2720, %v2719, %v2716
  %2722 = vrot.lane.b32.xlu0 %v2721, 16
  %v2723 = vpop.permute.xlu0 %2722
  %vm2724 = vcmask 195712
  %s2725 = scalar_lea.vmem %s1, 56
  %2726 = vst.msk [vmem:[%s2725] sm:$0xff] %vm2724, %v2723
  %s2727 = scalar_lea.vmem %s0, 1
  %s2728 = smov 3
  %v2729 = vld [vmem:[%s2727] ss:$16 sm:%s2728]
  %s2730 = scalar_lea.vmem %s0, 1
  %s2731 = smov 12
  %v2732 = vld [vmem:[%s2730] ss:$16 sm:%s2731]
  %vm2733 = vcmask 1043458
  %v2734 = vsel %vm2733, %v2732, %v2729
  %s2735 = scalar_lea.vmem %s0, 1
  %s2736 = smov 48
  %v2737 = vld [vmem:[%s2735] ss:$16 sm:%s2736]
  %vm2738 = vcmask 1045508
  %v2739 = vsel %vm2738, %v2737, %v2734
  %s2740 = scalar_lea.vmem %s0, 1
  %s2741 = smov 192
  %v2742 = vld [vmem:[%s2740] ss:$16 sm:%s2741]
  %vm2743 = vcmask 1047558
  %v2744 = vsel %vm2743, %v2742, %v2739
  %2745 = vrot.lane.b32.xlu0 %v2744, 8
  %v2746 = vpop.permute.xlu0 %2745
  %vm2747 = vcmask 130112
  %2748 = vst.msk [vmem:[%s1] sm:$0xff] %vm2747, %v2746
  %s2749 = scalar_lea.vmem %s0, 513
  %s2750 = smov 3
  %v2751 = vld [vmem:[%s2749] ss:$16 sm:%s2750]
  %s2752 = scalar_lea.vmem %s0, 513
  %s2753 = smov 12
  %v2754 = vld [vmem:[%s2752] ss:$16 sm:%s2753]
  %vm2755 = vcmask 1043458
  %v2756 = vsel %vm2755, %v2754, %v2751
  %s2757 = scalar_lea.vmem %s0, 513
  %s2758 = smov 48
  %v2759 = vld [vmem:[%s2757] ss:$16 sm:%s2758]
  %vm2760 = vcmask 1045508
  %v2761 = vsel %vm2760, %v2759, %v2756
  %s2762 = scalar_lea.vmem %s0, 513
  %s2763 = smov 192
  %v2764 = vld [vmem:[%s2762] ss:$16 sm:%s2763]
  %vm2765 = vcmask 1047558
  %v2766 = vsel %vm2765, %v2764, %v2761
  %2767 = vrot.lane.b32.xlu0 %v2766, 8
  %v2768 = vpop.permute.xlu0 %2767
  %vm2769 = vcmask 130112
  %s2770 = scalar_lea.vmem %s1, 32
  %2771 = vst.msk [vmem:[%s2770] sm:$0xff] %vm2769, %v2768
  %s2772 = scalar_lea.vmem %s0, 129
  %s2773 = smov 3
  %v2774 = vld [vmem:[%s2772] ss:$16 sm:%s2773]
  %s2775 = scalar_lea.vmem %s0, 129
  %s2776 = smov 12
  %v2777 = vld [vmem:[%s2775] ss:$16 sm:%s2776]
  %vm2778 = vcmask 1043458
  %v2779 = vsel %vm2778, %v2777, %v2774
  %s2780 = scalar_lea.vmem %s0, 129
  %s2781 = smov 48
  %v2782 = vld [vmem:[%s2780] ss:$16 sm:%s2781]
  %vm2783 = vcmask 1045508
  %v2784 = vsel %vm2783, %v2782, %v2779
  %s2785 = scalar_lea.vmem %s0, 129
  %s2786 = smov 192
  %v2787 = vld [vmem:[%s2785] ss:$16 sm:%s2786]
  %vm2788 = vcmask 1047558
  %v2789 = vsel %vm2788, %v2787, %v2784
  %2790 = vrot.lane.b32.xlu0 %v2789, 8
  %v2791 = vpop.permute.xlu0 %2790
  %vm2792 = vcmask 130112
  %s2793 = scalar_lea.vmem %s1, 8
  %2794 = vst.msk [vmem:[%s2793] sm:$0xff] %vm2792, %v2791
  %s2795 = scalar_lea.vmem %s0, 641
  %s2796 = smov 3
  %v2797 = vld [vmem:[%s2795] ss:$16 sm:%s2796]
  %s2798 = scalar_lea.vmem %s0, 641
  %s2799 = smov 12
  %v2800 = vld [vmem:[%s2798] ss:$16 sm:%s2799]
  %vm2801 = vcmask 1043458
  %v2802 = vsel %vm2801, %v2800, %v2797
  %s2803 = scalar_lea.vmem %s0, 641
  %s2804 = smov 48
  %v2805 = vld [vmem:[%s2803] ss:$16 sm:%s2804]
  %vm2806 = vcmask 1045508
  %v2807 = vsel %vm2806, %v2805, %v2802
  %s2808 = scalar_lea.vmem %s0, 641
  %s2809 = smov 192
  %v2810 = vld [vmem:[%s2808] ss:$16 sm:%s2809]
  %vm2811 = vcmask 1047558
  %v2812 = vsel %vm2811, %v2810, %v2807
  %2813 = vrot.lane.b32.xlu0 %v2812, 8
  %v2814 = vpop.permute.xlu0 %2813
  %vm2815 = vcmask 130112
  %s2816 = scalar_lea.vmem %s1, 40
  %2817 = vst.msk [vmem:[%s2816] sm:$0xff] %vm2815, %v2814
  %s2818 = scalar_lea.vmem %s0, 257
  %s2819 = smov 3
  %v2820 = vld [vmem:[%s2818] ss:$16 sm:%s2819]
  %s2821 = scalar_lea.vmem %s0, 257
  %s2822 = smov 12
  %v2823 = vld [vmem:[%s2821] ss:$16 sm:%s2822]
  %vm2824 = vcmask 1043458
  %v2825 = vsel %vm2824, %v2823, %v2820
  %s2826 = scalar_lea.vmem %s0, 257
  %s2827 = smov 48
  %v2828 = vld [vmem:[%s2826] ss:$16 sm:%s2827]
  %vm2829 = vcmask 1045508
  %v2830 = vsel %vm2829, %v2828, %v2825
  %s2831 = scalar_lea.vmem %s0, 257
  %s2832 = smov 192
  %v2833 = vld [vmem:[%s2831] ss:$16 sm:%s2832]
  %vm2834 = vcmask 1047558
  %v2835 = vsel %vm2834, %v2833, %v2830
  %2836 = vrot.lane.b32.xlu0 %v2835, 8
  %v2837 = vpop.permute.xlu0 %2836
  %vm2838 = vcmask 130112
  %s2839 = scalar_lea.vmem %s1, 16
  %2840 = vst.msk [vmem:[%s2839] sm:$0xff] %vm2838, %v2837
  %s2841 = scalar_lea.vmem %s0, 769
  %s2842 = smov 3
  %v2843 = vld [vmem:[%s2841] ss:$16 sm:%s2842]
  %s2844 = scalar_lea.vmem %s0, 769
  %s2845 = smov 12
  %v2846 = vld [vmem:[%s2844] ss:$16 sm:%s2845]
  %vm2847 = vcmask 1043458
  %v2848 = vsel %vm2847, %v2846, %v2843
  %s2849 = scalar_lea.vmem %s0, 769
  %s2850 = smov 48
  %v2851 = vld [vmem:[%s2849] ss:$16 sm:%s2850]
  %vm2852 = vcmask 1045508
  %v2853 = vsel %vm2852, %v2851, %v2848
  %s2854 = scalar_lea.vmem %s0, 769
  %s2855 = smov 192
  %v2856 = vld [vmem:[%s2854] ss:$16 sm:%s2855]
  %vm2857 = vcmask 1047558
  %v2858 = vsel %vm2857, %v2856, %v2853
  %2859 = vrot.lane.b32.xlu0 %v2858, 8
  %v2860 = vpop.permute.xlu0 %2859
  %vm2861 = vcmask 130112
  %s2862 = scalar_lea.vmem %s1, 48
  %2863 = vst.msk [vmem:[%s2862] sm:$0xff] %vm2861, %v2860
  %s2864 = scalar_lea.vmem %s0, 385
  %s2865 = smov 3
  %v2866 = vld [vmem:[%s2864] ss:$16 sm:%s2865]
  %s2867 = scalar_lea.vmem %s0, 385
  %s2868 = smov 12
  %v2869 = vld [vmem:[%s2867] ss:$16 sm:%s2868]
  %vm2870 = vcmask 1043458
  %v2871 = vsel %vm2870, %v2869, %v2866
  %s2872 = scalar_lea.vmem %s0, 385
  %s2873 = smov 48
  %v2874 = vld [vmem:[%s2872] ss:$16 sm:%s2873]
  %vm2875 = vcmask 1045508
  %v2876 = vsel %vm2875, %v2874, %v2871
  %s2877 = scalar_lea.vmem %s0, 385
  %s2878 = smov 192
  %v2879 = vld [vmem:[%s2877] ss:$16 sm:%s2878]
  %vm2880 = vcmask 1047558
  %v2881 = vsel %vm2880, %v2879, %v2876
  %2882 = vrot.lane.b32.xlu0 %v2881, 8
  %v2883 = vpop.permute.xlu0 %2882
  %vm2884 = vcmask 130112
  %s2885 = scalar_lea.vmem %s1, 24
  %2886 = vst.msk [vmem:[%s2885] sm:$0xff] %vm2884, %v2883
  %s2887 = scalar_lea.vmem %s0, 897
  %s2888 = smov 3
  %v2889 = vld [vmem:[%s2887] ss:$16 sm:%s2888]
  %s2890 = scalar_lea.vmem %s0, 897
  %s2891 = smov 12
  %v2892 = vld [vmem:[%s2890] ss:$16 sm:%s2891]
  %vm2893 = vcmask 1043458
  %v2894 = vsel %vm2893, %v2892, %v2889
  %s2895 = scalar_lea.vmem %s0, 897
  %s2896 = smov 48
  %v2897 = vld [vmem:[%s2895] ss:$16 sm:%s2896]
  %vm2898 = vcmask 1045508
  %v2899 = vsel %vm2898, %v2897, %v2894
  %s2900 = scalar_lea.vmem %s0, 897
  %s2901 = smov 192
  %v2902 = vld [vmem:[%s2900] ss:$16 sm:%s2901]
  %vm2903 = vcmask 1047558
  %v2904 = vsel %vm2903, %v2902, %v2899
  %2905 = vrot.lane.b32.xlu0 %v2904, 8
  %v2906 = vpop.permute.xlu0 %2905
  %vm2907 = vcmask 130112
  %s2908 = scalar_lea.vmem %s1, 56
  %2909 = vst.msk [vmem:[%s2908] sm:$0xff] %vm2907, %v2906

// kernel: tile.232
$region0: #{tile.232}
  #allocation0 [shape = 's32[1]{0}', space=sflag, size = 0x4, scoped, tag = 'scoped memory for tile.232']
  %s0 = inlined_call_operand.vmem [shape: f32[16], index: 0, kind: input, shape index: {}]
  %s1 = inlined_call_operand.vmem [shape: f32[32,16], index: 1, kind: output, shape index: {}]
  // Predicated region
  $region2: #{tile.232} parent=0 // pred_check
    _
  $region3: #{tile.232} parent=0 // pred_check_branch
    %3 = sbr.rel (0) target = $region5
  $region4: #{tile.232} parent=0 // pred_region
    _
  $region5: #{tile.232} parent=0 // pred_fallthru
    _
  %v4 = vld [vmem:[%s0] ss:$0 sm:$0xff]
  %5 = vst [vmem:[%s1] sm:$0xff] %v4
  %s6 = scalar_lea.vmem %s1, 8
  %7 = vst [vmem:[%s6] sm:$0xff] %v4
  %s8 = scalar_lea.vmem %s1, 16
  %9 = vst [vmem:[%s8] sm:$0xff] %v4
  %s10 = scalar_lea.vmem %s1, 24
  %11 = vst [vmem:[%s10] sm:$0xff] %v4

// kernel: tile.241
$region0: #{tile.241}
  %s0 = inlined_call_operand.vmem [shape: f32[32,16], index: 0, kind: input, shape index: {}]
  %s1 = inlined_call_operand.vmem [shape: f32[1,512], index: 1, kind: output, shape index: {}]
  $region1: #{tile.241} parent=0
    #allocation0 [shape = 'u8[16384]{0}', space=vmem, size = 0x4000, scoped, tag = 'scoped mem for output reshape']
    %v2 = vld [vmem:[%s0] ss:$8 sm:$0xf]
    %vm3 = vcmask 130048
    %4 = vst.msk [vmem:[#allocation0] ss:$8 sm:$0xf] %vm3, %v2
    %s5 = scalar_lea.vmem %s0, 7
    %v6 = vld [vmem:[%s5] ss:$8 sm:$0xf]
    %7 = vrot.lane.b32.xlu0 %v6, 112
    %v8 = vpop.permute.xlu0 %7
    %vm9 = vcmask 1048448
    %10 = vst.msk [vmem:[#allocation0] ss:$8 sm:$0xf] %vm9, %v8
    %s11 = scalar_lea.vmem %s0, 6
    %v12 = vld [vmem:[%s11] ss:$8 sm:$0xf]
    %13 = vrot.lane.b32.xlu0 %v12, 96
    %v14 = vpop.permute.xlu0 %13
    %vm15 = vcmask 917248
    %16 = vst.msk [vmem:[#allocation0] ss:$8 sm:$0xf] %vm15, %v14
    %s17 = scalar_lea.vmem %s0, 5
    %v18 = vld [vmem:[%s17] ss:$8 sm:$0xf]
    %19 = vrot.lane.b32.xlu0 %v18, 80
    %v20 = vpop.permute.xlu0 %19
    %vm21 = vcmask 786048
    %22 = vst.msk [vmem:[#allocation0] ss:$8 sm:$0xf] %vm21, %v20
    %s23 = scalar_lea.vmem %s0, 4
    %v24 = vld [vmem:[%s23] ss:$8 sm:$0xf]
    %25 = vrot.lane.b32.xlu0 %v24, 64
    %v26 = vpop.permute.xlu0 %25
    %vm27 = vcmask 654848
    %28 = vst.msk [vmem:[#allocation0] ss:$8 sm:$0xf] %vm27, %v26
    %s29 = scalar_lea.vmem %s0, 3
    %v30 = vld [vmem:[%s29] ss:$8 sm:$0xf]
    %31 = vrot.lane.b32.xlu0 %v30, 48
    %v32 = vpop.permute.xlu0 %31
    %vm33 = vcmask 523648
    %34 = vst.msk [vmem:[#allocation0] ss:$8 sm:$0xf] %vm33, %v32
    %s35 = scalar_lea.vmem %s0, 2
    %v36 = vld [vmem:[%s35] ss:$8 sm:$0xf]
    %37 = vrot.lane.b32.xlu0 %v36, 32
    %v38 = vpop.permute.xlu0 %37
    %vm39 = vcmask 392448
    %40 = vst.msk [vmem:[#allocation0] ss:$8 sm:$0xf] %vm39, %v38
    %s41 = scalar_lea.vmem %s0, 1
    %v42 = vld [vmem:[%s41] ss:$8 sm:$0xf]
    %43 = vrot.lane.b32.xlu0 %v42, 16
    %v44 = vpop.permute.xlu0 %43
    %vm45 = vcmask 261248
    %46 = vst.msk [vmem:[#allocation0] ss:$8 sm:$0xf] %vm45, %v44
    %s48 = sshllo.u32 0, 1
    %v50 = vld [vmem:[#allocation0] sm:%s48]
    %s51 = sshllo.u32 0, 1
    %52 = vst [vmem:[%s1] sm:%s51] %v50
    %s53 = scalar_lea.vmem [#allocation0], 8
    %v54 = vld [vmem:[%s53] sm:%s48]
    %s55 = sshllo.u32 0, 1
    %s56 = scalar_lea.vmem %s1, 1
    %57 = vst [vmem:[%s56] sm:%s55] %v54
    %s58 = scalar_lea.vmem [#allocation0], 16
    %v59 = vld [vmem:[%s58] sm:%s48]
    %s60 = sshllo.u32 0, 1
    %s61 = smul.addr 1, 2
    %s62 = scalar_lea.vmem %s1, %s61
    %63 = vst [vmem:[%s62] sm:%s60] %v59
    %s64 = scalar_lea.vmem [#allocation0], 24
    %v65 = vld [vmem:[%s64] sm:%s48]
    %s66 = sshllo.u32 0, 1
    %s67 = smul.addr 1, 3
    %s68 = scalar_lea.vmem %s1, %s67
    %69 = vst [vmem:[%s68] sm:%s66] %v65

// kernel: tile.247
$region0: #{tile.247}
  #allocation0 [shape = 's32[1]{0}', space=sflag, size = 0x4, scoped, tag = 'scoped memory for tile.247']
  %s0 = inlined_call_operand.vmem [shape: f32[8], index: 0, kind: input, shape index: {}]
  %s1 = inlined_call_operand.vmem [shape: f32[32,8], index: 1, kind: output, shape index: {}]
  // Predicated region
  $region2: #{tile.247} parent=0 // pred_check
    _
  $region3: #{tile.247} parent=0 // pred_check_branch
    %3 = sbr.rel (0) target = $region5
  $region4: #{tile.247} parent=0 // pred_region
    _
  $region5: #{tile.247} parent=0 // pred_fallthru
    _
  %v4 = vld [vmem:[%s0] ss:$0 sm:$0xff]
  %5 = vst [vmem:[%s1] sm:$0xff] %v4
  %s6 = scalar_lea.vmem %s1, 8
  %7 = vst [vmem:[%s6] sm:$0xff] %v4
  %s8 = scalar_lea.vmem %s1, 16
  %9 = vst [vmem:[%s8] sm:$0xff] %v4
  %s10 = scalar_lea.vmem %s1, 24
  %11 = vst [vmem:[%s10] sm:$0xff] %v4

// kernel: tile.252
$region0: #{tile.252}
  %s0 = inlined_call_operand.vmem [shape: f32[32,8], index: 0, kind: input, shape index: {}]
  %s1 = inlined_call_operand.vmem [shape: f32[1,256], index: 1, kind: output, shape index: {}]
  $region1: #{tile.252} parent=0
    #allocation0 [shape = 'u8[8192]{0}', space=vmem, size = 0x2000, scoped, tag = 'scoped mem for output reshape']
    %s2 = smov 3
    %v3 = vld [vmem:[%s0] ss:$16 sm:%s2]
    %vm4 = vcmask 64512
    %5 = vst.msk [vmem:[#allocation0] ss:$8 sm:$0x3] %vm4, %v3
    %s6 = scalar_lea.vmem %s0, 15
    %s7 = smov 3
    %v8 = vld [vmem:[%s6] ss:$16 sm:%s7]
    %9 = vrot.lane.b32.xlu0 %v8, 120
    %v10 = vpop.permute.xlu0 %9
    %vm11 = vcmask 1048512
    %12 = vst.msk [vmem:[#allocation0] ss:$8 sm:$0x3] %vm11, %v10
    %s13 = scalar_lea.vmem %s0, 14
    %s14 = smov 3
    %v15 = vld [vmem:[%s13] ss:$16 sm:%s14]
    %16 = vrot.lane.b32.xlu0 %v15, 112
    %v17 = vpop.permute.xlu0 %16
    %vm18 = vcmask 982912
    %19 = vst.msk [vmem:[#allocation0] ss:$8 sm:$0x3] %vm18, %v17
    %s20 = scalar_lea.vmem %s0, 13
    %s21 = smov 3
    %v22 = vld [vmem:[%s20] ss:$16 sm:%s21]
    %23 = vrot.lane.b32.xlu0 %v22, 104
    %v24 = vpop.permute.xlu0 %23
    %vm25 = vcmask 917312
    %26 = vst.msk [vmem:[#allocation0] ss:$8 sm:$0x3] %vm25, %v24
    %s27 = scalar_lea.vmem %s0, 12
    %s28 = smov 3
    %v29 = vld [vmem:[%s27] ss:$16 sm:%s28]
    %30 = vrot.lane.b32.xlu0 %v29, 96
    %v31 = vpop.permute.xlu0 %30
    %vm32 = vcmask 851712
    %33 = vst.msk [vmem:[#allocation0] ss:$8 sm:$0x3] %vm32, %v31
    %s34 = scalar_lea.vmem %s0, 11
    %s35 = smov 3
    %v36 = vld [vmem:[%s34] ss:$16 sm:%s35]
    %37 = vrot.lane.b32.xlu0 %v36, 88
    %v38 = vpop.permute.xlu0 %37
    %vm39 = vcmask 786112
    %40 = vst.msk [vmem:[#allocation0] ss:$8 sm:$0x3] %vm39, %v38
    %s41 = scalar_lea.vmem %s0, 10
    %s42 = smov 3
    %v43 = vld [vmem:[%s41] ss:$16 sm:%s42]
    %44 = vrot.lane.b32.xlu0 %v43, 80
    %v45 = vpop.permute.xlu0 %44
    %vm46 = vcmask 720512
    %47 = vst.msk [vmem:[#allocation0] ss:$8 sm:$0x3] %vm46, %v45
    %s48 = scalar_lea.vmem %s0, 9
    %s49 = smov 3
    %v50 = vld [vmem:[%s48] ss:$16 sm:%s49]
    %51 = vrot.lane.b32.xlu0 %v50, 72
    %v52 = vpop.permute.xlu0 %51
    %vm53 = vcmask 654912
    %54 = vst.msk [vmem:[#allocation0] ss:$8 sm:$0x3] %vm53, %v52
    %s55 = scalar_lea.vmem %s0, 8
    %s56 = smov 3
    %v57 = vld [vmem:[%s55] ss:$16 sm:%s56]
    %58 = vrot.lane.b32.xlu0 %v57, 64
    %v59 = vpop.permute.xlu0 %58
    %vm60 = vcmask 589312
    %61 = vst.msk [vmem:[#allocation0] ss:$8 sm:$0x3] %vm60, %v59
    %s62 = scalar_lea.vmem %s0, 7
    %s63 = smov 3
    %v64 = vld [vmem:[%s62] ss:$16 sm:%s63]
    %65 = vrot.lane.b32.xlu0 %v64, 56
    %v66 = vpop.permute.xlu0 %65
    %vm67 = vcmask 523712
    %68 = vst.msk [vmem:[#allocation0] ss:$8 sm:$0x3] %vm67, %v66
    %s69 = scalar_lea.vmem %s0, 6
    %s70 = smov 3
    %v71 = vld [vmem:[%s69] ss:$16 sm:%s70]
    %72 = vrot.lane.b32.xlu0 %v71, 48
    %v73 = vpop.permute.xlu0 %72
    %vm74 = vcmask 458112
    %75 = vst.msk [vmem:[#allocation0] ss:$8 sm:$0x3] %vm74, %v73
    %s76 = scalar_lea.vmem %s0, 5
    %s77 = smov 3
    %v78 = vld [vmem:[%s76] ss:$16 sm:%s77]
    %79 = vrot.lane.b32.xlu0 %v78, 40
    %v80 = vpop.permute.xlu0 %79
    %vm81 = vcmask 392512
    %82 = vst.msk [vmem:[#allocation0] ss:$8 sm:$0x3] %vm81, %v80
    %s83 = scalar_lea.vmem %s0, 4
    %s84 = smov 3
    %v85 = vld [vmem:[%s83] ss:$16 sm:%s84]
    %86 = vrot.lane.b32.xlu0 %v85, 32
    %v87 = vpop.permute.xlu0 %86
    %vm88 = vcmask 326912
    %89 = vst.msk [vmem:[#allocation0] ss:$8 sm:$0x3] %vm88, %v87
    %s90 = scalar_lea.vmem %s0, 3
    %s91 = smov 3
    %v92 = vld [vmem:[%s90] ss:$16 sm:%s91]
    %93 = vrot.lane.b32.xlu0 %v92, 24
    %v94 = vpop.permute.xlu0 %93
    %vm95 = vcmask 261312
    %96 = vst.msk [vmem:[#allocation0] ss:$8 sm:$0x3] %vm95, %v94
    %s97 = scalar_lea.vmem %s0, 2
    %s98 = smov 3
    %v99 = vld [vmem:[%s97] ss:$16 sm:%s98]
    %100 = vrot.lane.b32.xlu0 %v99, 16
    %v101 = vpop.permute.xlu0 %100
    %vm102 = vcmask 195712
    %103 = vst.msk [vmem:[#allocation0] ss:$8 sm:$0x3] %vm102, %v101
    %s104 = scalar_lea.vmem %s0, 1
    %s105 = smov 3
    %v106 = vld [vmem:[%s104] ss:$16 sm:%s105]
    %107 = vrot.lane.b32.xlu0 %v106, 8
    %v108 = vpop.permute.xlu0 %107
    %vm109 = vcmask 130112
    %110 = vst.msk [vmem:[#allocation0] ss:$8 sm:$0x3] %vm109, %v108
    %s112 = sshllo.u32 0, 1
    %v114 = vld [vmem:[#allocation0] sm:%s112]
    %s115 = sshllo.u32 0, 1
    %116 = vst [vmem:[%s1] sm:%s115] %v114
    %s117 = scalar_lea.vmem [#allocation0], 8
    %v118 = vld [vmem:[%s117] sm:%s112]
    %s119 = sshllo.u32 0, 1
    %s120 = scalar_lea.vmem %s1, 1
    %121 = vst [vmem:[%s120] sm:%s119] %v118

// kernel: cmunext_block_forward.1
$region0: #{cmunext_block_forward.1}
  #allocation0 [shape = 'u32[]', space=smem, size = 0x4, offset = 0x4, fixed_abs, tag = 'smem constant byte address 0x4 - core index']
  #allocation1 [shape = 'u32[144,128]{1,0:T(1,128)}', space=vmem, size = 0x12000, scoped, tag = 'internal scratch']
  %s0 = inlined_call_operand.vmem [shape: f32[16,128], index: 0, kind: input, shape index: {}]
  %s1 = inlined_call_operand.vmem [shape: f32[3,16,1], index: 1, kind: input, shape index: {}]
  %s2 = inlined_call_operand.vmem [shape: f32[9,1,128], index: 2, kind: input, shape index: {}]
  %s3 = inlined_call_operand.vmem [shape: f32[6,128], index: 3, kind: input, shape index: {}]
  %s4 = inlined_call_operand.vmem [shape: f32[3,512], index: 4, kind: input, shape index: {}]
  %s5 = inlined_call_operand.vmem [shape: f32[2,256], index: 5, kind: input, shape index: {}]
  %s6 = inlined_call_operand.vmem [shape: bf16[128,512], index: 6, kind: input, shape index: {}]
  %s7 = inlined_call_operand.vmem [shape: bf16[512,128], index: 7, kind: input, shape index: {}]
  %s8 = inlined_call_operand.vmem [shape: bf16[3,128,256], index: 8, kind: input, shape index: {}]
  %s9 = inlined_call_operand.vmem [shape: f32[16,256], index: 9, kind: output, shape index: {}]
  %s10 = sld [smem:[#allocation0]]
  $region46: #{cmunext_block_forward.1} parent=0
    _
  %s12 = ssub.s32 1, %s10
  %s13 = scalar_select 0, %s12, %s10
  // Predicated region
  $region2: #{cmunext_block_forward.1} parent=0 // pred_check
    _
  $region3: #{cmunext_block_forward.1} parent=0 // pred_check_branch
    %15 = sbr.rel (0) target = $region5
  $region4: #{cmunext_block_forward.1} parent=0 // pred_region
    _
  $region5: #{cmunext_block_forward.1} parent=0 // pred_fallthru
    _
  // Predicated region
  $region6: #{cmunext_block_forward.1} parent=0 // pred_check
    _
  $region7: #{cmunext_block_forward.1} parent=0 // pred_check_branch
    %17 = sbr.rel (0) target = $region9
  $region8: #{cmunext_block_forward.1} parent=0 // pred_region
    _
  $region9: #{cmunext_block_forward.1} parent=0 // pred_fallthru
    _
  // Predicated region
  $region10: #{cmunext_block_forward.1} parent=0 // pred_check
    _
  $region11: #{cmunext_block_forward.1} parent=0 // pred_check_branch
    %19 = sbr.rel (0) target = $region13
  $region12: #{cmunext_block_forward.1} parent=0 // pred_region
    _
  $region13: #{cmunext_block_forward.1} parent=0 // pred_fallthru
    _
  // Predicated region
  $region14: #{cmunext_block_forward.1} parent=0 // pred_check
    _
  $region15: #{cmunext_block_forward.1} parent=0 // pred_check_branch
    %21 = sbr.rel (0) target = $region17
  $region16: #{cmunext_block_forward.1} parent=0 // pred_region
    _
  $region17: #{cmunext_block_forward.1} parent=0 // pred_fallthru
    _
  // Predicated region
  $region18: #{cmunext_block_forward.1} parent=0 // pred_check
    _
  $region19: #{cmunext_block_forward.1} parent=0 // pred_check_branch
    %23 = sbr.rel (0) target = $region21
  $region20: #{cmunext_block_forward.1} parent=0 // pred_region
    _
  $region21: #{cmunext_block_forward.1} parent=0 // pred_fallthru
    _
  // Predicated region
  $region22: #{cmunext_block_forward.1} parent=0 // pred_check
    _
  $region23: #{cmunext_block_forward.1} parent=0 // pred_check_branch
    %25 = sbr.rel (0) target = $region25
  $region24: #{cmunext_block_forward.1} parent=0 // pred_region
    _
  $region25: #{cmunext_block_forward.1} parent=0 // pred_fallthru
    _
  // Predicated region
  $region26: #{cmunext_block_forward.1} parent=0 // pred_check
    _
  $region27: #{cmunext_block_forward.1} parent=0 // pred_check_branch
    %27 = sbr.rel (0) target = $region29
  $region28: #{cmunext_block_forward.1} parent=0 // pred_region
    _
  $region29: #{cmunext_block_forward.1} parent=0 // pred_fallthru
    _
  // Predicated region
  $region30: #{cmunext_block_forward.1} parent=0 // pred_check
    _
  $region31: #{cmunext_block_forward.1} parent=0 // pred_check_branch
    %29 = sbr.rel (0) target = $region33
  $region32: #{cmunext_block_forward.1} parent=0 // pred_region
    _
  $region33: #{cmunext_block_forward.1} parent=0 // pred_fallthru
    _
  // Predicated region
  $region34: #{cmunext_block_forward.1} parent=0 // pred_check
    _
  $region35: #{cmunext_block_forward.1} parent=0 // pred_check_branch
    %31 = sbr.rel (0) target = $region37
  $region36: #{cmunext_block_forward.1} parent=0 // pred_region
    _
  $region37: #{cmunext_block_forward.1} parent=0 // pred_fallthru
    _
  %v33 = vlaneseq
  %v34 = vand.u32 %v33, 127
  %v35 = vlaneseq
  %v36 = vshrl.u32 %v35, 7
  %vm37 = vcmp.lt.s32.totalorder %v34, 0
  %v38 = vsub.s32 0, %v34
  %v39 = vsel %vm37, %v38, %v34
  %v40 = vshrl.u32 %v39, 2
  %v41 = vand.u32 %v39, 3
  %v42 = vsub.s32 0, %v41
  %v43 = vsel %vm37, %v42, %v41
  %vm44 = vcmp.ne.s32.totalorder %v43, 0
  %vm45 = vcmp.lt.s32.totalorder %v43, 0
  %vm46 = vmand %vm45, %vm44
  %v47 = vadd.s32 %v43, 4
  %v48 = vsel %vm46, %v47, %v43
  %vm49 = vcmp.eq.s32.totalorder %v48, %v36
  %v50 = vsel %vm49, 1, 0
  %v51 = vcvt.s32.f32 %v50
  %v52 = vadd.s32 %v34, 128
  %v53 = vadd.s32 %v34, 256
  %v54 = vadd.s32 %v34, 384
  %v55 = vadd.s32 %v36, 8
  %vm56 = vcmp.lt.s32.totalorder %v34, 0
  %v57 = vsub.s32 0, %v34
  %v58 = vsel %vm56, %v57, %v34
  %v59 = vshrl.u32 %v58, 4
  %v60 = vand.u32 %v58, 15
  %v61 = vsub.s32 0, %v60
  %v62 = vsel %vm56, %v61, %v60
  %vm63 = vcmp.lt.s32.totalorder %v52, 0
  %v64 = vsub.s32 0, %v52
  %v65 = vsel %vm63, %v64, %v52
  %v66 = vshrl.u32 %v65, 4
  %v67 = vand.u32 %v65, 15
  %v68 = vsub.s32 0, %v67
  %v69 = vsel %vm63, %v68, %v67
  %vm70 = vcmp.lt.s32.totalorder %v53, 0
  %v71 = vsub.s32 0, %v53
  %v72 = vsel %vm70, %v71, %v53
  %v73 = vshrl.u32 %v72, 4
  %v74 = vand.u32 %v72, 15
  %v75 = vsub.s32 0, %v74
  %v76 = vsel %vm70, %v75, %v74
  %vm77 = vcmp.lt.s32.totalorder %v54, 0
  %v78 = vsub.s32 0, %v54
  %v79 = vsel %vm77, %v78, %v54
  %v80 = vshrl.u32 %v79, 4
  %v81 = vand.u32 %v79, 15
  %v82 = vsub.s32 0, %v81
  %v83 = vsel %vm77, %v82, %v81
  %vm84 = vcmp.ne.s32.totalorder %v62, 0
  %vm85 = vcmp.ne.s32.totalorder %v69, 0
  %vm86 = vcmp.ne.s32.totalorder %v76, 0
  %vm87 = vcmp.ne.s32.totalorder %v83, 0
  %vm88 = vcmp.lt.s32.totalorder %v62, 0
  %vm89 = vcmp.lt.s32.totalorder %v69, 0
  %vm90 = vcmp.lt.s32.totalorder %v76, 0
  %vm91 = vcmp.lt.s32.totalorder %v83, 0
  %vm92 = vmand %vm88, %vm84
  %vm93 = vmand %vm89, %vm85
  %vm94 = vmand %vm90, %vm86
  %vm95 = vmand %vm91, %vm87
  %v96 = vadd.s32 %v62, 16
  %v97 = vadd.s32 %v69, 16
  %v98 = vadd.s32 %v76, 16
  %v99 = vadd.s32 %v83, 16
  %v100 = vsel %vm92, %v96, %v62
  %v101 = vsel %vm93, %v97, %v69
  %v102 = vsel %vm94, %v98, %v76
  %v103 = vsel %vm95, %v99, %v83
  %vm104 = vcmp.eq.s32.totalorder %v100, %v36
  %vm105 = vcmp.eq.s32.totalorder %v101, %v36
  %vm106 = vcmp.eq.s32.totalorder %v102, %v36
  %vm107 = vcmp.eq.s32.totalorder %v103, %v36
  %vm108 = vcmp.eq.s32.totalorder %v100, %v55
  %vm109 = vcmp.eq.s32.totalorder %v101, %v55
  %vm110 = vcmp.eq.s32.totalorder %v102, %v55
  %vm111 = vcmp.eq.s32.totalorder %v103, %v55
  %v112 = vsel %vm104, 1, 0
  %v113 = vsel %vm105, 1, 0
  %v114 = vsel %vm106, 1, 0
  %v115 = vsel %vm107, 1, 0
  %v116 = vsel %vm108, 1, 0
  %v117 = vsel %vm109, 1, 0
  %v118 = vsel %vm110, 1, 0
  %v119 = vsel %vm111, 1, 0
  %v120 = vcvt.s32.f32 %v112
  %v121 = vcvt.s32.f32 %v113
  %v122 = vcvt.s32.f32 %v114
  %v123 = vcvt.s32.f32 %v115
  %v124 = vcvt.s32.f32 %v116
  %v125 = vcvt.s32.f32 %v117
  %v126 = vcvt.s32.f32 %v118
  %v127 = vcvt.s32.f32 %v119
  %vm128 = vcmp.lt.s32.totalorder %v34, 0
  %v129 = vsub.s32 0, %v34
  %v130 = vsel %vm128, %v129, %v34
  %v131 = vshrl.u32 %v130, 3
  %v132 = vand.u32 %v130, 7
  %v133 = vsub.s32 0, %v132
  %v134 = vsel %vm128, %v133, %v132
  %vm135 = vcmp.lt.s32.totalorder %v52, 0
  %v136 = vsub.s32 0, %v52
  %v137 = vsel %vm135, %v136, %v52
  %v138 = vshrl.u32 %v137, 3
  %v139 = vand.u32 %v137, 7
  %v140 = vsub.s32 0, %v139
  %v141 = vsel %vm135, %v140, %v139
  %vm142 = vcmp.ne.s32.totalorder %v134, 0
  %vm143 = vcmp.ne.s32.totalorder %v141, 0
  %vm144 = vcmp.lt.s32.totalorder %v134, 0
  %vm145 = vcmp.lt.s32.totalorder %v141, 0
  %vm146 = vmand %vm144, %vm142
  %vm147 = vmand %vm145, %vm143
  %v148 = vadd.s32 %v134, 8
  %v149 = vadd.s32 %v141, 8
  %v150 = vsel %vm146, %v148, %v134
  %v151 = vsel %vm147, %v149, %v141
  %vm152 = vcmp.eq.s32.totalorder %v150, %v36
  %vm153 = vcmp.eq.s32.totalorder %v151, %v36
  %v154 = vsel %vm152, 1, 0
  %v155 = vsel %vm153, 1, 0
  %v156 = vcvt.s32.f32 %v154
  %v157 = vcvt.s32.f32 %v155
  %v158 = vld [vmem:[%s0] sm:$0xff]
  %v159 = vld [vmem:[%s0 + $0x8] sm:$0xff]
  %v160 = vld [vmem:[%s3] sm:$0x3f]
  %s161 = scalar_lea.vmem %s2, 4
  %v162 = vld [vmem:[%s161] sm:$0x1]
  %v164 = vlaneseq
  %v165 = vshrl.u32 %v164, 7
  %v166 = vsub.s32 0, %v165
  %v167 = vrot.slane %v162, %v166
  %v169 = vmul.f32 %v158, %v167
  %v170 = vmul.f32 %v159, %v167
  %v171 = vlaneseq
  %v172 = vshrl.u32 %v171, 7
  %v173 = vsub.s32 0, %v172
  %v174 = vrot.slane %v160, %v173
  %v175 = vadd.f32 %v169, %v174
  %v176 = vadd.f32 %v170, %v174
  %v177 = vrot.slane %v158, 7
  %v178 = vrot.slane %v159, 7
  %vm179 = vcmp.lt.s32.totalorder %v36, 1
  %v180 = vsel %vm179, %v177, %v178
  %v181 = vsel %vm179, %v178, %v177
  %v182 = vld [vmem:[%s1] sm:$0xff]
  %v183 = vld [vmem:[%s1 + $0x8] sm:$0xff]
  %185 = vset.pattern.permute.xlu0 0
  %186 = vperm.xlu0 %185, %v182
  %v187 = vpop.permute.xlu0 %186
  %190 = vset.pattern.permute.xlu0 0
  %191 = vperm.xlu0 %190, %v183
  %v192 = vpop.permute.xlu0 %191
  %v194 = vmul.f32 %v181, %v187
  %v195 = vmul.f32 %v180, %v192
  %196 = vrot.lane.b32.xlu0 %v194, 4
  %v197 = vpop.permute.xlu0 %196
  %198 = vrot.lane.b32.xlu0 %v195, 4
  %v199 = vpop.permute.xlu0 %198
  %v200 = vld [vmem:[%s2] sm:$0x1]
  %v202 = vlaneseq
  %v203 = vshrl.u32 %v202, 7
  %v204 = vsub.s32 0, %v203
  %v205 = vrot.slane %v200, %v204
  %v207 = vmul.f32 %v197, %v205
  %v208 = vmul.f32 %v199, %v205
  %v209 = vadd.f32 %v175, %v207
  %v210 = vadd.f32 %v176, %v208
  %s211 = scalar_lea.vmem %s2, 1
  %v212 = vld [vmem:[%s211] sm:$0x1]
  %v214 = vlaneseq
  %v215 = vshrl.u32 %v214, 7
  %v216 = vsub.s32 0, %v215
  %v217 = vrot.slane %v212, %v216
  %v219 = vmul.f32 %v194, %v217
  %v220 = vmul.f32 %v195, %v217
  %v221 = vadd.f32 %v209, %v219
  %v222 = vadd.f32 %v210, %v220
  %223 = vrot.lane.b32.xlu0 %v194, 124
  %v224 = vpop.permute.xlu0 %223
  %225 = vrot.lane.b32.xlu0 %v195, 124
  %v226 = vpop.permute.xlu0 %225
  %s227 = scalar_lea.vmem %s2, 2
  %v228 = vld [vmem:[%s227] sm:$0x1]
  %v230 = vlaneseq
  %v231 = vshrl.u32 %v230, 7
  %v232 = vsub.s32 0, %v231
  %v233 = vrot.slane %v228, %v232
  %v235 = vmul.f32 %v224, %v233
  %v236 = vmul.f32 %v226, %v233
  %v237 = vadd.f32 %v221, %v235
  %v238 = vadd.f32 %v222, %v236
  %239 = vrot.lane.b32.xlu0 %v158, 4
  %v240 = vpop.permute.xlu0 %239
  %241 = vrot.lane.b32.xlu0 %v159, 4
  %v242 = vpop.permute.xlu0 %241
  %s243 = scalar_lea.vmem %s2, 3
  %v244 = vld [vmem:[%s243] sm:$0x1]
  %v246 = vlaneseq
  %v247 = vshrl.u32 %v246, 7
  %v248 = vsub.s32 0, %v247
  %v249 = vrot.slane %v244, %v248
  %v251 = vmul.f32 %v240, %v249
  %v252 = vmul.f32 %v242, %v249
  %v253 = vadd.f32 %v237, %v251
  %v254 = vadd.f32 %v238, %v252
  %255 = vrot.lane.b32.xlu0 %v158, 124
  %v256 = vpop.permute.xlu0 %255
  %257 = vrot.lane.b32.xlu0 %v159, 124
  %v258 = vpop.permute.xlu0 %257
  %s259 = scalar_lea.vmem %s2, 5
  %v260 = vld [vmem:[%s259] sm:$0x1]
  %v262 = vlaneseq
  %v263 = vshrl.u32 %v262, 7
  %v264 = vsub.s32 0, %v263
  %v265 = vrot.slane %v260, %v264
  %v267 = vmul.f32 %v256, %v265
  %v268 = vmul.f32 %v258, %v265
  %v269 = vadd.f32 %v253, %v267
  %v270 = vadd.f32 %v254, %v268
  %v271 = vrot.slane %v158, 1
  %v272 = vrot.slane %v159, 1
  %vm273 = vcmp.lt.s32.totalorder %v36, 7
  %v274 = vsel %vm273, %v271, %v272
  %v275 = vsel %vm273, %v272, %v271
  %s276 = scalar_lea.vmem %s1, 32
  %v277 = vld [vmem:[%s276] sm:$0xff]
  %v278 = vld [vmem:[%s276 + $0x8] sm:$0xff]
  %280 = vset.pattern.permute.xlu0 0
  %281 = vperm.xlu0 %280, %v277
  %v282 = vpop.permute.xlu0 %281
  %285 = vset.pattern.permute.xlu0 0
  %286 = vperm.xlu0 %285, %v278
  %v287 = vpop.permute.xlu0 %286
  %v289 = vmul.f32 %v274, %v282
  %v290 = vmul.f32 %v275, %v287
  %291 = vrot.lane.b32.xlu0 %v289, 4
  %v292 = vpop.permute.xlu0 %291
  %293 = vrot.lane.b32.xlu0 %v290, 4
  %v294 = vpop.permute.xlu0 %293
  %s295 = scalar_lea.vmem %s2, 6
  %v296 = vld [vmem:[%s295] sm:$0x1]
  %v298 = vlaneseq
  %v299 = vshrl.u32 %v298, 7
  %v300 = vsub.s32 0, %v299
  %v301 = vrot.slane %v296, %v300
  %v303 = vmul.f32 %v292, %v301
  %v304 = vmul.f32 %v294, %v301
  %v305 = vadd.f32 %v269, %v303
  %v306 = vadd.f32 %v270, %v304
  %s307 = scalar_lea.vmem %s2, 7
  %v308 = vld [vmem:[%s307] sm:$0x1]
  %v310 = vlaneseq
  %v311 = vshrl.u32 %v310, 7
  %v312 = vsub.s32 0, %v311
  %v313 = vrot.slane %v308, %v312
  %v315 = vmul.f32 %v289, %v313
  %v316 = vmul.f32 %v290, %v313
  %v317 = vadd.f32 %v305, %v315
  %v318 = vadd.f32 %v306, %v316
  %319 = vrot.lane.b32.xlu0 %v289, 124
  %v320 = vpop.permute.xlu0 %319
  %321 = vrot.lane.b32.xlu0 %v290, 124
  %v322 = vpop.permute.xlu0 %321
  %s323 = scalar_lea.vmem %s2, 8
  %v324 = vld [vmem:[%s323] sm:$0x1]
  %v326 = vlaneseq
  %v327 = vshrl.u32 %v326, 7
  %v328 = vsub.s32 0, %v327
  %v329 = vrot.slane %v324, %v328
  %v331 = vmul.f32 %v320, %v329
  %v332 = vmul.f32 %v322, %v329
  %v333 = vadd.f32 %v317, %v331
  %v334 = vadd.f32 %v318, %v332
  %v335 = vmul.f32 %v333, 0.5
  %v336 = vmul.f32 %v334, 0.5
  %v337 = vmul.f32 %v333, 0.70710677
  %v338 = vmul.f32 %v334, 0.70710677
  %v339 = verf.f32.pop %v337
  %v340 = verf.f32.pop %v338
  %v341 = vadd.f32 %v339, 1.0
  %v342 = vadd.f32 %v340, 1.0
  %v343 = vmul.f32 %v335, %v341
  %v344 = vmul.f32 %v336, %v342
  %v345 = vadd.f32 %v343, %v344
  %v346 = vrot.slane %v345, 4
  %v347 = vadd.f32 %v345, %v346
  %v348 = vrot.slane %v347, 2
  %v349 = vadd.f32 %v347, %v348
  %v350 = vrot.slane %v349, 1
  %v351 = vadd.f32 %v349, %v350
  %v352 = vmul.f32 %v343, %v343
  %v353 = vmul.f32 %v344, %v344
  %v354 = vadd.f32 %v352, %v353
  %v355 = vrot.slane %v354, 4
  %v356 = vadd.f32 %v354, %v355
  %v357 = vrot.slane %v356, 2
  %v358 = vadd.f32 %v356, %v357
  %v359 = vrot.slane %v358, 1
  %v360 = vadd.f32 %v358, %v359
  %v361 = vmul.f32 %v51, %v351
  %vm362 = vcmask 1043456
  %v363 = vsel %vm362, %v361, 0.0
  %364 = vadd.xlane.f32.xlu0 %v363
  %v365 = vpop.xlane.xlu0 %364
  %v366 = vmul.f32 %v51, %v360
  %v367 = vsel %vm362, %v366, 0.0
  %368 = vadd.xlane.f32.xlu0 %v367
  %v369 = vpop.xlane.xlu0 %368
  %v370 = vmul.f32 %v51, %v365
  %v371 = vsel %vm362, %v370, 0.0
  %v372 = vrot.slane %v371, 4
  %v373 = vadd.f32 %v371, %v372
  %v374 = vrot.slane %v373, 2
  %v375 = vadd.f32 %v373, %v374
  %v376 = vrot.slane %v375, 1
  %v377 = vadd.f32 %v375, %v376
  %v378 = vmul.f32 %v377, 0.001953125
  %v379 = vmul.f32 %v51, %v369
  %v380 = vsel %vm362, %v379, 0.0
  %v381 = vrot.slane %v380, 4
  %v382 = vadd.f32 %v380, %v381
  %v383 = vrot.slane %v382, 2
  %v384 = vadd.f32 %v382, %v383
  %v385 = vrot.slane %v384, 1
  %v386 = vadd.f32 %v384, %v385
  %v387 = vmul.f32 %v386, 0.001953125
  %v388 = vmul.f32 %v378, %v378
  %v389 = vsub.f32 %v387, %v388
  %v390 = vmax.f32 %v389, 0.0
  %v391 = vadd.f32 %v390, 1e-05
  %v392 = vrsqrt.pop %v391
  %v393 = vmul.f32 %v160, %v392
  %v394 = vlaneseq
  %v395 = vshrl.u32 %v394, 7
  %v396 = vsub.s32 1, %v395
  %v397 = vrot.slane %v393, %v396
  %v398 = vmul.f32 %v343, %v397
  %v399 = vmul.f32 %v344, %v397
  %v400 = vmul.f32 %v378, %v393
  %v402 = vrot.slane %v400, 7
  %v404 = vsub.f32 %v160, %v402
  %v405 = vlaneseq
  %v406 = vshrl.u32 %v405, 7
  %v407 = vsub.s32 2, %v406
  %v408 = vrot.slane %v404, %v407
  %v409 = vadd.f32 %v398, %v408
  %v410 = vadd.f32 %v399, %v408
  %v411 = vadd.f32 %v409, %v158
  %v412 = vadd.f32 %v410, %v159
  %v413 = vld [vmem:[%s4] sm:$0x77]
  %v414 = vld [vmem:[%s4 + $0x8] sm:$0x77]
  %v415 = vpack.c.bf16 %v412, %v411
  %v416 = vld [vmem:[%s6] sm:$0xff]
  %v417 = vld [vmem:[%s6 + $0x8] sm:$0xff]
  %v418 = vld [vmem:[%s6 + $0x10] sm:$0xff]
  %v419 = vld [vmem:[%s6 + $0x18] sm:$0xff]
  %v420 = vld [vmem:[%s6 + $0x20] sm:$0xff]
  %v421 = vld [vmem:[%s6 + $0x28] sm:$0xff]
  %v422 = vld [vmem:[%s6 + $0x30] sm:$0xff]
  %v423 = vld [vmem:[%s6 + $0x38] sm:$0xff]
  %v424 = vld [vmem:[%s6 + $0x40] sm:$0xff]
  %v425 = vld [vmem:[%s6 + $0x48] sm:$0xff]
  %v426 = vld [vmem:[%s6 + $0x50] sm:$0xff]
  %v427 = vld [vmem:[%s6 + $0x58] sm:$0xff]
  %v428 = vld [vmem:[%s6 + $0x60] sm:$0xff]
  %v429 = vld [vmem:[%s6 + $0x68] sm:$0xff]
  %v430 = vld [vmem:[%s6 + $0x70] sm:$0xff]
  %v431 = vld [vmem:[%s6 + $0x78] sm:$0xff]
  %v432 = vld [vmem:[%s6 + $0x80] sm:$0xff]
  %v433 = vld [vmem:[%s6 + $0x88] sm:$0xff]
  %v434 = vld [vmem:[%s6 + $0x90] sm:$0xff]
  %v435 = vld [vmem:[%s6 + $0x98] sm:$0xff]
  %v436 = vld [vmem:[%s6 + $0xa0] sm:$0xff]
  %v437 = vld [vmem:[%s6 + $0xa8] sm:$0xff]
  %v438 = vld [vmem:[%s6 + $0xb0] sm:$0xff]
  %v439 = vld [vmem:[%s6 + $0xb8] sm:$0xff]
  %v440 = vld [vmem:[%s6 + $0xc0] sm:$0xff]
  %v441 = vld [vmem:[%s6 + $0xc8] sm:$0xff]
  %v442 = vld [vmem:[%s6 + $0xd0] sm:$0xff]
  %v443 = vld [vmem:[%s6 + $0xd8] sm:$0xff]
  %v444 = vld [vmem:[%s6 + $0xe0] sm:$0xff]
  %v445 = vld [vmem:[%s6 + $0xe8] sm:$0xff]
  %v446 = vld [vmem:[%s6 + $0xf0] sm:$0xff]
  %v447 = vld [vmem:[%s6 + $0xf8] sm:$0xff]
  %v450 = vlaneseq
  %v451 = vshrl.u32 %v450, 7
  %v452 = vsub.s32 0, %v451
  %v453 = vrot.slane %v413, %v452
  %v454 = vlaneseq
  %v455 = vshrl.u32 %v454, 7
  %v456 = vsub.s32 4, %v455
  %v457 = vrot.slane %v413, %v456
  %v458 = vlaneseq
  %v459 = vshrl.u32 %v458, 7
  %v460 = vsub.s32 0, %v459
  %v461 = vrot.slane %v414, %v460
  %v462 = vlaneseq
  %v463 = vshrl.u32 %v462, 7
  %v464 = vsub.s32 4, %v463
  %v465 = vrot.slane %v414, %v464
  %v470 = vlaneseq
  %v471 = vshrl.u32 %v470, 7
  %v472 = vsub.s32 0, %v471
  %v473 = vrot.slane %v453, %v472
  %v474 = vlaneseq
  %v475 = vshrl.u32 %v474, 7
  %v476 = vsub.s32 0, %v475
  %v477 = vrot.slane %v457, %v476
  %v478 = vlaneseq
  %v479 = vshrl.u32 %v478, 7
  %v480 = vsub.s32 0, %v479
  %v481 = vrot.slane %v461, %v480
  %v482 = vlaneseq
  %v483 = vshrl.u32 %v482, 7
  %v484 = vsub.s32 0, %v483
  %v485 = vrot.slane %v465, %v484
  %v518 = vunpack.c.l.b16 %v416
  %v519 = vunpack.c.h.b16 %v416
  %v520 = vunpack.c.l.b16 %v417
  %v521 = vunpack.c.h.b16 %v417
  %v522 = vunpack.c.l.b16 %v418
  %v523 = vunpack.c.h.b16 %v418
  %v524 = vunpack.c.l.b16 %v419
  %v525 = vunpack.c.h.b16 %v419
  %v526 = vunpack.c.l.b16 %v420
  %v527 = vunpack.c.h.b16 %v420
  %v528 = vunpack.c.l.b16 %v421
  %v529 = vunpack.c.h.b16 %v421
  %v530 = vunpack.c.l.b16 %v422
  %v531 = vunpack.c.h.b16 %v422
  %v532 = vunpack.c.l.b16 %v423
  %v533 = vunpack.c.h.b16 %v423
  %v534 = vunpack.c.l.b16 %v424
  %v535 = vunpack.c.h.b16 %v424
  %v536 = vunpack.c.l.b16 %v425
  %v537 = vunpack.c.h.b16 %v425
  %v538 = vunpack.c.l.b16 %v426
  %v539 = vunpack.c.h.b16 %v426
  %v540 = vunpack.c.l.b16 %v427
  %v541 = vunpack.c.h.b16 %v427
  %v542 = vunpack.c.l.b16 %v428
  %v543 = vunpack.c.h.b16 %v428
  %v544 = vunpack.c.l.b16 %v429
  %v545 = vunpack.c.h.b16 %v429
  %v546 = vunpack.c.l.b16 %v430
  %v547 = vunpack.c.h.b16 %v430
  %v548 = vunpack.c.l.b16 %v431
  %v549 = vunpack.c.h.b16 %v431
  %v550 = vunpack.c.l.b16 %v432
  %v551 = vunpack.c.h.b16 %v432
  %v552 = vunpack.c.l.b16 %v433
  %v553 = vunpack.c.h.b16 %v433
  %v554 = vunpack.c.l.b16 %v434
  %v555 = vunpack.c.h.b16 %v434
  %v556 = vunpack.c.l.b16 %v435
  %v557 = vunpack.c.h.b16 %v435
  %v558 = vunpack.c.l.b16 %v436
  %v559 = vunpack.c.h.b16 %v436
  %v560 = vunpack.c.l.b16 %v437
  %v561 = vunpack.c.h.b16 %v437
  %v562 = vunpack.c.l.b16 %v438
  %v563 = vunpack.c.h.b16 %v438
  %v564 = vunpack.c.l.b16 %v439
  %v565 = vunpack.c.h.b16 %v439
  %v566 = vunpack.c.l.b16 %v440
  %v567 = vunpack.c.h.b16 %v440
  %v568 = vunpack.c.l.b16 %v441
  %v569 = vunpack.c.h.b16 %v441
  %v570 = vunpack.c.l.b16 %v442
  %v571 = vunpack.c.h.b16 %v442
  %v572 = vunpack.c.l.b16 %v443
  %v573 = vunpack.c.h.b16 %v443
  %v574 = vunpack.c.l.b16 %v444
  %v575 = vunpack.c.h.b16 %v444
  %v576 = vunpack.c.l.b16 %v445
  %v577 = vunpack.c.h.b16 %v445
  %v578 = vunpack.c.l.b16 %v446
  %v579 = vunpack.c.h.b16 %v446
  %v580 = vunpack.c.l.b16 %v447
  %v581 = vunpack.c.h.b16 %v447
  %v582 = vpack.c.b16 %v522, %v518
  %v583 = vpack.c.b16 %v523, %v519
  %v584 = vpack.c.b16 %v524, %v520
  %v585 = vpack.c.b16 %v525, %v521
  %v586 = vpack.c.b16 %v530, %v526
  %v587 = vpack.c.b16 %v531, %v527
  %v588 = vpack.c.b16 %v532, %v528
  %v589 = vpack.c.b16 %v533, %v529
  %v590 = vpack.c.b16 %v538, %v534
  %v591 = vpack.c.b16 %v539, %v535
  %v592 = vpack.c.b16 %v540, %v536
  %v593 = vpack.c.b16 %v541, %v537
  %v594 = vpack.c.b16 %v546, %v542
  %v595 = vpack.c.b16 %v547, %v543
  %v596 = vpack.c.b16 %v548, %v544
  %v597 = vpack.c.b16 %v549, %v545
  %v598 = vpack.c.b16 %v554, %v550
  %v599 = vpack.c.b16 %v555, %v551
  %v600 = vpack.c.b16 %v556, %v552
  %v601 = vpack.c.b16 %v557, %v553
  %v602 = vpack.c.b16 %v562, %v558
  %v603 = vpack.c.b16 %v563, %v559
  %v604 = vpack.c.b16 %v564, %v560
  %v605 = vpack.c.b16 %v565, %v561
  %v606 = vpack.c.b16 %v570, %v566
  %v607 = vpack.c.b16 %v571, %v567
  %v608 = vpack.c.b16 %v572, %v568
  %v609 = vpack.c.b16 %v573, %v569
  %v610 = vpack.c.b16 %v578, %v574
  %v611 = vpack.c.b16 %v579, %v575
  %v612 = vpack.c.b16 %v580, %v576
  %v613 = vpack.c.b16 %v581, %v577
  %646 = vmatprep.subr.bf16.mxu0 %v583
  %647 = vmatpush1.bf16.msra.mxu0 %v582
  %648 = vmatprep.subr.bf16.mxu0 %v587
  %649 = vmatpush1.bf16.msra.mxu0 %v586
  %650 = vmatprep.subr.bf16.mxu0 %v591
  %651 = vmatpush1.bf16.msra.mxu0 %v590
  %652 = vmatprep.subr.bf16.mxu0 %v595
  %653 = vmatpush1.bf16.msra.mxu0 %v594
  %654 = vmatprep.subr.bf16.mxu0 %v599
  %655 = vmatpush1.bf16.msra.mxu0 %v598
  %656 = vmatprep.subr.bf16.mxu0 %v603
  %657 = vmatpush1.bf16.msra.mxu0 %v602
  %658 = vmatprep.subr.bf16.mxu0 %v607
  %659 = vmatpush1.bf16.msra.mxu0 %v606
  %660 = vmatprep.subr.bf16.mxu0 %v611
  %661 = vmatpush1.bf16.msra.mxu0 %v610
  %662 = vmatprep.subr.bf16.mxu0 0
  %663 = vmatpush1.bf16.msra.mxu0 0
  %664 = vmatprep.subr.bf16.mxu0 0
  %665 = vmatpush1.bf16.msra.mxu0 0
  %666 = vmatprep.subr.bf16.mxu0 0
  %667 = vmatpush1.bf16.msra.mxu0 0
  %668 = vmatprep.subr.bf16.mxu0 0
  %669 = vmatpush1.bf16.msra.mxu0 0
  %670 = vmatprep.subr.bf16.mxu0 0
  %671 = vmatpush1.bf16.msra.mxu0 0
  %672 = vmatprep.subr.bf16.mxu0 0
  %673 = vmatpush1.bf16.msra.mxu0 0
  %674 = vmatprep.subr.bf16.mxu0 0
  %675 = vmatpush1.bf16.msra.mxu0 0
  %676 = vmatprep.subr.bf16.mxu0 0
  %677 = vmatpush1.bf16.msra.mxu0 0
  %678 = vmatprep.mubr.bf16.mxu0 0
  %679 = vmatmul.mubr.bf16.gmra.mrb[0].mxu0 %v415
  %v680 = vpop.f32.mrb[0].mxu0
  %v681 = vadd.f32 %v473, %v680
  %v682 = vpop.f32.mrb[0].mxu0
  %v683 = vadd.f32 %v477, %v682
  %v684 = vpop.f32.mrb[0].mxu0
  %v685 = vadd.f32 %v473, %v684
  %v686 = vpop.f32.mrb[0].mxu0
  %v687 = vadd.f32 %v477, %v686
  %688 = vdwg.mxu0
  %689 = vmatprep.subr.bf16.mxu0 %v585
  %690 = vmatpush1.bf16.msra.mxu0 %v584
  %691 = vmatprep.subr.bf16.mxu0 %v589
  %692 = vmatpush1.bf16.msra.mxu0 %v588
  %693 = vmatprep.subr.bf16.mxu0 %v593
  %694 = vmatpush1.bf16.msra.mxu0 %v592
  %695 = vmatprep.subr.bf16.mxu0 %v597
  %696 = vmatpush1.bf16.msra.mxu0 %v596
  %697 = vmatprep.subr.bf16.mxu0 %v601
  %698 = vmatpush1.bf16.msra.mxu0 %v600
  %699 = vmatprep.subr.bf16.mxu0 %v605
  %700 = vmatpush1.bf16.msra.mxu0 %v604
  %701 = vmatprep.subr.bf16.mxu0 %v609
  %702 = vmatpush1.bf16.msra.mxu0 %v608
  %703 = vmatprep.subr.bf16.mxu0 %v613
  %704 = vmatpush1.bf16.msra.mxu0 %v612
  %705 = vmatprep.subr.bf16.mxu0 0
  %706 = vmatpush1.bf16.msra.mxu0 0
  %707 = vmatprep.subr.bf16.mxu0 0
  %708 = vmatpush1.bf16.msra.mxu0 0
  %709 = vmatprep.subr.bf16.mxu0 0
  %710 = vmatpush1.bf16.msra.mxu0 0
  %711 = vmatprep.subr.bf16.mxu0 0
  %712 = vmatpush1.bf16.msra.mxu0 0
  %713 = vmatprep.subr.bf16.mxu0 0
  %714 = vmatpush1.bf16.msra.mxu0 0
  %715 = vmatprep.subr.bf16.mxu0 0
  %716 = vmatpush1.bf16.msra.mxu0 0
  %717 = vmatprep.subr.bf16.mxu0 0
  %718 = vmatpush1.bf16.msra.mxu0 0
  %719 = vmatprep.subr.bf16.mxu0 0
  %720 = vmatpush1.bf16.msra.mxu0 0
  %721 = vmatprep.mubr.bf16.mxu0 0
  %722 = vmatmul.mubr.bf16.gmra.mrb[0].mxu0 %v415
  %v723 = vpop.f32.mrb[0].mxu0
  %v724 = vadd.f32 %v481, %v723
  %v725 = vpop.f32.mrb[0].mxu0
  %v726 = vadd.f32 %v485, %v725
  %v727 = vpop.f32.mrb[0].mxu0
  %v728 = vadd.f32 %v481, %v727
  %v729 = vpop.f32.mrb[0].mxu0
  %v730 = vadd.f32 %v485, %v729
  %731 = vdwg.mxu0
  %v732 = vmul.f32 %v681, 0.5
  %v733 = vmul.f32 %v683, 0.5
  %v734 = vmul.f32 %v724, 0.5
  %v735 = vmul.f32 %v726, 0.5
  %v736 = vmul.f32 %v685, 0.5
  %v737 = vmul.f32 %v687, 0.5
  %v738 = vmul.f32 %v728, 0.5
  %v739 = vmul.f32 %v730, 0.5
  %v740 = vmul.f32 %v681, 0.70710677
  %v741 = vmul.f32 %v683, 0.70710677
  %v742 = vmul.f32 %v724, 0.70710677
  %v743 = vmul.f32 %v726, 0.70710677
  %v744 = vmul.f32 %v685, 0.70710677
  %v745 = vmul.f32 %v687, 0.70710677
  %v746 = vmul.f32 %v728, 0.70710677
  %v747 = vmul.f32 %v730, 0.70710677
  %v748 = verf.f32.pop %v740
  %v749 = verf.f32.pop %v741
  %v750 = verf.f32.pop %v742
  %v751 = verf.f32.pop %v743
  %v752 = verf.f32.pop %v744
  %v753 = verf.f32.pop %v745
  %v754 = verf.f32.pop %v746
  %v755 = verf.f32.pop %v747
  %v756 = vadd.f32 %v748, 1.0
  %v757 = vadd.f32 %v749, 1.0
  %v758 = vadd.f32 %v750, 1.0
  %v759 = vadd.f32 %v751, 1.0
  %v760 = vadd.f32 %v752, 1.0
  %v761 = vadd.f32 %v753, 1.0
  %v762 = vadd.f32 %v754, 1.0
  %v763 = vadd.f32 %v755, 1.0
  %v764 = vmul.f32 %v732, %v756
  %v765 = vmul.f32 %v733, %v757
  %v766 = vmul.f32 %v734, %v758
  %v767 = vmul.f32 %v735, %v759
  %v768 = vmul.f32 %v736, %v760
  %v769 = vmul.f32 %v737, %v761
  %v770 = vmul.f32 %v738, %v762
  %v771 = vmul.f32 %v739, %v763
  %v772 = vadd.f32 %v764, %v768
  %v773 = vrot.slane %v772, 4
  %v774 = vadd.f32 %v772, %v773
  %v775 = vrot.slane %v774, 2
  %v776 = vadd.f32 %v774, %v775
  %v777 = vrot.slane %v776, 1
  %v778 = vadd.f32 %v776, %v777
  %v779 = vadd.f32 %v765, %v769
  %v780 = vrot.slane %v779, 4
  %v781 = vadd.f32 %v779, %v780
  %v782 = vrot.slane %v781, 2
  %v783 = vadd.f32 %v781, %v782
  %v784 = vrot.slane %v783, 1
  %v785 = vadd.f32 %v783, %v784
  %v786 = vadd.f32 %v766, %v770
  %v787 = vrot.slane %v786, 4
  %v788 = vadd.f32 %v786, %v787
  %v789 = vrot.slane %v788, 2
  %v790 = vadd.f32 %v788, %v789
  %v791 = vrot.slane %v790, 1
  %v792 = vadd.f32 %v790, %v791
  %v793 = vadd.f32 %v767, %v771
  %v794 = vrot.slane %v793, 4
  %v795 = vadd.f32 %v793, %v794
  %v796 = vrot.slane %v795, 2
  %v797 = vadd.f32 %v795, %v796
  %v798 = vrot.slane %v797, 1
  %v799 = vadd.f32 %v797, %v798
  %v800 = vmul.f32 %v764, %v764
  %v801 = vmul.f32 %v765, %v765
  %v802 = vmul.f32 %v766, %v766
  %v803 = vmul.f32 %v767, %v767
  %v804 = vmul.f32 %v768, %v768
  %v805 = vmul.f32 %v769, %v769
  %v806 = vmul.f32 %v770, %v770
  %v807 = vmul.f32 %v771, %v771
  %v808 = vadd.f32 %v800, %v804
  %v809 = vrot.slane %v808, 4
  %v810 = vadd.f32 %v808, %v809
  %v811 = vrot.slane %v810, 2
  %v812 = vadd.f32 %v810, %v811
  %v813 = vrot.slane %v812, 1
  %v814 = vadd.f32 %v812, %v813
  %v815 = vadd.f32 %v801, %v805
  %v816 = vrot.slane %v815, 4
  %v817 = vadd.f32 %v815, %v816
  %v818 = vrot.slane %v817, 2
  %v819 = vadd.f32 %v817, %v818
  %v820 = vrot.slane %v819, 1
  %v821 = vadd.f32 %v819, %v820
  %v822 = vadd.f32 %v802, %v806
  %v823 = vrot.slane %v822, 4
  %v824 = vadd.f32 %v822, %v823
  %v825 = vrot.slane %v824, 2
  %v826 = vadd.f32 %v824, %v825
  %v827 = vrot.slane %v826, 1
  %v828 = vadd.f32 %v826, %v827
  %v829 = vadd.f32 %v803, %v807
  %v830 = vrot.slane %v829, 4
  %v831 = vadd.f32 %v829, %v830
  %v832 = vrot.slane %v831, 2
  %v833 = vadd.f32 %v831, %v832
  %v834 = vrot.slane %v833, 1
  %v835 = vadd.f32 %v833, %v834
  %v836 = vmul.f32 %v120, %v778
  %v837 = vmul.f32 %v121, %v785
  %v838 = vmul.f32 %v122, %v792
  %v839 = vmul.f32 %v123, %v799
  %v840 = vmul.f32 %v124, %v778
  %v841 = vmul.f32 %v125, %v785
  %v842 = vmul.f32 %v126, %v792
  %v843 = vmul.f32 %v127, %v799
  %v844 = vadd.f32 %v836, %v837
  %v845 = vadd.f32 %v844, %v838
  %v846 = vadd.f32 %v845, %v839
  %847 = vadd.xlane.f32.xlu0 %v846
  %v848 = vpop.xlane.xlu0 %847
  %v849 = vadd.f32 %v840, %v841
  %v850 = vadd.f32 %v849, %v842
  %v851 = vadd.f32 %v850, %v843
  %852 = vadd.xlane.f32.xlu0 %v851
  %v853 = vpop.xlane.xlu0 %852
  %v854 = vmul.f32 %v120, %v814
  %v855 = vmul.f32 %v121, %v821
  %v856 = vmul.f32 %v122, %v828
  %v857 = vmul.f32 %v123, %v835
  %v858 = vmul.f32 %v124, %v814
  %v859 = vmul.f32 %v125, %v821
  %v860 = vmul.f32 %v126, %v828
  %v861 = vmul.f32 %v127, %v835
  %v862 = vadd.f32 %v854, %v855
  %v863 = vadd.f32 %v862, %v856
  %v864 = vadd.f32 %v863, %v857
  %865 = vadd.xlane.f32.xlu0 %v864
  %v866 = vpop.xlane.xlu0 %865
  %v867 = vadd.f32 %v858, %v859
  %v868 = vadd.f32 %v867, %v860
  %v869 = vadd.f32 %v868, %v861
  %870 = vadd.xlane.f32.xlu0 %v869
  %v871 = vpop.xlane.xlu0 %870
  %v872 = vmul.f32 %v120, %v848
  %v873 = vmul.f32 %v121, %v848
  %v874 = vmul.f32 %v122, %v848
  %v875 = vmul.f32 %v123, %v848
  %v876 = vmul.f32 %v124, %v853
  %v877 = vmul.f32 %v125, %v853
  %v878 = vmul.f32 %v126, %v853
  %v879 = vmul.f32 %v127, %v853
  %v880 = vadd.f32 %v872, %v876
  %v881 = vrot.slane %v880, 4
  %v882 = vadd.f32 %v880, %v881
  %v883 = vrot.slane %v882, 2
  %v884 = vadd.f32 %v882, %v883
  %v885 = vrot.slane %v884, 1
  %v886 = vadd.f32 %v884, %v885
  %v887 = vadd.f32 %v873, %v877
  %v888 = vrot.slane %v887, 4
  %v889 = vadd.f32 %v887, %v888
  %v890 = vrot.slane %v889, 2
  %v891 = vadd.f32 %v889, %v890
  %v892 = vrot.slane %v891, 1
  %v893 = vadd.f32 %v891, %v892
  %v894 = vadd.f32 %v874, %v878
  %v895 = vrot.slane %v894, 4
  %v896 = vadd.f32 %v894, %v895
  %v897 = vrot.slane %v896, 2
  %v898 = vadd.f32 %v896, %v897
  %v899 = vrot.slane %v898, 1
  %v900 = vadd.f32 %v898, %v899
  %v901 = vadd.f32 %v875, %v879
  %v902 = vrot.slane %v901, 4
  %v903 = vadd.f32 %v901, %v902
  %v904 = vrot.slane %v903, 2
  %v905 = vadd.f32 %v903, %v904
  %v906 = vrot.slane %v905, 1
  %v907 = vadd.f32 %v905, %v906
  %v908 = vmul.f32 %v886, 0.001953125
  %v909 = vmul.f32 %v893, 0.001953125
  %v910 = vmul.f32 %v900, 0.001953125
  %v911 = vmul.f32 %v907, 0.001953125
  %v912 = vmul.f32 %v120, %v866
  %v913 = vmul.f32 %v121, %v866
  %v914 = vmul.f32 %v122, %v866
  %v915 = vmul.f32 %v123, %v866
  %v916 = vmul.f32 %v124, %v871
  %v917 = vmul.f32 %v125, %v871
  %v918 = vmul.f32 %v126, %v871
  %v919 = vmul.f32 %v127, %v871
  %v920 = vadd.f32 %v912, %v916
  %v921 = vrot.slane %v920, 4
  %v922 = vadd.f32 %v920, %v921
  %v923 = vrot.slane %v922, 2
  %v924 = vadd.f32 %v922, %v923
  %v925 = vrot.slane %v924, 1
  %v926 = vadd.f32 %v924, %v925
  %v927 = vadd.f32 %v913, %v917
  %v928 = vrot.slane %v927, 4
  %v929 = vadd.f32 %v927, %v928
  %v930 = vrot.slane %v929, 2
  %v931 = vadd.f32 %v929, %v930
  %v932 = vrot.slane %v931, 1
  %v933 = vadd.f32 %v931, %v932
  %v934 = vadd.f32 %v914, %v918
  %v935 = vrot.slane %v934, 4
  %v936 = vadd.f32 %v934, %v935
  %v937 = vrot.slane %v936, 2
  %v938 = vadd.f32 %v936, %v937
  %v939 = vrot.slane %v938, 1
  %v940 = vadd.f32 %v938, %v939
  %v941 = vadd.f32 %v915, %v919
  %v942 = vrot.slane %v941, 4
  %v943 = vadd.f32 %v941, %v942
  %v944 = vrot.slane %v943, 2
  %v945 = vadd.f32 %v943, %v944
  %v946 = vrot.slane %v945, 1
  %v947 = vadd.f32 %v945, %v946
  %v948 = vmul.f32 %v926, 0.001953125
  %v949 = vmul.f32 %v933, 0.001953125
  %v950 = vmul.f32 %v940, 0.001953125
  %v951 = vmul.f32 %v947, 0.001953125
  %v952 = vmul.f32 %v908, %v908
  %v953 = vmul.f32 %v909, %v909
  %v954 = vmul.f32 %v910, %v910
  %v955 = vmul.f32 %v911, %v911
  %v956 = vsub.f32 %v948, %v952
  %v957 = vsub.f32 %v949, %v953
  %v958 = vsub.f32 %v950, %v954
  %v959 = vsub.f32 %v951, %v955
  %v960 = vmax.f32 %v956, 0.0
  %v961 = vmax.f32 %v957, 0.0
  %v962 = vmax.f32 %v958, 0.0
  %v963 = vmax.f32 %v959, 0.0
  %v964 = vadd.f32 %v960, 1e-05
  %v965 = vadd.f32 %v961, 1e-05
  %v966 = vadd.f32 %v962, 1e-05
  %v967 = vadd.f32 %v963, 1e-05
  %v968 = vrsqrt.pop %v964
  %v969 = vrsqrt.pop %v965
  %v970 = vrsqrt.pop %v966
  %v971 = vrsqrt.pop %v967
  %v976 = vcombine.low %v968, %v969
  %v977 = vcombine.low %v970, %v971
  %v978 = vrot.slane %v976, 7
  %v979 = vrot.slane %v977, 7
  %v982 = vmul.f32 %v413, %v978
  %v983 = vmul.f32 %v414, %v979
  %v986 = vlaneseq
  %v987 = vshrl.u32 %v986, 7
  %v988 = vsub.s32 1, %v987
  %v989 = vrot.slane %v982, %v988
  %v990 = vlaneseq
  %v991 = vshrl.u32 %v990, 7
  %v992 = vsub.s32 5, %v991
  %v993 = vrot.slane %v982, %v992
  %v994 = vlaneseq
  %v995 = vshrl.u32 %v994, 7
  %v996 = vsub.s32 1, %v995
  %v997 = vrot.slane %v983, %v996
  %v998 = vlaneseq
  %v999 = vshrl.u32 %v998, 7
  %v1000 = vsub.s32 5, %v999
  %v1001 = vrot.slane %v983, %v1000
  %v1006 = vlaneseq
  %v1007 = vshrl.u32 %v1006, 7
  %v1008 = vsub.s32 1, %v1007
  %v1009 = vrot.slane %v989, %v1008
  %v1010 = vlaneseq
  %v1011 = vshrl.u32 %v1010, 7
  %v1012 = vsub.s32 1, %v1011
  %v1013 = vrot.slane %v993, %v1012
  %v1014 = vlaneseq
  %v1015 = vshrl.u32 %v1014, 7
  %v1016 = vsub.s32 1, %v1015
  %v1017 = vrot.slane %v997, %v1016
  %v1018 = vlaneseq
  %v1019 = vshrl.u32 %v1018, 7
  %v1020 = vsub.s32 1, %v1019
  %v1021 = vrot.slane %v1001, %v1020
  %v1022 = vmul.f32 %v764, %v1009
  %v1023 = vmul.f32 %v765, %v1013
  %v1024 = vmul.f32 %v766, %v1017
  %v1025 = vmul.f32 %v767, %v1021
  %v1026 = vmul.f32 %v768, %v1009
  %v1027 = vmul.f32 %v769, %v1013
  %v1028 = vmul.f32 %v770, %v1017
  %v1029 = vmul.f32 %v771, %v1021
  %v1030 = vmul.f32 %v908, %v989
  %v1031 = vmul.f32 %v909, %v993
  %v1032 = vmul.f32 %v910, %v997
  %v1033 = vmul.f32 %v911, %v1001
  %v1038 = vcombine.low %v1030, %v1031
  %v1039 = vcombine.low %v1032, %v1033
  %v1040 = vrot.slane %v1038, 6
  %v1041 = vrot.slane %v1039, 6
  %v1044 = vsub.f32 %v413, %v1040
  %v1045 = vsub.f32 %v414, %v1041
  %v1048 = vlaneseq
  %v1049 = vshrl.u32 %v1048, 7
  %v1050 = vsub.s32 2, %v1049
  %v1051 = vrot.slane %v1044, %v1050
  %v1052 = vlaneseq
  %v1053 = vshrl.u32 %v1052, 7
  %v1054 = vsub.s32 6, %v1053
  %v1055 = vrot.slane %v1044, %v1054
  %v1056 = vlaneseq
  %v1057 = vshrl.u32 %v1056, 7
  %v1058 = vsub.s32 2, %v1057
  %v1059 = vrot.slane %v1045, %v1058
  %v1060 = vlaneseq
  %v1061 = vshrl.u32 %v1060, 7
  %v1062 = vsub.s32 6, %v1061
  %v1063 = vrot.slane %v1045, %v1062
  %v1068 = vlaneseq
  %v1069 = vshrl.u32 %v1068, 7
  %v1070 = vsub.s32 2, %v1069
  %v1071 = vrot.slane %v1051, %v1070
  %v1072 = vlaneseq
  %v1073 = vshrl.u32 %v1072, 7
  %v1074 = vsub.s32 2, %v1073
  %v1075 = vrot.slane %v1055, %v1074
  %v1076 = vlaneseq
  %v1077 = vshrl.u32 %v1076, 7
  %v1078 = vsub.s32 2, %v1077
  %v1079 = vrot.slane %v1059, %v1078
  %v1080 = vlaneseq
  %v1081 = vshrl.u32 %v1080, 7
  %v1082 = vsub.s32 2, %v1081
  %v1083 = vrot.slane %v1063, %v1082
  %v1084 = vadd.f32 %v1022, %v1071
  %v1085 = vadd.f32 %v1023, %v1075
  %v1086 = vadd.f32 %v1024, %v1079
  %v1087 = vadd.f32 %v1025, %v1083
  %v1088 = vadd.f32 %v1026, %v1071
  %v1089 = vadd.f32 %v1027, %v1075
  %v1090 = vadd.f32 %v1028, %v1079
  %v1091 = vadd.f32 %v1029, %v1083
  %v1092 = vpack.c.bf16 %v1088, %v1084
  %v1093 = vpack.c.bf16 %v1089, %v1085
  %v1094 = vpack.c.bf16 %v1090, %v1086
  %v1095 = vpack.c.bf16 %v1091, %v1087
  %v1096 = vld [vmem:[%s7] sm:$0xf]
  %v1097 = vld [vmem:[%s7 + $0x4] sm:$0xf]
  %v1098 = vld [vmem:[%s7 + $0x8] sm:$0xf]
  %v1099 = vld [vmem:[%s7 + $0xc] sm:$0xf]
  %v1100 = vld [vmem:[%s7 + $0x10] sm:$0xf]
  %v1101 = vld [vmem:[%s7 + $0x14] sm:$0xf]
  %v1102 = vld [vmem:[%s7 + $0x18] sm:$0xf]
  %v1103 = vld [vmem:[%s7 + $0x1c] sm:$0xf]
  %v1104 = vld [vmem:[%s7 + $0x20] sm:$0xf]
  %v1105 = vld [vmem:[%s7 + $0x24] sm:$0xf]
  %v1106 = vld [vmem:[%s7 + $0x28] sm:$0xf]
  %v1107 = vld [vmem:[%s7 + $0x2c] sm:$0xf]
  %v1108 = vld [vmem:[%s7 + $0x30] sm:$0xf]
  %v1109 = vld [vmem:[%s7 + $0x34] sm:$0xf]
  %v1110 = vld [vmem:[%s7 + $0x38] sm:$0xf]
  %v1111 = vld [vmem:[%s7 + $0x3c] sm:$0xf]
  %v1112 = vld [vmem:[%s7 + $0x40] sm:$0xf]
  %v1113 = vld [vmem:[%s7 + $0x44] sm:$0xf]
  %v1114 = vld [vmem:[%s7 + $0x48] sm:$0xf]
  %v1115 = vld [vmem:[%s7 + $0x4c] sm:$0xf]
  %v1116 = vld [vmem:[%s7 + $0x50] sm:$0xf]
  %v1117 = vld [vmem:[%s7 + $0x54] sm:$0xf]
  %v1118 = vld [vmem:[%s7 + $0x58] sm:$0xf]
  %v1119 = vld [vmem:[%s7 + $0x5c] sm:$0xf]
  %v1120 = vld [vmem:[%s7 + $0x60] sm:$0xf]
  %v1121 = vld [vmem:[%s7 + $0x64] sm:$0xf]
  %v1122 = vld [vmem:[%s7 + $0x68] sm:$0xf]
  %v1123 = vld [vmem:[%s7 + $0x6c] sm:$0xf]
  %v1124 = vld [vmem:[%s7 + $0x70] sm:$0xf]
  %v1125 = vld [vmem:[%s7 + $0x74] sm:$0xf]
  %v1126 = vld [vmem:[%s7 + $0x78] sm:$0xf]
  %v1127 = vld [vmem:[%s7 + $0x7c] sm:$0xf]
  %v1128 = vld [vmem:[%s7 + $0x80] sm:$0xf]
  %v1129 = vld [vmem:[%s7 + $0x84] sm:$0xf]
  %v1130 = vld [vmem:[%s7 + $0x88] sm:$0xf]
  %v1131 = vld [vmem:[%s7 + $0x8c] sm:$0xf]
  %v1132 = vld [vmem:[%s7 + $0x90] sm:$0xf]
  %v1133 = vld [vmem:[%s7 + $0x94] sm:$0xf]
  %v1134 = vld [vmem:[%s7 + $0x98] sm:$0xf]
  %v1135 = vld [vmem:[%s7 + $0x9c] sm:$0xf]
  %v1136 = vld [vmem:[%s7 + $0xa0] sm:$0xf]
  %v1137 = vld [vmem:[%s7 + $0xa4] sm:$0xf]
  %v1138 = vld [vmem:[%s7 + $0xa8] sm:$0xf]
  %v1139 = vld [vmem:[%s7 + $0xac] sm:$0xf]
  %v1140 = vld [vmem:[%s7 + $0xb0] sm:$0xf]
  %v1141 = vld [vmem:[%s7 + $0xb4] sm:$0xf]
  %v1142 = vld [vmem:[%s7 + $0xb8] sm:$0xf]
  %v1143 = vld [vmem:[%s7 + $0xbc] sm:$0xf]
  %v1144 = vld [vmem:[%s7 + $0xc0] sm:$0xf]
  %v1145 = vld [vmem:[%s7 + $0xc4] sm:$0xf]
  %v1146 = vld [vmem:[%s7 + $0xc8] sm:$0xf]
  %v1147 = vld [vmem:[%s7 + $0xcc] sm:$0xf]
  %v1148 = vld [vmem:[%s7 + $0xd0] sm:$0xf]
  %v1149 = vld [vmem:[%s7 + $0xd4] sm:$0xf]
  %v1150 = vld [vmem:[%s7 + $0xd8] sm:$0xf]
  %v1151 = vld [vmem:[%s7 + $0xdc] sm:$0xf]
  %v1152 = vld [vmem:[%s7 + $0xe0] sm:$0xf]
  %v1153 = vld [vmem:[%s7 + $0xe4] sm:$0xf]
  %v1154 = vld [vmem:[%s7 + $0xe8] sm:$0xf]
  %v1155 = vld [vmem:[%s7 + $0xec] sm:$0xf]
  %v1156 = vld [vmem:[%s7 + $0xf0] sm:$0xf]
  %v1157 = vld [vmem:[%s7 + $0xf4] sm:$0xf]
  %v1158 = vld [vmem:[%s7 + $0xf8] sm:$0xf]
  %v1159 = vld [vmem:[%s7 + $0xfc] sm:$0xf]
  %v1160 = vlaneseq
  %v1161 = vshrl.u32 %v1160, 7
  %v1162 = vsub.s32 3, %v1161
  %v1163 = vrot.slane %v160, %v1162
  %v1228 = vunpack.c.l.b16 %v1096
  %v1229 = vunpack.c.l.b16 %v1097
  %v1230 = vunpack.c.l.b16 %v1098
  %v1231 = vunpack.c.l.b16 %v1099
  %v1232 = vunpack.c.l.b16 %v1100
  %v1233 = vunpack.c.l.b16 %v1101
  %v1234 = vunpack.c.l.b16 %v1102
  %v1235 = vunpack.c.l.b16 %v1103
  %v1236 = vunpack.c.l.b16 %v1104
  %v1237 = vunpack.c.l.b16 %v1105
  %v1238 = vunpack.c.l.b16 %v1106
  %v1239 = vunpack.c.l.b16 %v1107
  %v1240 = vunpack.c.l.b16 %v1108
  %v1241 = vunpack.c.l.b16 %v1109
  %v1242 = vunpack.c.l.b16 %v1110
  %v1243 = vunpack.c.l.b16 %v1111
  %v1244 = vunpack.c.l.b16 %v1112
  %v1245 = vunpack.c.l.b16 %v1113
  %v1246 = vunpack.c.l.b16 %v1114
  %v1247 = vunpack.c.l.b16 %v1115
  %v1248 = vunpack.c.l.b16 %v1116
  %v1249 = vunpack.c.l.b16 %v1117
  %v1250 = vunpack.c.l.b16 %v1118
  %v1251 = vunpack.c.l.b16 %v1119
  %v1252 = vunpack.c.l.b16 %v1120
  %v1253 = vunpack.c.l.b16 %v1121
  %v1254 = vunpack.c.l.b16 %v1122
  %v1255 = vunpack.c.l.b16 %v1123
  %v1256 = vunpack.c.l.b16 %v1124
  %v1257 = vunpack.c.l.b16 %v1125
  %v1258 = vunpack.c.l.b16 %v1126
  %v1259 = vunpack.c.l.b16 %v1127
  %v1260 = vunpack.c.l.b16 %v1128
  %v1261 = vunpack.c.l.b16 %v1129
  %v1262 = vunpack.c.l.b16 %v1130
  %v1263 = vunpack.c.l.b16 %v1131
  %v1264 = vunpack.c.l.b16 %v1132
  %v1265 = vunpack.c.l.b16 %v1133
  %v1266 = vunpack.c.l.b16 %v1134
  %v1267 = vunpack.c.l.b16 %v1135
  %v1268 = vunpack.c.l.b16 %v1136
  %v1269 = vunpack.c.l.b16 %v1137
  %v1270 = vunpack.c.l.b16 %v1138
  %v1271 = vunpack.c.l.b16 %v1139
  %v1272 = vunpack.c.l.b16 %v1140
  %v1273 = vunpack.c.l.b16 %v1141
  %v1274 = vunpack.c.l.b16 %v1142
  %v1275 = vunpack.c.l.b16 %v1143
  %v1276 = vunpack.c.l.b16 %v1144
  %v1277 = vunpack.c.l.b16 %v1145
  %v1278 = vunpack.c.l.b16 %v1146
  %v1279 = vunpack.c.l.b16 %v1147
  %v1280 = vunpack.c.l.b16 %v1148
  %v1281 = vunpack.c.l.b16 %v1149
  %v1282 = vunpack.c.l.b16 %v1150
  %v1283 = vunpack.c.l.b16 %v1151
  %v1284 = vunpack.c.l.b16 %v1152
  %v1285 = vunpack.c.l.b16 %v1153
  %v1286 = vunpack.c.l.b16 %v1154
  %v1287 = vunpack.c.l.b16 %v1155
  %v1288 = vunpack.c.l.b16 %v1156
  %v1289 = vunpack.c.l.b16 %v1157
  %v1290 = vunpack.c.l.b16 %v1158
  %v1291 = vunpack.c.l.b16 %v1159
  %v1292 = vpack.c.b16 %v1229, %v1228
  %v1293 = vpack.c.b16 %v1231, %v1230
  %v1294 = vpack.c.b16 %v1233, %v1232
  %v1295 = vpack.c.b16 %v1235, %v1234
  %v1296 = vpack.c.b16 %v1237, %v1236
  %v1297 = vpack.c.b16 %v1239, %v1238
  %v1298 = vpack.c.b16 %v1241, %v1240
  %v1299 = vpack.c.b16 %v1243, %v1242
  %v1300 = vpack.c.b16 %v1245, %v1244
  %v1301 = vpack.c.b16 %v1247, %v1246
  %v1302 = vpack.c.b16 %v1249, %v1248
  %v1303 = vpack.c.b16 %v1251, %v1250
  %v1304 = vpack.c.b16 %v1253, %v1252
  %v1305 = vpack.c.b16 %v1255, %v1254
  %v1306 = vpack.c.b16 %v1257, %v1256
  %v1307 = vpack.c.b16 %v1259, %v1258
  %v1308 = vpack.c.b16 %v1261, %v1260
  %v1309 = vpack.c.b16 %v1263, %v1262
  %v1310 = vpack.c.b16 %v1265, %v1264
  %v1311 = vpack.c.b16 %v1267, %v1266
  %v1312 = vpack.c.b16 %v1269, %v1268
  %v1313 = vpack.c.b16 %v1271, %v1270
  %v1314 = vpack.c.b16 %v1273, %v1272
  %v1315 = vpack.c.b16 %v1275, %v1274
  %v1316 = vpack.c.b16 %v1277, %v1276
  %v1317 = vpack.c.b16 %v1279, %v1278
  %v1318 = vpack.c.b16 %v1281, %v1280
  %v1319 = vpack.c.b16 %v1283, %v1282
  %v1320 = vpack.c.b16 %v1285, %v1284
  %v1321 = vpack.c.b16 %v1287, %v1286
  %v1322 = vpack.c.b16 %v1289, %v1288
  %v1323 = vpack.c.b16 %v1291, %v1290
  %1356 = vmatprep.subr.bf16.mxu0 0
  %1357 = vmatpush1.bf16.msra.mxu0 %v1292
  %1358 = vmatprep.subr.bf16.mxu0 0
  %1359 = vmatpush1.bf16.msra.mxu0 %v1293
  %1360 = vmatprep.subr.bf16.mxu0 0
  %1361 = vmatpush1.bf16.msra.mxu0 %v1294
  %1362 = vmatprep.subr.bf16.mxu0 0
  %1363 = vmatpush1.bf16.msra.mxu0 %v1295
  %1364 = vmatprep.subr.bf16.mxu0 0
  %1365 = vmatpush1.bf16.msra.mxu0 %v1296
  %1366 = vmatprep.subr.bf16.mxu0 0
  %1367 = vmatpush1.bf16.msra.mxu0 %v1297
  %1368 = vmatprep.subr.bf16.mxu0 0
  %1369 = vmatpush1.bf16.msra.mxu0 %v1298
  %1370 = vmatprep.subr.bf16.mxu0 0
  %1371 = vmatpush1.bf16.msra.mxu0 %v1299
  %1372 = vmatprep.subr.bf16.mxu0 0
  %1373 = vmatpush1.bf16.msra.mxu0 %v1300
  %1374 = vmatprep.subr.bf16.mxu0 0
  %1375 = vmatpush1.bf16.msra.mxu0 %v1301
  %1376 = vmatprep.subr.bf16.mxu0 0
  %1377 = vmatpush1.bf16.msra.mxu0 %v1302
  %1378 = vmatprep.subr.bf16.mxu0 0
  %1379 = vmatpush1.bf16.msra.mxu0 %v1303
  %1380 = vmatprep.subr.bf16.mxu0 0
  %1381 = vmatpush1.bf16.msra.mxu0 %v1304
  %1382 = vmatprep.subr.bf16.mxu0 0
  %1383 = vmatpush1.bf16.msra.mxu0 %v1305
  %1384 = vmatprep.subr.bf16.mxu0 0
  %1385 = vmatpush1.bf16.msra.mxu0 %v1306
  %1386 = vmatprep.subr.bf16.mxu0 0
  %1387 = vmatpush1.bf16.msra.mxu0 %v1307
  %1388 = vmatprep.mubr.bf16.mxu0 %v1093
  %1389 = vmatmul.mubr.bf16.gmra.mrb[0].mxu0 %v1092
  %v1390 = vpop.f32.mrb[0].mxu0
  %v1391 = vadd.f32 %v1163, %v1390
  %v1392 = vpop.f32.mrb[0].mxu0
  %v1393 = vpop.f32.mrb[0].mxu0
  %v1394 = vadd.f32 %v1163, %v1393
  %v1395 = vpop.f32.mrb[0].mxu0
  %1396 = vdwg.mxu0
  %1397 = vmatprep.subr.bf16.mxu0 0
  %1398 = vmatpush1.bf16.msra.mxu0 %v1308
  %1399 = vmatprep.subr.bf16.mxu0 0
  %1400 = vmatpush1.bf16.msra.mxu0 %v1309
  %1401 = vmatprep.subr.bf16.mxu0 0
  %1402 = vmatpush1.bf16.msra.mxu0 %v1310
  %1403 = vmatprep.subr.bf16.mxu0 0
  %1404 = vmatpush1.bf16.msra.mxu0 %v1311
  %1405 = vmatprep.subr.bf16.mxu0 0
  %1406 = vmatpush1.bf16.msra.mxu0 %v1312
  %1407 = vmatprep.subr.bf16.mxu0 0
  %1408 = vmatpush1.bf16.msra.mxu0 %v1313
  %1409 = vmatprep.subr.bf16.mxu0 0
  %1410 = vmatpush1.bf16.msra.mxu0 %v1314
  %1411 = vmatprep.subr.bf16.mxu0 0
  %1412 = vmatpush1.bf16.msra.mxu0 %v1315
  %1413 = vmatprep.subr.bf16.mxu0 0
  %1414 = vmatpush1.bf16.msra.mxu0 %v1316
  %1415 = vmatprep.subr.bf16.mxu0 0
  %1416 = vmatpush1.bf16.msra.mxu0 %v1317
  %1417 = vmatprep.subr.bf16.mxu0 0
  %1418 = vmatpush1.bf16.msra.mxu0 %v1318
  %1419 = vmatprep.subr.bf16.mxu0 0
  %1420 = vmatpush1.bf16.msra.mxu0 %v1319
  %1421 = vmatprep.subr.bf16.mxu0 0
  %1422 = vmatpush1.bf16.msra.mxu0 %v1320
  %1423 = vmatprep.subr.bf16.mxu0 0
  %1424 = vmatpush1.bf16.msra.mxu0 %v1321
  %1425 = vmatprep.subr.bf16.mxu0 0
  %1426 = vmatpush1.bf16.msra.mxu0 %v1322
  %1427 = vmatprep.subr.bf16.mxu0 0
  %1428 = vmatpush1.bf16.msra.mxu0 %v1323
  %1429 = vmatprep.mubr.bf16.mxu0 %v1095
  %1430 = vmatmul.mubr.bf16.gmra.mrb[0].mxu0 %v1094
  %v1431 = vpop.f32.mrb[0].mxu0
  %v1432 = vadd.f32 %v1391, %v1431
  %v1433 = vpop.f32.mrb[0].mxu0
  %v1434 = vpop.f32.mrb[0].mxu0
  %v1435 = vadd.f32 %v1394, %v1434
  %v1436 = vpop.f32.mrb[0].mxu0
  %1437 = vdwg.mxu0
  %v1438 = vmul.f32 %v1432, 0.5
  %v1439 = vmul.f32 %v1435, 0.5
  %v1440 = vmul.f32 %v1432, 0.70710677
  %v1441 = vmul.f32 %v1435, 0.70710677
  %v1442 = verf.f32.pop %v1440
  %v1443 = verf.f32.pop %v1441
  %v1444 = vadd.f32 %v1442, 1.0
  %v1445 = vadd.f32 %v1443, 1.0
  %v1446 = vmul.f32 %v1438, %v1444
  %v1447 = vmul.f32 %v1439, %v1445
  %v1448 = vadd.f32 %v1446, %v1447
  %v1449 = vrot.slane %v1448, 4
  %v1450 = vadd.f32 %v1448, %v1449
  %v1451 = vrot.slane %v1450, 2
  %v1452 = vadd.f32 %v1450, %v1451
  %v1453 = vrot.slane %v1452, 1
  %v1454 = vadd.f32 %v1452, %v1453
  %v1455 = vmul.f32 %v1446, %v1446
  %v1456 = vmul.f32 %v1447, %v1447
  %v1457 = vadd.f32 %v1455, %v1456
  %v1458 = vrot.slane %v1457, 4
  %v1459 = vadd.f32 %v1457, %v1458
  %v1460 = vrot.slane %v1459, 2
  %v1461 = vadd.f32 %v1459, %v1460
  %v1462 = vrot.slane %v1461, 1
  %v1463 = vadd.f32 %v1461, %v1462
  %v1464 = vmul.f32 %v51, %v1454
  %v1465 = vsel %vm362, %v1464, 0.0
  %1466 = vadd.xlane.f32.xlu0 %v1465
  %v1467 = vpop.xlane.xlu0 %1466
  %v1468 = vmul.f32 %v51, %v1463
  %v1469 = vsel %vm362, %v1468, 0.0
  %1470 = vadd.xlane.f32.xlu0 %v1469
  %v1471 = vpop.xlane.xlu0 %1470
  %v1472 = vmul.f32 %v51, %v1467
  %v1473 = vsel %vm362, %v1472, 0.0
  %v1474 = vrot.slane %v1473, 4
  %v1475 = vadd.f32 %v1473, %v1474
  %v1476 = vrot.slane %v1475, 2
  %v1477 = vadd.f32 %v1475, %v1476
  %v1478 = vrot.slane %v1477, 1
  %v1479 = vadd.f32 %v1477, %v1478
  %v1480 = vmul.f32 %v1479, 0.001953125
  %v1481 = vmul.f32 %v51, %v1471
  %v1482 = vsel %vm362, %v1481, 0.0
  %v1483 = vrot.slane %v1482, 4
  %v1484 = vadd.f32 %v1482, %v1483
  %v1485 = vrot.slane %v1484, 2
  %v1486 = vadd.f32 %v1484, %v1485
  %v1487 = vrot.slane %v1486, 1
  %v1488 = vadd.f32 %v1486, %v1487
  %v1489 = vmul.f32 %v1488, 0.001953125
  %v1490 = vmul.f32 %v1480, %v1480
  %v1491 = vsub.f32 %v1489, %v1490
  %v1492 = vmax.f32 %v1491, 0.0
  %v1493 = vadd.f32 %v1492, 1e-05
  %v1494 = vrsqrt.pop %v1493
  %v1495 = vmul.f32 %v160, %v1494
  %v1496 = vlaneseq
  %v1497 = vshrl.u32 %v1496, 7
  %v1498 = vsub.s32 4, %v1497
  %v1499 = vrot.slane %v1495, %v1498
  %v1500 = vmul.f32 %v1446, %v1499
  %v1501 = vmul.f32 %v1447, %v1499
  %v1502 = vmul.f32 %v1480, %v1495
  %v1504 = vrot.slane %v1502, 7
  %v1506 = vsub.f32 %v160, %v1504
  %v1507 = vlaneseq
  %v1508 = vshrl.u32 %v1507, 7
  %v1509 = vsub.s32 5, %v1508
  %v1510 = vrot.slane %v1506, %v1509
  %v1511 = vadd.f32 %v1500, %v1510
  %v1512 = vadd.f32 %v1501, %v1510
  %v1513 = vpack.c.bf16 %v1512, %v1511
  %s1514 = scalar_lea.vmem %s8, 128
  %v1515 = vld [vmem:[%s1514] sm:$0xff]
  %v1516 = vld [vmem:[%s1514 + $0x8] sm:$0xff]
  %v1517 = vld [vmem:[%s1514 + $0x10] sm:$0xff]
  %v1518 = vld [vmem:[%s1514 + $0x18] sm:$0xff]
  %v1519 = vld [vmem:[%s1514 + $0x20] sm:$0xff]
  %v1520 = vld [vmem:[%s1514 + $0x28] sm:$0xff]
  %v1521 = vld [vmem:[%s1514 + $0x30] sm:$0xff]
  %v1522 = vld [vmem:[%s1514 + $0x38] sm:$0xff]
  %v1523 = vld [vmem:[%s1514 + $0x40] sm:$0xff]
  %v1524 = vld [vmem:[%s1514 + $0x48] sm:$0xff]
  %v1525 = vld [vmem:[%s1514 + $0x50] sm:$0xff]
  %v1526 = vld [vmem:[%s1514 + $0x58] sm:$0xff]
  %v1527 = vld [vmem:[%s1514 + $0x60] sm:$0xff]
  %v1528 = vld [vmem:[%s1514 + $0x68] sm:$0xff]
  %v1529 = vld [vmem:[%s1514 + $0x70] sm:$0xff]
  %v1530 = vld [vmem:[%s1514 + $0x78] sm:$0xff]
  %v1531 = vrot.slane %v1511, 7
  %v1532 = vrot.slane %v1512, 7
  %v1533 = vsel %vm179, %v1531, %v1532
  %v1534 = vsel %vm179, %v1532, %v1531
  %v1535 = vmul.f32 %v1534, %v187
  %v1536 = vmul.f32 %v1533, %v192
  %v1537 = vpack.c.bf16 %v1536, %v1535
  %v1538 = vld [vmem:[%s8] sm:$0xff]
  %v1539 = vld [vmem:[%s8 + $0x8] sm:$0xff]
  %v1540 = vld [vmem:[%s8 + $0x10] sm:$0xff]
  %v1541 = vld [vmem:[%s8 + $0x18] sm:$0xff]
  %v1542 = vld [vmem:[%s8 + $0x20] sm:$0xff]
  %v1543 = vld [vmem:[%s8 + $0x28] sm:$0xff]
  %v1544 = vld [vmem:[%s8 + $0x30] sm:$0xff]
  %v1545 = vld [vmem:[%s8 + $0x38] sm:$0xff]
  %v1546 = vld [vmem:[%s8 + $0x40] sm:$0xff]
  %v1547 = vld [vmem:[%s8 + $0x48] sm:$0xff]
  %v1548 = vld [vmem:[%s8 + $0x50] sm:$0xff]
  %v1549 = vld [vmem:[%s8 + $0x58] sm:$0xff]
  %v1550 = vld [vmem:[%s8 + $0x60] sm:$0xff]
  %v1551 = vld [vmem:[%s8 + $0x68] sm:$0xff]
  %v1552 = vld [vmem:[%s8 + $0x70] sm:$0xff]
  %v1553 = vld [vmem:[%s8 + $0x78] sm:$0xff]
  %v1570 = vunpack.c.l.b16 %v1538
  %v1571 = vunpack.c.h.b16 %v1538
  %v1572 = vunpack.c.l.b16 %v1539
  %v1573 = vunpack.c.h.b16 %v1539
  %v1574 = vunpack.c.l.b16 %v1540
  %v1575 = vunpack.c.h.b16 %v1540
  %v1576 = vunpack.c.l.b16 %v1541
  %v1577 = vunpack.c.h.b16 %v1541
  %v1578 = vunpack.c.l.b16 %v1542
  %v1579 = vunpack.c.h.b16 %v1542
  %v1580 = vunpack.c.l.b16 %v1543
  %v1581 = vunpack.c.h.b16 %v1543
  %v1582 = vunpack.c.l.b16 %v1544
  %v1583 = vunpack.c.h.b16 %v1544
  %v1584 = vunpack.c.l.b16 %v1545
  %v1585 = vunpack.c.h.b16 %v1545
  %v1586 = vunpack.c.l.b16 %v1546
  %v1587 = vunpack.c.h.b16 %v1546
  %v1588 = vunpack.c.l.b16 %v1547
  %v1589 = vunpack.c.h.b16 %v1547
  %v1590 = vunpack.c.l.b16 %v1548
  %v1591 = vunpack.c.h.b16 %v1548
  %v1592 = vunpack.c.l.b16 %v1549
  %v1593 = vunpack.c.h.b16 %v1549
  %v1594 = vunpack.c.l.b16 %v1550
  %v1595 = vunpack.c.h.b16 %v1550
  %v1596 = vunpack.c.l.b16 %v1551
  %v1597 = vunpack.c.h.b16 %v1551
  %v1598 = vunpack.c.l.b16 %v1552
  %v1599 = vunpack.c.h.b16 %v1552
  %v1600 = vunpack.c.l.b16 %v1553
  %v1601 = vunpack.c.h.b16 %v1553
  %v1602 = vpack.c.b16 %v1572, %v1570
  %v1603 = vpack.c.b16 %v1573, %v1571
  %v1604 = vpack.c.b16 %v1576, %v1574
  %v1605 = vpack.c.b16 %v1577, %v1575
  %v1606 = vpack.c.b16 %v1580, %v1578
  %v1607 = vpack.c.b16 %v1581, %v1579
  %v1608 = vpack.c.b16 %v1584, %v1582
  %v1609 = vpack.c.b16 %v1585, %v1583
  %v1610 = vpack.c.b16 %v1588, %v1586
  %v1611 = vpack.c.b16 %v1589, %v1587
  %v1612 = vpack.c.b16 %v1592, %v1590
  %v1613 = vpack.c.b16 %v1593, %v1591
  %v1614 = vpack.c.b16 %v1596, %v1594
  %v1615 = vpack.c.b16 %v1597, %v1595
  %v1616 = vpack.c.b16 %v1600, %v1598
  %v1617 = vpack.c.b16 %v1601, %v1599
  %1634 = vmatprep.subr.bf16.mxu0 %v1603
  %1635 = vmatpush1.bf16.msra.mxu0 %v1602
  %1636 = vmatprep.subr.bf16.mxu0 %v1605
  %1637 = vmatpush1.bf16.msra.mxu0 %v1604
  %1638 = vmatprep.subr.bf16.mxu0 %v1607
  %1639 = vmatpush1.bf16.msra.mxu0 %v1606
  %1640 = vmatprep.subr.bf16.mxu0 %v1609
  %1641 = vmatpush1.bf16.msra.mxu0 %v1608
  %1642 = vmatprep.subr.bf16.mxu0 %v1611
  %1643 = vmatpush1.bf16.msra.mxu0 %v1610
  %1644 = vmatprep.subr.bf16.mxu0 %v1613
  %1645 = vmatpush1.bf16.msra.mxu0 %v1612
  %1646 = vmatprep.subr.bf16.mxu0 %v1615
  %1647 = vmatpush1.bf16.msra.mxu0 %v1614
  %1648 = vmatprep.subr.bf16.mxu0 %v1617
  %1649 = vmatpush1.bf16.msra.mxu0 %v1616
  %1650 = vmatprep.subr.bf16.mxu0 0
  %1651 = vmatpush1.bf16.msra.mxu0 0
  %1652 = vmatprep.subr.bf16.mxu0 0
  %1653 = vmatpush1.bf16.msra.mxu0 0
  %1654 = vmatprep.subr.bf16.mxu0 0
  %1655 = vmatpush1.bf16.msra.mxu0 0
  %1656 = vmatprep.subr.bf16.mxu0 0
  %1657 = vmatpush1.bf16.msra.mxu0 0
  %1658 = vmatprep.subr.bf16.mxu0 0
  %1659 = vmatpush1.bf16.msra.mxu0 0
  %1660 = vmatprep.subr.bf16.mxu0 0
  %1661 = vmatpush1.bf16.msra.mxu0 0
  %1662 = vmatprep.subr.bf16.mxu0 0
  %1663 = vmatpush1.bf16.msra.mxu0 0
  %1664 = vmatprep.subr.bf16.mxu0 0
  %1665 = vmatpush1.bf16.msra.mxu0 0
  %1666 = vmatprep.mubr.bf16.mxu0 0
  %1667 = vmatmul.mubr.bf16.gmra.mrb[0].mxu0 %v1537
  %v1668 = vpop.f32.mrb[0].mxu0
  %v1669 = vadd.f32 0.0, %v1668
  %v1670 = vpop.f32.mrb[0].mxu0
  %v1671 = vadd.f32 0.0, %v1670
  %v1672 = vpop.f32.mrb[0].mxu0
  %v1673 = vadd.f32 0.0, %v1672
  %v1674 = vpop.f32.mrb[0].mxu0
  %v1675 = vadd.f32 0.0, %v1674
  %1676 = vdwg.mxu0
  %v1693 = vunpack.c.l.b16 %v1515
  %v1694 = vunpack.c.h.b16 %v1515
  %v1695 = vunpack.c.l.b16 %v1516
  %v1696 = vunpack.c.h.b16 %v1516
  %v1697 = vunpack.c.l.b16 %v1517
  %v1698 = vunpack.c.h.b16 %v1517
  %v1699 = vunpack.c.l.b16 %v1518
  %v1700 = vunpack.c.h.b16 %v1518
  %v1701 = vunpack.c.l.b16 %v1519
  %v1702 = vunpack.c.h.b16 %v1519
  %v1703 = vunpack.c.l.b16 %v1520
  %v1704 = vunpack.c.h.b16 %v1520
  %v1705 = vunpack.c.l.b16 %v1521
  %v1706 = vunpack.c.h.b16 %v1521
  %v1707 = vunpack.c.l.b16 %v1522
  %v1708 = vunpack.c.h.b16 %v1522
  %v1709 = vunpack.c.l.b16 %v1523
  %v1710 = vunpack.c.h.b16 %v1523
  %v1711 = vunpack.c.l.b16 %v1524
  %v1712 = vunpack.c.h.b16 %v1524
  %v1713 = vunpack.c.l.b16 %v1525
  %v1714 = vunpack.c.h.b16 %v1525
  %v1715 = vunpack.c.l.b16 %v1526
  %v1716 = vunpack.c.h.b16 %v1526
  %v1717 = vunpack.c.l.b16 %v1527
  %v1718 = vunpack.c.h.b16 %v1527
  %v1719 = vunpack.c.l.b16 %v1528
  %v1720 = vunpack.c.h.b16 %v1528
  %v1721 = vunpack.c.l.b16 %v1529
  %v1722 = vunpack.c.h.b16 %v1529
  %v1723 = vunpack.c.l.b16 %v1530
  %v1724 = vunpack.c.h.b16 %v1530
  %v1725 = vpack.c.b16 %v1695, %v1693
  %v1726 = vpack.c.b16 %v1696, %v1694
  %v1727 = vpack.c.b16 %v1699, %v1697
  %v1728 = vpack.c.b16 %v1700, %v1698
  %v1729 = vpack.c.b16 %v1703, %v1701
  %v1730 = vpack.c.b16 %v1704, %v1702
  %v1731 = vpack.c.b16 %v1707, %v1705
  %v1732 = vpack.c.b16 %v1708, %v1706
  %v1733 = vpack.c.b16 %v1711, %v1709
  %v1734 = vpack.c.b16 %v1712, %v1710
  %v1735 = vpack.c.b16 %v1715, %v1713
  %v1736 = vpack.c.b16 %v1716, %v1714
  %v1737 = vpack.c.b16 %v1719, %v1717
  %v1738 = vpack.c.b16 %v1720, %v1718
  %v1739 = vpack.c.b16 %v1723, %v1721
  %v1740 = vpack.c.b16 %v1724, %v1722
  %1757 = vmatprep.subr.bf16.mxu0 %v1726
  %1758 = vmatpush1.bf16.msra.mxu0 %v1725
  %1759 = vmatprep.subr.bf16.mxu0 %v1728
  %1760 = vmatpush1.bf16.msra.mxu0 %v1727
  %1761 = vmatprep.subr.bf16.mxu0 %v1730
  %1762 = vmatpush1.bf16.msra.mxu0 %v1729
  %1763 = vmatprep.subr.bf16.mxu0 %v1732
  %1764 = vmatpush1.bf16.msra.mxu0 %v1731
  %1765 = vmatprep.subr.bf16.mxu0 %v1734
  %1766 = vmatpush1.bf16.msra.mxu0 %v1733
  %1767 = vmatprep.subr.bf16.mxu0 %v1736
  %1768 = vmatpush1.bf16.msra.mxu0 %v1735
  %1769 = vmatprep.subr.bf16.mxu0 %v1738
  %1770 = vmatpush1.bf16.msra.mxu0 %v1737
  %1771 = vmatprep.subr.bf16.mxu0 %v1740
  %1772 = vmatpush1.bf16.msra.mxu0 %v1739
  %1773 = vmatprep.subr.bf16.mxu0 0
  %1774 = vmatpush1.bf16.msra.mxu0 0
  %1775 = vmatprep.subr.bf16.mxu0 0
  %1776 = vmatpush1.bf16.msra.mxu0 0
  %1777 = vmatprep.subr.bf16.mxu0 0
  %1778 = vmatpush1.bf16.msra.mxu0 0
  %1779 = vmatprep.subr.bf16.mxu0 0
  %1780 = vmatpush1.bf16.msra.mxu0 0
  %1781 = vmatprep.subr.bf16.mxu0 0
  %1782 = vmatpush1.bf16.msra.mxu0 0
  %1783 = vmatprep.subr.bf16.mxu0 0
  %1784 = vmatpush1.bf16.msra.mxu0 0
  %1785 = vmatprep.subr.bf16.mxu0 0
  %1786 = vmatpush1.bf16.msra.mxu0 0
  %1787 = vmatprep.subr.bf16.mxu0 0
  %1788 = vmatpush1.bf16.msra.mxu0 0
  %1789 = vmatprep.mubr.bf16.mxu0 0
  %1790 = vmatmul.mubr.bf16.gmra.mrb[0].mxu0 %v1513
  %v1791 = vpop.f32.mrb[0].mxu0
  %v1792 = vadd.f32 %v1669, %v1791
  %v1793 = vpop.f32.mrb[0].mxu0
  %v1794 = vadd.f32 %v1671, %v1793
  %v1795 = vpop.f32.mrb[0].mxu0
  %v1796 = vadd.f32 %v1673, %v1795
  %v1797 = vpop.f32.mrb[0].mxu0
  %v1798 = vadd.f32 %v1675, %v1797
  %1799 = vdwg.mxu0
  %v1800 = vrot.slane %v1511, 1
  %v1801 = vrot.slane %v1512, 1
  %v1802 = vsel %vm273, %v1800, %v1801
  %v1803 = vsel %vm273, %v1801, %v1800
  %v1804 = vmul.f32 %v1802, %v282
  %v1805 = vmul.f32 %v1803, %v287
  %v1806 = vpack.c.bf16 %v1805, %v1804
  %s1807 = scalar_lea.vmem %s8, 256
  %v1808 = vld [vmem:[%s1807] sm:$0xff]
  %v1809 = vld [vmem:[%s1807 + $0x8] sm:$0xff]
  %v1810 = vld [vmem:[%s1807 + $0x10] sm:$0xff]
  %v1811 = vld [vmem:[%s1807 + $0x18] sm:$0xff]
  %v1812 = vld [vmem:[%s1807 + $0x20] sm:$0xff]
  %v1813 = vld [vmem:[%s1807 + $0x28] sm:$0xff]
  %v1814 = vld [vmem:[%s1807 + $0x30] sm:$0xff]
  %v1815 = vld [vmem:[%s1807 + $0x38] sm:$0xff]
  %v1816 = vld [vmem:[%s1807 + $0x40] sm:$0xff]
  %v1817 = vld [vmem:[%s1807 + $0x48] sm:$0xff]
  %v1818 = vld [vmem:[%s1807 + $0x50] sm:$0xff]
  %v1819 = vld [vmem:[%s1807 + $0x58] sm:$0xff]
  %v1820 = vld [vmem:[%s1807 + $0x60] sm:$0xff]
  %v1821 = vld [vmem:[%s1807 + $0x68] sm:$0xff]
  %v1822 = vld [vmem:[%s1807 + $0x70] sm:$0xff]
  %v1823 = vld [vmem:[%s1807 + $0x78] sm:$0xff]
  %v1840 = vunpack.c.l.b16 %v1808
  %v1841 = vunpack.c.h.b16 %v1808
  %v1842 = vunpack.c.l.b16 %v1809
  %v1843 = vunpack.c.h.b16 %v1809
  %v1844 = vunpack.c.l.b16 %v1810
  %v1845 = vunpack.c.h.b16 %v1810
  %v1846 = vunpack.c.l.b16 %v1811
  %v1847 = vunpack.c.h.b16 %v1811
  %v1848 = vunpack.c.l.b16 %v1812
  %v1849 = vunpack.c.h.b16 %v1812
  %v1850 = vunpack.c.l.b16 %v1813
  %v1851 = vunpack.c.h.b16 %v1813
  %v1852 = vunpack.c.l.b16 %v1814
  %v1853 = vunpack.c.h.b16 %v1814
  %v1854 = vunpack.c.l.b16 %v1815
  %v1855 = vunpack.c.h.b16 %v1815
  %v1856 = vunpack.c.l.b16 %v1816
  %v1857 = vunpack.c.h.b16 %v1816
  %v1858 = vunpack.c.l.b16 %v1817
  %v1859 = vunpack.c.h.b16 %v1817
  %v1860 = vunpack.c.l.b16 %v1818
  %v1861 = vunpack.c.h.b16 %v1818
  %v1862 = vunpack.c.l.b16 %v1819
  %v1863 = vunpack.c.h.b16 %v1819
  %v1864 = vunpack.c.l.b16 %v1820
  %v1865 = vunpack.c.h.b16 %v1820
  %v1866 = vunpack.c.l.b16 %v1821
  %v1867 = vunpack.c.h.b16 %v1821
  %v1868 = vunpack.c.l.b16 %v1822
  %v1869 = vunpack.c.h.b16 %v1822
  %v1870 = vunpack.c.l.b16 %v1823
  %v1871 = vunpack.c.h.b16 %v1823
  %v1872 = vpack.c.b16 %v1842, %v1840
  %v1873 = vpack.c.b16 %v1843, %v1841
  %v1874 = vpack.c.b16 %v1846, %v1844
  %v1875 = vpack.c.b16 %v1847, %v1845
  %v1876 = vpack.c.b16 %v1850, %v1848
  %v1877 = vpack.c.b16 %v1851, %v1849
  %v1878 = vpack.c.b16 %v1854, %v1852
  %v1879 = vpack.c.b16 %v1855, %v1853
  %v1880 = vpack.c.b16 %v1858, %v1856
  %v1881 = vpack.c.b16 %v1859, %v1857
  %v1882 = vpack.c.b16 %v1862, %v1860
  %v1883 = vpack.c.b16 %v1863, %v1861
  %v1884 = vpack.c.b16 %v1866, %v1864
  %v1885 = vpack.c.b16 %v1867, %v1865
  %v1886 = vpack.c.b16 %v1870, %v1868
  %v1887 = vpack.c.b16 %v1871, %v1869
  %1904 = vmatprep.subr.bf16.mxu0 %v1873
  %1905 = vmatpush1.bf16.msra.mxu0 %v1872
  %1906 = vmatprep.subr.bf16.mxu0 %v1875
  %1907 = vmatpush1.bf16.msra.mxu0 %v1874
  %1908 = vmatprep.subr.bf16.mxu0 %v1877
  %1909 = vmatpush1.bf16.msra.mxu0 %v1876
  %1910 = vmatprep.subr.bf16.mxu0 %v1879
  %1911 = vmatpush1.bf16.msra.mxu0 %v1878
  %1912 = vmatprep.subr.bf16.mxu0 %v1881
  %1913 = vmatpush1.bf16.msra.mxu0 %v1880
  %1914 = vmatprep.subr.bf16.mxu0 %v1883
  %1915 = vmatpush1.bf16.msra.mxu0 %v1882
  %1916 = vmatprep.subr.bf16.mxu0 %v1885
  %1917 = vmatpush1.bf16.msra.mxu0 %v1884
  %1918 = vmatprep.subr.bf16.mxu0 %v1887
  %1919 = vmatpush1.bf16.msra.mxu0 %v1886
  %1920 = vmatprep.subr.bf16.mxu0 0
  %1921 = vmatpush1.bf16.msra.mxu0 0
  %1922 = vmatprep.subr.bf16.mxu0 0
  %1923 = vmatpush1.bf16.msra.mxu0 0
  %1924 = vmatprep.subr.bf16.mxu0 0
  %1925 = vmatpush1.bf16.msra.mxu0 0
  %1926 = vmatprep.subr.bf16.mxu0 0
  %1927 = vmatpush1.bf16.msra.mxu0 0
  %1928 = vmatprep.subr.bf16.mxu0 0
  %1929 = vmatpush1.bf16.msra.mxu0 0
  %1930 = vmatprep.subr.bf16.mxu0 0
  %1931 = vmatpush1.bf16.msra.mxu0 0
  %1932 = vmatprep.subr.bf16.mxu0 0
  %1933 = vmatpush1.bf16.msra.mxu0 0
  %1934 = vmatprep.subr.bf16.mxu0 0
  %1935 = vmatpush1.bf16.msra.mxu0 0
  %1936 = vmatprep.mubr.bf16.mxu0 0
  %1937 = vmatmul.mubr.bf16.gmra.mrb[0].mxu0 %v1806
  %v1938 = vpop.f32.mrb[0].mxu0
  %v1939 = vadd.f32 0.0, %v1938
  %v1940 = vpop.f32.mrb[0].mxu0
  %v1941 = vadd.f32 0.0, %v1940
  %v1942 = vpop.f32.mrb[0].mxu0
  %v1943 = vadd.f32 0.0, %v1942
  %v1944 = vpop.f32.mrb[0].mxu0
  %v1945 = vadd.f32 0.0, %v1944
  %1946 = vdwg.mxu0
  %v1947 = vadd.f32 %v1792, %v1939
  %v1948 = vadd.f32 %v1794, %v1941
  %v1949 = vadd.f32 %v1796, %v1943
  %v1950 = vadd.f32 %v1798, %v1945
  %v1951 = vld [vmem:[%s5] sm:$0xf]
  %v1952 = vadd.f32 %v1947, %v1949
  %v1953 = vrot.slane %v1952, 4
  %v1954 = vadd.f32 %v1952, %v1953
  %v1955 = vrot.slane %v1954, 2
  %v1956 = vadd.f32 %v1954, %v1955
  %v1957 = vrot.slane %v1956, 1
  %v1958 = vadd.f32 %v1956, %v1957
  %v1959 = vadd.f32 %v1948, %v1950
  %v1960 = vrot.slane %v1959, 4
  %v1961 = vadd.f32 %v1959, %v1960
  %v1962 = vrot.slane %v1961, 2
  %v1963 = vadd.f32 %v1961, %v1962
  %v1964 = vrot.slane %v1963, 1
  %v1965 = vadd.f32 %v1963, %v1964
  %v1966 = vmul.f32 %v1947, %v1947
  %v1967 = vmul.f32 %v1948, %v1948
  %v1968 = vmul.f32 %v1949, %v1949
  %v1969 = vmul.f32 %v1950, %v1950
  %v1970 = vadd.f32 %v1966, %v1968
  %v1971 = vrot.slane %v1970, 4
  %v1972 = vadd.f32 %v1970, %v1971
  %v1973 = vrot.slane %v1972, 2
  %v1974 = vadd.f32 %v1972, %v1973
  %v1975 = vrot.slane %v1974, 1
  %v1976 = vadd.f32 %v1974, %v1975
  %v1977 = vadd.f32 %v1967, %v1969
  %v1978 = vrot.slane %v1977, 4
  %v1979 = vadd.f32 %v1977, %v1978
  %v1980 = vrot.slane %v1979, 2
  %v1981 = vadd.f32 %v1979, %v1980
  %v1982 = vrot.slane %v1981, 1
  %v1983 = vadd.f32 %v1981, %v1982
  %v1984 = vmul.f32 %v156, %v1958
  %v1985 = vmul.f32 %v157, %v1965
  %v1986 = vadd.f32 %v1984, %v1985
  %1987 = vadd.xlane.f32.xlu0 %v1986
  %v1988 = vpop.xlane.xlu0 %1987
  %v1989 = vmul.f32 %v156, %v1976
  %v1990 = vmul.f32 %v157, %v1983
  %v1991 = vadd.f32 %v1989, %v1990
  %1992 = vadd.xlane.f32.xlu0 %v1991
  %v1993 = vpop.xlane.xlu0 %1992
  %v1994 = vmul.f32 %v156, %v1988
  %v1995 = vmul.f32 %v157, %v1988
  %v1996 = vrot.slane %v1994, 4
  %v1997 = vadd.f32 %v1994, %v1996
  %v1998 = vrot.slane %v1997, 2
  %v1999 = vadd.f32 %v1997, %v1998
  %v2000 = vrot.slane %v1999, 1
  %v2001 = vadd.f32 %v1999, %v2000
  %v2002 = vrot.slane %v1995, 4
  %v2003 = vadd.f32 %v1995, %v2002
  %v2004 = vrot.slane %v2003, 2
  %v2005 = vadd.f32 %v2003, %v2004
  %v2006 = vrot.slane %v2005, 1
  %v2007 = vadd.f32 %v2005, %v2006
  %v2008 = vmul.f32 %v2001, 0.001953125
  %v2009 = vmul.f32 %v2007, 0.001953125
  %v2010 = vmul.f32 %v156, %v1993
  %v2011 = vmul.f32 %v157, %v1993
  %v2012 = vrot.slane %v2010, 4
  %v2013 = vadd.f32 %v2010, %v2012
  %v2014 = vrot.slane %v2013, 2
  %v2015 = vadd.f32 %v2013, %v2014
  %v2016 = vrot.slane %v2015, 1
  %v2017 = vadd.f32 %v2015, %v2016
  %v2018 = vrot.slane %v2011, 4
  %v2019 = vadd.f32 %v2011, %v2018
  %v2020 = vrot.slane %v2019, 2
  %v2021 = vadd.f32 %v2019, %v2020
  %v2022 = vrot.slane %v2021, 1
  %v2023 = vadd.f32 %v2021, %v2022
  %v2024 = vmul.f32 %v2017, 0.001953125
  %v2025 = vmul.f32 %v2023, 0.001953125
  %v2026 = vmul.f32 %v2008, %v2008
  %v2027 = vmul.f32 %v2009, %v2009
  %v2028 = vsub.f32 %v2024, %v2026
  %v2029 = vsub.f32 %v2025, %v2027
  %v2030 = vmax.f32 %v2028, 0.0
  %v2031 = vmax.f32 %v2029, 0.0
  %v2032 = vadd.f32 %v2030, 1e-05
  %v2033 = vadd.f32 %v2031, 1e-05
  %v2034 = vrsqrt.pop %v2032
  %v2035 = vrsqrt.pop %v2033
  %v2038 = vcombine.low %v2034, %v2035
  %v2040 = vunpack.c.l.s4 1983009808
  %v2041 = vunpack.c.0.s8 %v2040
  %v2042 = vlaneseq
  %v2043 = vshrl.u32 %v2042, 7
  %v2044 = vsub.s32 %v2041, %v2043
  %v2045 = vrot.slane %v2038, %v2044
  %v2047 = vmul.f32 %v1951, %v2045
  %v2049 = vlaneseq
  %v2050 = vshrl.u32 %v2049, 7
  %v2051 = vsub.s32 0, %v2050
  %v2052 = vrot.slane %v2047, %v2051
  %v2053 = vlaneseq
  %v2054 = vshrl.u32 %v2053, 7
  %v2055 = vsub.s32 2, %v2054
  %v2056 = vrot.slane %v2047, %v2055
  %v2059 = vlaneseq
  %v2060 = vshrl.u32 %v2059, 7
  %v2061 = vsub.s32 0, %v2060
  %v2062 = vrot.slane %v2052, %v2061
  %v2063 = vlaneseq
  %v2064 = vshrl.u32 %v2063, 7
  %v2065 = vsub.s32 0, %v2064
  %v2066 = vrot.slane %v2056, %v2065
  %v2067 = vmul.f32 %v1947, %v2062
  %v2068 = vmul.f32 %v1948, %v2066
  %v2069 = vmul.f32 %v1949, %v2062
  %v2070 = vmul.f32 %v1950, %v2066
  %v2071 = vmul.f32 %v2008, %v2052
  %v2072 = vmul.f32 %v2009, %v2056
  %v2075 = vcombine.low %v2071, %v2072
  %v2077 = vunpack.c.l.s4 1983009808
  %v2078 = vunpack.c.0.s8 %v2077
  %v2079 = vlaneseq
  %v2080 = vshrl.u32 %v2079, 7
  %v2081 = vsub.s32 %v2078, %v2080
  %v2082 = vrot.slane %v2075, %v2081
  %v2083 = vrot.slane %v2082, 7
  %v2085 = vsub.f32 %v1951, %v2083
  %v2087 = vlaneseq
  %v2088 = vshrl.u32 %v2087, 7
  %v2089 = vsub.s32 1, %v2088
  %v2090 = vrot.slane %v2085, %v2089
  %v2091 = vlaneseq
  %v2092 = vshrl.u32 %v2091, 7
  %v2093 = vsub.s32 3, %v2092
  %v2094 = vrot.slane %v2085, %v2093
  %v2097 = vlaneseq
  %v2098 = vshrl.u32 %v2097, 7
  %v2099 = vsub.s32 1, %v2098
  %v2100 = vrot.slane %v2090, %v2099
  %v2101 = vlaneseq
  %v2102 = vshrl.u32 %v2101, 7
  %v2103 = vsub.s32 1, %v2102
  %v2104 = vrot.slane %v2094, %v2103
  %v2105 = vadd.f32 %v2067, %v2100
  %v2106 = vadd.f32 %v2068, %v2104
  %v2107 = vadd.f32 %v2069, %v2100
  %v2108 = vadd.f32 %v2070, %v2104
  %v2109 = vmax.f32 %v2105, 0.0
  %v2110 = vmax.f32 %v2106, 0.0
  %v2111 = vmax.f32 %v2107, 0.0
  %v2112 = vmax.f32 %v2108, 0.0
  %2113 = vst [vmem:[%s9] sm:$0xff] %v2109
  %2114 = vst [vmem:[%s9 + $0x8] sm:$0xff] %v2110
  %2115 = vst [vmem:[%s9 + $0x10] sm:$0xff] %v2111
  %2116 = vst [vmem:[%s9 + $0x18] sm:$0xff] %v2112
  // Predicated region
  $region38: #{cmunext_block_forward.1} parent=0 // pred_check
    _
  $region39: #{cmunext_block_forward.1} parent=0 // pred_check_branch
    %2118 = sbr.rel (0) target = $region41
  $region40: #{cmunext_block_forward.1} parent=0 // pred_region
    _
  $region41: #{cmunext_block_forward.1} parent=0 // pred_fallthru
    _
  // Predicated region
  $region42: #{cmunext_block_forward.1} parent=0 // pred_check
    _
  $region43: #{cmunext_block_forward.1} parent=0 // pred_check_branch
    %2120 = sbr.rel (0) target = $region45
  $region44: #{cmunext_block_forward.1} parent=0 // pred_region
    _
  $region45: #{cmunext_block_forward.1} parent=0 // pred_fallthru
    _

</llo_original>
